<compile_context>
chip_gen: v5e
topology: v5e:2x2
jax: 0.10.0
libtpu: 0.0.40
codegen_flags: <defaults>
</compile_context>

<pallas_src>
import jax
import jax.numpy as jnp
from jax.experimental import pallas as pl
from jax.experimental.pallas import tpu as pltpu


def _leaky_relu(x, slope=0.2):
    return jnp.where(x > 0, x, slope * x)


def discriminator_kernel(x_ref,
                         w1_ref, b1_ref,
                         w2_ref, b2_ref,
                         w3_ref, b3_ref,
                         w4_ref, b4_ref,
                         o_ref):
    # Stream f32 x and cast to bf16 in-kernel (under MXU shadow) — avoids a
    # separate XLA convert pass over x's HBM bytes.
    x = x_ref[...].astype(jnp.bfloat16)

    # layer1: Linear(in_dim, 1024) + LeakyReLU(0.2)  [Dropout(0.3) == identity at eval]
    h = jnp.dot(x, w1_ref[...], preferred_element_type=jnp.float32) + b1_ref[...]
    h = _leaky_relu(h)
    # layer2: Linear(1024, 512) + LeakyReLU(0.2)
    h = jnp.dot(h.astype(jnp.bfloat16), w2_ref[...],
                preferred_element_type=jnp.float32) + b2_ref[...]
    h = _leaky_relu(h)
    # layer3: Linear(512, 256) + LeakyReLU(0.2)
    h = jnp.dot(h.astype(jnp.bfloat16), w3_ref[...],
                preferred_element_type=jnp.float32) + b3_ref[...]
    h = _leaky_relu(h)
    # layer4: Linear(256, 1) + Sigmoid.
    # N=1 matmul would use 1/256 of the MXU output lanes, so do it on the VPU:
    # elementwise multiply by the (1, 256) weight row and reduce over features.
    w4 = w4_ref[...].astype(jnp.float32)                       # (1, 256)
    logit = jnp.sum(h * w4, axis=-1, keepdims=True) + b4_ref[...]
    # sigmoid(x) = 1 / (1 + exp(-x)); approx reciprocal runs on the EUP slot.
    o_ref[...] = pl.reciprocal(1.0 + jnp.exp(-logit), approx=True).astype(o_ref.dtype)
    # TODO(synk): Dropout(0.3) is treated as inference-mode identity (training-mode
    # forward would need pltpu.prng_seed / prng_random_bits masking).


def _round_up(x, m):
    return -(-x // m) * m


def _choose_tm(B, tm_cap=512):
    """Batch-tile size.

    * Batches up to 256 run as a single tile (block == full batch dim, so the
      (8,128) divisibility rule is satisfied trivially).
    * Larger batches use 256-aligned tiles capped at `tm_cap` (512 default:
      safe for v7x's 64 MiB/TC VMEM, fine on v5e/v6e), split into >=2 tiles so
      dimension_semantics=("parallel",) can shard the batch across the two
      TensorCores on v7x.
    """
    if B <= 256:
        return B
    return min(tm_cap, _round_up(pl.cdiv(B, 2), 256))


def prepare_params(params):
    """One-time layout/dtype prep of the f32 master params for the kernel.

    Call this once (outside the per-step forward): bf16 weight copies, f32
    biases, w4 pre-transposed to a (1, 256) row for the VPU reduce.  Doing it
    here means each forward call issues zero convert ops over HBM.
    """
    return dict(
        w1=params["w1"].astype(jnp.bfloat16),
        w2=params["w2"].astype(jnp.bfloat16),
        w3=params["w3"].astype(jnp.bfloat16),
        w4=params["w4"].astype(jnp.bfloat16).T,          # (1, 256)
        b1=params["b1"].astype(jnp.float32),
        b2=params["b2"].astype(jnp.float32),
        b3=params["b3"].astype(jnp.float32),
        b4=params["b4"].astype(jnp.float32),
    )


def discriminator_forward(x, prep, *, tm=None, tm_cap=512):
    """x: [B, in_dim] f32.  prep: output of prepare_params() (bf16 weights, f32 biases)."""
    B, in_dim = x.shape
    x = x.astype(jnp.float32)                            # no-op if already f32

    if tm is None:
        tm = _choose_tm(B, tm_cap)
    tm = min(tm, B)
    grid = (pl.cdiv(B, tm),)

    def x_map(i):
        return (i, 0)

    def const_map(i):
        return (0, 0)

    in_specs = [
        pl.BlockSpec((tm, in_dim), x_map),
        pl.BlockSpec(prep["w1"].shape, const_map),
        pl.BlockSpec(prep["b1"].shape, const_map),
        pl.BlockSpec(prep["w2"].shape, const_map),
        pl.BlockSpec(prep["b2"].shape, const_map),
        pl.BlockSpec(prep["w3"].shape, const_map),
        pl.BlockSpec(prep["b3"].shape, const_map),
        pl.BlockSpec(prep["w4"].shape, const_map),
        pl.BlockSpec(prep["b4"].shape, const_map),
    ]
    out_spec = pl.BlockSpec((tm, 1), x_map)

    return pl.pallas_call(
        discriminator_kernel,
        out_shape=jax.ShapeDtypeStruct((B, 1), jnp.float32),
        grid=grid,
        in_specs=in_specs,
        out_specs=out_spec,
        compiler_params=pltpu.CompilerParams(
            dimension_semantics=("parallel",),
            vmem_limit_bytes=32 << 20,
        ),
    )(x, prep["w1"], prep["b1"], prep["w2"], prep["b2"],
      prep["w3"], prep["b3"], prep["w4"], prep["b4"])


def init_params(key, in_dim):
    """Deterministic init matching PyTorch Linear's U(-1/sqrt(fan_in), 1/sqrt(fan_in))."""
    dims = [(in_dim, 1024), (1024, 512), (512, 256), (256, 1)]
    params = {}
    for i, (fan_in, fan_out) in enumerate(dims, start=1):
        key, kw, kb = jax.random.split(key, 3)
        bound = 1.0 / (fan_in ** 0.5)
        params[f"w{i}"] = jax.random.uniform(
            kw, (fan_in, fan_out), jnp.float32, minval=-bound, maxval=bound)
        params[f"b{i}"] = jax.random.uniform(
            kb, (1, fan_out), jnp.float32, minval=-bound, maxval=bound)
    return params


def reference_forward(x, params):
    """Plain-JAX forward with the same bf16-weight / f32-accumulate recipe."""
    h = x.astype(jnp.bfloat16)
    for i in (1, 2, 3):
        w = params[f"w{i}"].astype(jnp.bfloat16)
        b = params[f"b{i}"].astype(jnp.float32)
        h = jnp.dot(h, w, preferred_element_type=jnp.float32) + b
        h = jnp.where(h > 0, h, 0.2 * h)
        if i < 3:
            h = h.astype(jnp.bfloat16)
    w4 = params["w4"].astype(jnp.bfloat16).astype(jnp.float32)      # (256, 1)
    logit = jnp.sum(h * w4[:, 0][None, :], axis=-1, keepdims=True) + params["b4"]
    return jax.nn.sigmoid(logit)


if __name__ == "__main__":
    key = jax.random.PRNGKey(0)
    in_dim = 784          # MNIST flattened image
    key, kx, kp = jax.random.split(key, 3)
    params = init_params(kp, in_dim)
    prep = prepare_params(params)   # one-time bf16 master copies (no per-call casts)

    # Check 1: small batch, single tile.
    x = jax.random.normal(kx, (8, in_dim), jnp.float32)
    out = jax.block_until_ready(discriminator_forward(x, prep))
    ref = reference_forward(x, params)
    assert out.shape == (8, 1), out.shape
    assert bool(jnp.all(jnp.isfinite(out))), "non-finite output"
    assert bool(jnp.all((out >= 0.0) & (out <= 1.0))), "sigmoid range violated"
    assert jnp.allclose(out, ref, atol=2e-3, rtol=2e-3), "mismatch vs reference (single tile)"

    # Check 2: multi-tile grid with a ragged tail (B % tm != 0) — exercises the
    # batch pipeline + VMEM-resident weights while staying at small shapes.
    key, kx2 = jax.random.split(key)
    x2 = jax.random.normal(kx2, (20, in_dim), jnp.float32)
    out2 = jax.block_until_ready(discriminator_forward(x2, prep, tm=8))
    ref2 = reference_forward(x2, params)
    assert out2.shape == (20, 1), out2.shape
    assert bool(jnp.all(jnp.isfinite(out2))), "non-finite output (tiled)"
    assert jnp.allclose(out2, ref2, atol=2e-3, rtol=2e-3), "mismatch vs reference (tiled)"

    print("KERNEL_OK")
</pallas_src>

<mosaic_0001>
module attributes {stable_mosaic.version = 11 : i64} {
  func.func @discriminator_kernel(%arg0: i32, %arg1: memref<8x784xf32, #tpu.memory_space<vmem>>, %arg2: memref<784x1024xbf16, #tpu.memory_space<vmem>>, %arg3: memref<1x1024xf32, #tpu.memory_space<vmem>>, %arg4: memref<1024x512xbf16, #tpu.memory_space<vmem>>, %arg5: memref<1x512xf32, #tpu.memory_space<vmem>>, %arg6: memref<512x256xbf16, #tpu.memory_space<vmem>>, %arg7: memref<1x256xf32, #tpu.memory_space<vmem>>, %arg8: memref<1x256xbf16, #tpu.memory_space<vmem>>, %arg9: memref<1x1xf32, #tpu.memory_space<vmem>>, %arg10: memref<8x1xf32, #tpu.memory_space<vmem>>) attributes {dimension_semantics = [#tpu.dimension_semantics<parallel>], iteration_bounds = array<i64: 1>, scalar_prefetch = 0 : i64, scratch_operands = 0 : i64, tpu.core_type = #tpu.core_type<tc>, window_params = [{transform_indices = @transform_0, window_bounds = array<i64: 8, 784>}, {pipeline_mode = #tpu.pipeline_mode<synchronous>, transform_indices = @transform_1, window_bounds = array<i64: 784, 1024>}, {pipeline_mode = #tpu.pipeline_mode<synchronous>, transform_indices = @transform_2, window_bounds = array<i64: 1, 1024>}, {pipeline_mode = #tpu.pipeline_mode<synchronous>, transform_indices = @transform_3, window_bounds = array<i64: 1024, 512>}, {pipeline_mode = #tpu.pipeline_mode<synchronous>, transform_indices = @transform_4, window_bounds = array<i64: 1, 512>}, {pipeline_mode = #tpu.pipeline_mode<synchronous>, transform_indices = @transform_5, window_bounds = array<i64: 512, 256>}, {pipeline_mode = #tpu.pipeline_mode<synchronous>, transform_indices = @transform_6, window_bounds = array<i64: 1, 256>}, {pipeline_mode = #tpu.pipeline_mode<synchronous>, transform_indices = @transform_7, window_bounds = array<i64: 1, 256>}, {pipeline_mode = #tpu.pipeline_mode<synchronous>, transform_indices = @transform_8, window_bounds = array<i64: 1, 1>}, {transform_indices = @transform_9, window_bounds = array<i64: 8, 1>}]} {
    %c0 = arith.constant 0 : index
    %c0_0 = arith.constant 0 : index
    %0 = vector.load %arg1[%c0, %c0_0] : memref<8x784xf32, #tpu.memory_space<vmem>>, vector<8x784xf32>
    %1 = arith.truncf %0 : vector<8x784xf32> to vector<8x784xbf16>
    %c0_1 = arith.constant 0 : index
    %c0_2 = arith.constant 0 : index
    %2 = vector.load %arg2[%c0_1, %c0_2] : memref<784x1024xbf16, #tpu.memory_space<vmem>>, vector<784x1024xbf16>
    %cst = arith.constant dense<0.000000e+00> : vector<8x1024xf32>
    %3 = tpu.matmul %1, %2, %cst {dimension_numbers = #tpu.dot_dimension_numbers<[1], [0], [0], [1], [0, 0, 1, 1], [], []>} : vector<8x784xbf16>, vector<784x1024xbf16>, vector<8x1024xf32> -> vector<8x1024xf32>
    %c0_3 = arith.constant 0 : index
    %c0_4 = arith.constant 0 : index
    %4 = vector.load %arg3[%c0_3, %c0_4] : memref<1x1024xf32, #tpu.memory_space<vmem>>, vector<1x1024xf32>
    %5 = vector.broadcast %4 : vector<1x1024xf32> to vector<8x1024xf32>
    %6 = arith.addf %3, %5 : vector<8x1024xf32>
    %cst_5 = arith.constant 0.000000e+00 : f32
    %7 = vector.broadcast %cst_5 : f32 to vector<8x1024xf32>
    %8 = arith.cmpf ogt, %6, %7 : vector<8x1024xf32>
    %cst_6 = arith.constant 2.000000e-01 : f32
    %9 = vector.broadcast %cst_6 : f32 to vector<8x1024xf32>
    %10 = arith.mulf %9, %6 : vector<8x1024xf32>
    %11 = arith.select %8, %6, %10 : vector<8x1024xi1>, vector<8x1024xf32>
    %12 = arith.truncf %11 : vector<8x1024xf32> to vector<8x1024xbf16>
    %c0_7 = arith.constant 0 : index
    %c0_8 = arith.constant 0 : index
    %13 = vector.load %arg4[%c0_7, %c0_8] : memref<1024x512xbf16, #tpu.memory_space<vmem>>, vector<1024x512xbf16>
    %cst_9 = arith.constant dense<0.000000e+00> : vector<8x512xf32>
    %14 = tpu.matmul %12, %13, %cst_9 {dimension_numbers = #tpu.dot_dimension_numbers<[1], [0], [0], [1], [0, 0, 1, 1], [], []>} : vector<8x1024xbf16>, vector<1024x512xbf16>, vector<8x512xf32> -> vector<8x512xf32>
    %c0_10 = arith.constant 0 : index
    %c0_11 = arith.constant 0 : index
    %15 = vector.load %arg5[%c0_10, %c0_11] : memref<1x512xf32, #tpu.memory_space<vmem>>, vector<1x512xf32>
    %16 = vector.broadcast %15 : vector<1x512xf32> to vector<8x512xf32>
    %17 = arith.addf %14, %16 : vector<8x512xf32>
    %cst_12 = arith.constant 0.000000e+00 : f32
    %18 = vector.broadcast %cst_12 : f32 to vector<8x512xf32>
    %19 = arith.cmpf ogt, %17, %18 : vector<8x512xf32>
    %cst_13 = arith.constant 2.000000e-01 : f32
    %20 = vector.broadcast %cst_13 : f32 to vector<8x512xf32>
    %21 = arith.mulf %20, %17 : vector<8x512xf32>
    %22 = arith.select %19, %17, %21 : vector<8x512xi1>, vector<8x512xf32>
    %23 = arith.truncf %22 : vector<8x512xf32> to vector<8x512xbf16>
    %c0_14 = arith.constant 0 : index
    %c0_15 = arith.constant 0 : index
    %24 = vector.load %arg6[%c0_14, %c0_15] : memref<512x256xbf16, #tpu.memory_space<vmem>>, vector<512x256xbf16>
    %cst_16 = arith.constant dense<0.000000e+00> : vector<8x256xf32>
    %25 = tpu.matmul %23, %24, %cst_16 {dimension_numbers = #tpu.dot_dimension_numbers<[1], [0], [0], [1], [0, 0, 1, 1], [], []>} : vector<8x512xbf16>, vector<512x256xbf16>, vector<8x256xf32> -> vector<8x256xf32>
    %c0_17 = arith.constant 0 : index
    %c0_18 = arith.constant 0 : index
    %26 = vector.load %arg7[%c0_17, %c0_18] : memref<1x256xf32, #tpu.memory_space<vmem>>, vector<1x256xf32>
    %27 = vector.broadcast %26 : vector<1x256xf32> to vector<8x256xf32>
    %28 = arith.addf %25, %27 : vector<8x256xf32>
    %cst_19 = arith.constant 0.000000e+00 : f32
    %29 = vector.broadcast %cst_19 : f32 to vector<8x256xf32>
    %30 = arith.cmpf ogt, %28, %29 : vector<8x256xf32>
    %cst_20 = arith.constant 2.000000e-01 : f32
    %31 = vector.broadcast %cst_20 : f32 to vector<8x256xf32>
    %32 = arith.mulf %31, %28 : vector<8x256xf32>
    %33 = arith.select %30, %28, %32 : vector<8x256xi1>, vector<8x256xf32>
    %c0_21 = arith.constant 0 : index
    %c0_22 = arith.constant 0 : index
    %34 = vector.load %arg8[%c0_21, %c0_22] : memref<1x256xbf16, #tpu.memory_space<vmem>>, vector<1x256xbf16>
    %35 = arith.extf %34 : vector<1x256xbf16> to vector<1x256xf32>
    %36 = vector.broadcast %35 : vector<1x256xf32> to vector<8x256xf32>
    %37 = arith.mulf %33, %36 : vector<8x256xf32>
    %cst_23 = arith.constant dense<0.000000e+00> : vector<8xf32>
    %38 = vector.multi_reduction <add>, %37, %cst_23 [1] : vector<8x256xf32> to vector<8xf32>
    %39 = vector.shape_cast %38 : vector<8xf32> to vector<8x1xf32>
    %c0_24 = arith.constant 0 : index
    %c0_25 = arith.constant 0 : index
    %40 = vector.load %arg9[%c0_24, %c0_25] : memref<1x1xf32, #tpu.memory_space<vmem>>, vector<1x1xf32>
    %41 = vector.broadcast %40 : vector<1x1xf32> to vector<8x1xf32>
    %42 = arith.addf %39, %41 : vector<8x1xf32>
    %cst_26 = arith.constant 0.000000e+00 : f32
    %43 = vector.broadcast %cst_26 : f32 to vector<8x1xf32>
    %44 = arith.subf %43, %42 : vector<8x1xf32>
    %45 = math.exp %44 : vector<8x1xf32>
    %cst_27 = arith.constant 1.000000e+00 : f32
    %46 = vector.broadcast %cst_27 : f32 to vector<8x1xf32>
    %47 = arith.addf %46, %45 : vector<8x1xf32>
    %48 = tpu.reciprocal %47 {approx = true} : vector<8x1xf32> -> vector<8x1xf32>
    %c0_28 = arith.constant 0 : index
    %c0_29 = arith.constant 0 : index
    %49 = vector.load %arg10[%c0_28, %c0_29] : memref<8x1xf32, #tpu.memory_space<vmem>>, vector<8x1xf32>
    tpu.vector_store %arg10[%c0_28, %c0_29], %48 {strides = array<i32>} : memref<8x1xf32, #tpu.memory_space<vmem>>, vector<8x1xf32>,
    return
  }
  func.func @transform_0(%arg0: i32) -> (i32, i32) {
    %c0_i32 = arith.constant 0 : i32
    %c0_i32_0 = arith.constant 0 : i32
    return %arg0, %c0_i32 : i32, i32
  }
  func.func @transform_1(%arg0: i32) -> (i32, i32) {
    %c0_i32 = arith.constant 0 : i32
    %c0_i32_0 = arith.constant 0 : i32
    %c0_i32_1 = arith.constant 0 : i32
    return %c0_i32, %c0_i32_0 : i32, i32
  }
  func.func @transform_2(%arg0: i32) -> (i32, i32) {
    %c0_i32 = arith.constant 0 : i32
    %c0_i32_0 = arith.constant 0 : i32
    %c0_i32_1 = arith.constant 0 : i32
    return %c0_i32, %c0_i32_0 : i32, i32
  }
  func.func @transform_3(%arg0: i32) -> (i32, i32) {
    %c0_i32 = arith.constant 0 : i32
    %c0_i32_0 = arith.constant 0 : i32
    %c0_i32_1 = arith.constant 0 : i32
    return %c0_i32, %c0_i32_0 : i32, i32
  }
  func.func @transform_4(%arg0: i32) -> (i32, i32) {
    %c0_i32 = arith.constant 0 : i32
    %c0_i32_0 = arith.constant 0 : i32
    %c0_i32_1 = arith.constant 0 : i32
    return %c0_i32, %c0_i32_0 : i32, i32
  }
  func.func @transform_5(%arg0: i32) -> (i32, i32) {
    %c0_i32 = arith.constant 0 : i32
    %c0_i32_0 = arith.constant 0 : i32
    %c0_i32_1 = arith.constant 0 : i32
    return %c0_i32, %c0_i32_0 : i32, i32
  }
  func.func @transform_6(%arg0: i32) -> (i32, i32) {
    %c0_i32 = arith.constant 0 : i32
    %c0_i32_0 = arith.constant 0 : i32
    %c0_i32_1 = arith.constant 0 : i32
    return %c0_i32, %c0_i32_0 : i32, i32
  }
  func.func @transform_7(%arg0: i32) -> (i32, i32) {
    %c0_i32 = arith.constant 0 : i32
    %c0_i32_0 = arith.constant 0 : i32
    %c0_i32_1 = arith.constant 0 : i32
    return %c0_i32, %c0_i32_0 : i32, i32
  }
  func.func @transform_8(%arg0: i32) -> (i32, i32) {
    %c0_i32 = arith.constant 0 : i32
    %c0_i32_0 = arith.constant 0 : i32
    %c0_i32_1 = arith.constant 0 : i32
    return %c0_i32, %c0_i32_0 : i32, i32
  }
  func.func @transform_9(%arg0: i32) -> (i32, i32) {
    %c0_i32 = arith.constant 0 : i32
    %c0_i32_0 = arith.constant 0 : i32
    return %arg0, %c0_i32 : i32, i32
  }
}

</mosaic_0001>

<llo_original>
// kernel: tpu_custom_call.1
$region0: #{tpu_custom_call.1}
  #allocation0 [shape = 'u32[]', space=smem, size = 0x4, offset = 0x4, fixed_abs, tag = 'smem constant byte address 0x4 - core index']
  #allocation1 [shape = 'u32[72,128]{1,0:T(1,128)}', space=vmem, size = 0x9000, scoped, tag = 'internal scratch']
  #allocation2 [shape = 'f32[1,1]{1,0:T(1,128)S(1)}', space=vmem, size = 0x200, scoped, tag = 'scoped memory for tpu_custom_call.1']
  %s0 = inlined_call_operand.hbm [shape: f32[8,784], index: 0, kind: input, shape index: {}]
  %s1 = inlined_call_operand.hbm [shape: bf16[784,1024], index: 1, kind: input, shape index: {}]
  %s2 = inlined_call_operand.hbm [shape: f32[1,1024], index: 2, kind: input, shape index: {}]
  %s3 = inlined_call_operand.hbm [shape: bf16[1024,512], index: 3, kind: input, shape index: {}]
  %s4 = inlined_call_operand.hbm [shape: f32[1,512], index: 4, kind: input, shape index: {}]
  %s5 = inlined_call_operand.hbm [shape: bf16[512,256], index: 5, kind: input, shape index: {}]
  %s6 = inlined_call_operand.hbm [shape: f32[1,256], index: 6, kind: input, shape index: {}]
  %s7 = inlined_call_operand.hbm [shape: bf16[1,256], index: 7, kind: input, shape index: {}]
  %s8 = inlined_call_operand.<no memory space> [shape: f32[1,1], index: 8, kind: input, shape index: {}]
  %s9 = inlined_call_operand.vmem [shape: f32[8,1], index: 9, kind: output, shape index: {}]
  %s10 = sld [smem:[#allocation0]]
  $region78: #{tpu_custom_call.1} parent=0
    _
  %s12 = ssub.s32 1, %s10
  %s13 = scalar_select 0, %s12, %s10
  %v14 = vstv %s8
  %15 = vst [vmem:[#allocation2] sm:$0x1] %v14
  $region1: #{tpu_custom_call.1} parent=0
    #allocation3 [shape = 'u8[28672]{0}', space=vmem, size = 0x7000, scoped, tag = 'input window, operand 0, single buffered']
    #allocation4 [shape = 's32[1]{0}', space=sflag, size = 0x4, scoped, tag = 'scoped memory for tpu_custom_call.1']
    #allocation5 [shape = 'u8[1605632]{0}', space=vmem, size = 0x188000, scoped, tag = 'input window, operand 1, single buffered']
    #allocation6 [shape = 's32[1]{0}', space=sflag, size = 0x4, scoped, tag = 'scoped memory for tpu_custom_call.1']
    #allocation7 [shape = 'u8[4096]{0}', space=vmem, size = 0x1000, scoped, tag = 'input window, operand 2, single buffered']
    #allocation8 [shape = 'u8[1048576]{0}', space=vmem, size = 0x100000, scoped, tag = 'input window, operand 3, single buffered']
    #allocation9 [shape = 's32[1]{0}', space=sflag, size = 0x4, scoped, tag = 'scoped memory for tpu_custom_call.1']
    #allocation10 [shape = 'u8[2048]{0}', space=vmem, size = 0x800, scoped, tag = 'input window, operand 4, single buffered']
    #allocation11 [shape = 'u8[262144]{0}', space=vmem, size = 0x40000, scoped, tag = 'input window, operand 5, single buffered']
    #allocation12 [shape = 's32[1]{0}', space=sflag, size = 0x4, scoped, tag = 'scoped memory for tpu_custom_call.1']
    #allocation13 [shape = 'u8[1024]{0}', space=vmem, size = 0x400, scoped, tag = 'input window, operand 6, single buffered']
    #allocation14 [shape = 'u8[1024]{0}', space=vmem, size = 0x400, scoped, tag = 'input window, operand 7, single buffered']
    #allocation15 [shape = 's32[1]{0}', space=sflag, size = 0x4, scoped, tag = 'scoped memory for tpu_custom_call.1']
    %16 = vsyncpa [#allocation4], 0
    %17 = vsyncpa [#allocation6], 0
    %18 = vsyncpa [#allocation9], 0
    %19 = vsyncpa [#allocation12], 0
    %20 = vsyncpa [#allocation15], 0
    // Predicated region
    $region2: #{tpu_custom_call.1} parent=1 // pred_check
      _
    $region3: #{tpu_custom_call.1} parent=1 // pred_check_branch
      %22 = sbr.rel (0) target = $region5
    $region4: #{tpu_custom_call.1} parent=1 // pred_region
      %24 = vsyncadd [#allocation4], 0
      %s26 = sshll.u32 %s0, 4
      %s27 = int_to_ptr.hbm [resolvable:$true] %s26
      %s28 = sshll.u32 [#allocation3], 4
      %s29 = int_to_ptr.vmem [resolvable:$true] %s28
      %31 = dma.hbm_to_vmem [thread:$0]  %s27, 896, %s29, [#allocation4]
    $region5: #{tpu_custom_call.1} parent=1 // pred_fallthru
      _
    // Predicated region
    $region6: #{tpu_custom_call.1} parent=1 // pred_check
      _
    $region7: #{tpu_custom_call.1} parent=1 // pred_check_branch
      %33 = sbr.rel (0) target = $region9
    $region8: #{tpu_custom_call.1} parent=1 // pred_region
      %35 = vsyncadd [#allocation6], 0
      %s36 = sshll.u32 %s1, 4
      %s37 = int_to_ptr.hbm [resolvable:$true] %s36
      %s38 = sshll.u32 [#allocation5], 4
      %s39 = int_to_ptr.vmem [resolvable:$true] %s38
      %44 = dma.hbm_to_vmem [thread:$0]  %s37, 50176, %s39, [#allocation6], 512, 512, 32
    $region9: #{tpu_custom_call.1} parent=1 // pred_fallthru
      _
    // Predicated region
    $region10: #{tpu_custom_call.1} parent=1 // pred_check
      _
    $region11: #{tpu_custom_call.1} parent=1 // pred_check_branch
      %46 = sbr.rel (0) target = $region13
    $region12: #{tpu_custom_call.1} parent=1 // pred_region
      %48 = vsyncadd [#allocation6], 0
      %s50 = sshll.u32 %s2, 4
      %s51 = int_to_ptr.hbm [resolvable:$true] %s50
      %s52 = sshll.u32 [#allocation7], 4
      %s53 = int_to_ptr.vmem [resolvable:$true] %s52
      %55 = dma.hbm_to_vmem [thread:$0]  %s51, 128, %s53, [#allocation6]
    $region13: #{tpu_custom_call.1} parent=1 // pred_fallthru
      _
    // Predicated region
    $region14: #{tpu_custom_call.1} parent=1 // pred_check
      _
    $region15: #{tpu_custom_call.1} parent=1 // pred_check_branch
      %57 = sbr.rel (0) target = $region17
    $region16: #{tpu_custom_call.1} parent=1 // pred_region
      %59 = vsyncadd [#allocation9], 0
      %s60 = sshll.u32 %s3, 4
      %s61 = int_to_ptr.hbm [resolvable:$true] %s60
      %s62 = sshll.u32 [#allocation8], 4
      %s63 = int_to_ptr.vmem [resolvable:$true] %s62
      %68 = dma.hbm_to_vmem [thread:$0]  %s61, 32768, %s63, [#allocation9], 256, 256, 16
    $region17: #{tpu_custom_call.1} parent=1 // pred_fallthru
      _
    // Predicated region
    $region18: #{tpu_custom_call.1} parent=1 // pred_check
      _
    $region19: #{tpu_custom_call.1} parent=1 // pred_check_branch
      %70 = sbr.rel (0) target = $region21
    $region20: #{tpu_custom_call.1} parent=1 // pred_region
      %72 = vsyncadd [#allocation9], 0
      %s74 = sshll.u32 %s4, 4
      %s75 = int_to_ptr.hbm [resolvable:$true] %s74
      %s76 = sshll.u32 [#allocation10], 4
      %s77 = int_to_ptr.vmem [resolvable:$true] %s76
      %79 = dma.hbm_to_vmem [thread:$0]  %s75, 64, %s77, [#allocation9]
    $region21: #{tpu_custom_call.1} parent=1 // pred_fallthru
      _
    // Predicated region
    $region22: #{tpu_custom_call.1} parent=1 // pred_check
      _
    $region23: #{tpu_custom_call.1} parent=1 // pred_check_branch
      %81 = sbr.rel (0) target = $region25
    $region24: #{tpu_custom_call.1} parent=1 // pred_region
      %83 = vsyncadd [#allocation12], 0
      %s84 = sshll.u32 %s5, 4
      %s85 = int_to_ptr.hbm [resolvable:$true] %s84
      %s86 = sshll.u32 [#allocation11], 4
      %s87 = int_to_ptr.vmem [resolvable:$true] %s86
      %92 = dma.hbm_to_vmem [thread:$0]  %s85, 8192, %s87, [#allocation12], 128, 128, 8
    $region25: #{tpu_custom_call.1} parent=1 // pred_fallthru
      _
    // Predicated region
    $region26: #{tpu_custom_call.1} parent=1 // pred_check
      _
    $region27: #{tpu_custom_call.1} parent=1 // pred_check_branch
      %94 = sbr.rel (0) target = $region29
    $region28: #{tpu_custom_call.1} parent=1 // pred_region
      %96 = vsyncadd [#allocation12], 0
      %s98 = sshll.u32 %s6, 4
      %s99 = int_to_ptr.hbm [resolvable:$true] %s98
      %s100 = sshll.u32 [#allocation13], 4
      %s101 = int_to_ptr.vmem [resolvable:$true] %s100
      %103 = dma.hbm_to_vmem [thread:$0]  %s99, 32, %s101, [#allocation12]
    $region29: #{tpu_custom_call.1} parent=1 // pred_fallthru
      _
    // Predicated region
    $region30: #{tpu_custom_call.1} parent=1 // pred_check
      _
    $region31: #{tpu_custom_call.1} parent=1 // pred_check_branch
      %105 = sbr.rel (0) target = $region33
    $region32: #{tpu_custom_call.1} parent=1 // pred_region
      %107 = vsyncadd [#allocation15], 0
      %s109 = sshll.u32 %s7, 4
      %s110 = int_to_ptr.hbm [resolvable:$true] %s109
      %s111 = sshll.u32 [#allocation14], 4
      %s112 = int_to_ptr.vmem [resolvable:$true] %s111
      %114 = dma.hbm_to_vmem [thread:$0]  %s110, 32, %s112, [#allocation15]
    $region33: #{tpu_custom_call.1} parent=1 // pred_fallthru
      _
    // Predicated region
    $region34: #{tpu_custom_call.1} parent=1 // pred_check
      _
    $region35: #{tpu_custom_call.1} parent=1 // pred_check_branch
      %116 = sbr.rel (0) target = $region37
    $region36: #{tpu_custom_call.1} parent=1 // pred_region
      _
    $region37: #{tpu_custom_call.1} parent=1 // pred_fallthru
      _
    // Predicated region
    $region38: #{tpu_custom_call.1} parent=1 // pred_check
      _
    $region39: #{tpu_custom_call.1} parent=1 // pred_check_branch
      %118 = sbr.rel (0) target = $region41
    $region40: #{tpu_custom_call.1} parent=1 // pred_region
      %120 = dma.done [#allocation4], 896
    $region41: #{tpu_custom_call.1} parent=1 // pred_fallthru
      _
    // Predicated region
    $region42: #{tpu_custom_call.1} parent=1 // pred_check
      _
    $region43: #{tpu_custom_call.1} parent=1 // pred_check_branch
      %122 = sbr.rel (0) target = $region45
    $region44: #{tpu_custom_call.1} parent=1 // pred_region
      %124 = dma.done [#allocation6], 50176
    $region45: #{tpu_custom_call.1} parent=1 // pred_fallthru
      _
    // Predicated region
    $region46: #{tpu_custom_call.1} parent=1 // pred_check
      _
    $region47: #{tpu_custom_call.1} parent=1 // pred_check_branch
      %126 = sbr.rel (0) target = $region49
    $region48: #{tpu_custom_call.1} parent=1 // pred_region
      %128 = dma.done [#allocation6], 128
    $region49: #{tpu_custom_call.1} parent=1 // pred_fallthru
      _
    // Predicated region
    $region50: #{tpu_custom_call.1} parent=1 // pred_check
      _
    $region51: #{tpu_custom_call.1} parent=1 // pred_check_branch
      %130 = sbr.rel (0) target = $region53
    $region52: #{tpu_custom_call.1} parent=1 // pred_region
      %132 = dma.done [#allocation9], 32768
    $region53: #{tpu_custom_call.1} parent=1 // pred_fallthru
      _
    // Predicated region
    $region54: #{tpu_custom_call.1} parent=1 // pred_check
      _
    $region55: #{tpu_custom_call.1} parent=1 // pred_check_branch
      %134 = sbr.rel (0) target = $region57
    $region56: #{tpu_custom_call.1} parent=1 // pred_region
      %136 = dma.done [#allocation9], 64
    $region57: #{tpu_custom_call.1} parent=1 // pred_fallthru
      _
    // Predicated region
    $region58: #{tpu_custom_call.1} parent=1 // pred_check
      _
    $region59: #{tpu_custom_call.1} parent=1 // pred_check_branch
      %138 = sbr.rel (0) target = $region61
    $region60: #{tpu_custom_call.1} parent=1 // pred_region
      %140 = dma.done [#allocation12], 8192
    $region61: #{tpu_custom_call.1} parent=1 // pred_fallthru
      _
    // Predicated region
    $region62: #{tpu_custom_call.1} parent=1 // pred_check
      _
    $region63: #{tpu_custom_call.1} parent=1 // pred_check_branch
      %142 = sbr.rel (0) target = $region65
    $region64: #{tpu_custom_call.1} parent=1 // pred_region
      %144 = dma.done [#allocation12], 32
    $region65: #{tpu_custom_call.1} parent=1 // pred_fallthru
      _
    // Predicated region
    $region66: #{tpu_custom_call.1} parent=1 // pred_check
      _
    $region67: #{tpu_custom_call.1} parent=1 // pred_check_branch
      %146 = sbr.rel (0) target = $region69
    $region68: #{tpu_custom_call.1} parent=1 // pred_region
      %148 = dma.done [#allocation15], 32
    $region69: #{tpu_custom_call.1} parent=1 // pred_fallthru
      _
    %v150 = vld [vmem:[#allocation3] sm:$0xff]
    %v151 = vld [vmem:[#allocation3 + $0x8] sm:$0xff]
    %v152 = vld [vmem:[#allocation3 + $0x10] sm:$0xff]
    %v153 = vld [vmem:[#allocation3 + $0x18] sm:$0xff]
    %v154 = vld [vmem:[#allocation3 + $0x20] sm:$0xff]
    %v155 = vld [vmem:[#allocation3 + $0x28] sm:$0xff]
    %v156 = vld [vmem:[#allocation3 + $0x30] sm:$0xff]
    %v157 = vpack.c.bf16 %v150, %v150
    %v158 = vpack.c.bf16 %v151, %v151
    %v159 = vpack.c.bf16 %v152, %v152
    %v160 = vpack.c.bf16 %v153, %v153
    %v161 = vpack.c.bf16 %v154, %v154
    %v162 = vpack.c.bf16 %v155, %v155
    %v163 = vpack.c.bf16 %v156, %v156
    %v164 = vld [vmem:[#allocation5] sm:$0xff]
    %v165 = vld [vmem:[#allocation5 + $0x8] sm:$0xff]
    %v166 = vld [vmem:[#allocation5 + $0x10] sm:$0xff]
    %v167 = vld [vmem:[#allocation5 + $0x18] sm:$0xff]
    %v168 = vld [vmem:[#allocation5 + $0x20] sm:$0xff]
    %v169 = vld [vmem:[#allocation5 + $0x28] sm:$0xff]
    %v170 = vld [vmem:[#allocation5 + $0x30] sm:$0xff]
    %v171 = vld [vmem:[#allocation5 + $0x38] sm:$0xff]
    %v172 = vld [vmem:[#allocation5 + $0x40] sm:$0xff]
    %v173 = vld [vmem:[#allocation5 + $0x48] sm:$0xff]
    %v174 = vld [vmem:[#allocation5 + $0x50] sm:$0xff]
    %v175 = vld [vmem:[#allocation5 + $0x58] sm:$0xff]
    %v176 = vld [vmem:[#allocation5 + $0x60] sm:$0xff]
    %v177 = vld [vmem:[#allocation5 + $0x68] sm:$0xff]
    %v178 = vld [vmem:[#allocation5 + $0x70] sm:$0xff]
    %v179 = vld [vmem:[#allocation5 + $0x78] sm:$0xff]
    %v180 = vld [vmem:[#allocation5 + $0x80] sm:$0xff]
    %v181 = vld [vmem:[#allocation5 + $0x88] sm:$0xff]
    %v182 = vld [vmem:[#allocation5 + $0x90] sm:$0xff]
    %v183 = vld [vmem:[#allocation5 + $0x98] sm:$0xff]
    %v184 = vld [vmem:[#allocation5 + $0xa0] sm:$0xff]
    %v185 = vld [vmem:[#allocation5 + $0xa8] sm:$0xff]
    %v186 = vld [vmem:[#allocation5 + $0xb0] sm:$0xff]
    %v187 = vld [vmem:[#allocation5 + $0xb8] sm:$0xff]
    %v188 = vld [vmem:[#allocation5 + $0xc0] sm:$0xff]
    %v189 = vld [vmem:[#allocation5 + $0xc8] sm:$0xff]
    %v190 = vld [vmem:[#allocation5 + $0xd0] sm:$0xff]
    %v191 = vld [vmem:[#allocation5 + $0xd8] sm:$0xff]
    %v192 = vld [vmem:[#allocation5 + $0xe0] sm:$0xff]
    %v193 = vld [vmem:[#allocation5 + $0xe8] sm:$0xff]
    %v194 = vld [vmem:[#allocation5 + $0xf0] sm:$0xff]
    %v195 = vld [vmem:[#allocation5 + $0xf8] sm:$0xff]
    %v196 = vld [vmem:[#allocation5 + $0x100] sm:$0xff]
    %v197 = vld [vmem:[#allocation5 + $0x108] sm:$0xff]
    %v198 = vld [vmem:[#allocation5 + $0x110] sm:$0xff]
    %v199 = vld [vmem:[#allocation5 + $0x118] sm:$0xff]
    %v200 = vld [vmem:[#allocation5 + $0x120] sm:$0xff]
    %v201 = vld [vmem:[#allocation5 + $0x128] sm:$0xff]
    %v202 = vld [vmem:[#allocation5 + $0x130] sm:$0xff]
    %v203 = vld [vmem:[#allocation5 + $0x138] sm:$0xff]
    %v204 = vld [vmem:[#allocation5 + $0x140] sm:$0xff]
    %v205 = vld [vmem:[#allocation5 + $0x148] sm:$0xff]
    %v206 = vld [vmem:[#allocation5 + $0x150] sm:$0xff]
    %v207 = vld [vmem:[#allocation5 + $0x158] sm:$0xff]
    %v208 = vld [vmem:[#allocation5 + $0x160] sm:$0xff]
    %v209 = vld [vmem:[#allocation5 + $0x168] sm:$0xff]
    %v210 = vld [vmem:[#allocation5 + $0x170] sm:$0xff]
    %v211 = vld [vmem:[#allocation5 + $0x178] sm:$0xff]
    %v212 = vld [vmem:[#allocation5 + $0x180] sm:$0xff]
    %v213 = vld [vmem:[#allocation5 + $0x188] sm:$0xff]
    %v214 = vld [vmem:[#allocation5 + $0x190] sm:$0xff]
    %v215 = vld [vmem:[#allocation5 + $0x198] sm:$0xff]
    %v216 = vld [vmem:[#allocation5 + $0x1a0] sm:$0xff]
    %v217 = vld [vmem:[#allocation5 + $0x1a8] sm:$0xff]
    %v218 = vld [vmem:[#allocation5 + $0x1b0] sm:$0xff]
    %v219 = vld [vmem:[#allocation5 + $0x1b8] sm:$0xff]
    %v220 = vld [vmem:[#allocation5 + $0x1c0] sm:$0xff]
    %v221 = vld [vmem:[#allocation5 + $0x1c8] sm:$0xff]
    %v222 = vld [vmem:[#allocation5 + $0x1d0] sm:$0xff]
    %v223 = vld [vmem:[#allocation5 + $0x1d8] sm:$0xff]
    %v224 = vld [vmem:[#allocation5 + $0x1e0] sm:$0xff]
    %v225 = vld [vmem:[#allocation5 + $0x1e8] sm:$0xff]
    %v226 = vld [vmem:[#allocation5 + $0x1f0] sm:$0xff]
    %v227 = vld [vmem:[#allocation5 + $0x1f8] sm:$0xff]
    %v228 = vld [vmem:[#allocation5 + $0x200] sm:$0xff]
    %v229 = vld [vmem:[#allocation5 + $0x208] sm:$0xff]
    %v230 = vld [vmem:[#allocation5 + $0x210] sm:$0xff]
    %v231 = vld [vmem:[#allocation5 + $0x218] sm:$0xff]
    %v232 = vld [vmem:[#allocation5 + $0x220] sm:$0xff]
    %v233 = vld [vmem:[#allocation5 + $0x228] sm:$0xff]
    %v234 = vld [vmem:[#allocation5 + $0x230] sm:$0xff]
    %v235 = vld [vmem:[#allocation5 + $0x238] sm:$0xff]
    %v236 = vld [vmem:[#allocation5 + $0x240] sm:$0xff]
    %v237 = vld [vmem:[#allocation5 + $0x248] sm:$0xff]
    %v238 = vld [vmem:[#allocation5 + $0x250] sm:$0xff]
    %v239 = vld [vmem:[#allocation5 + $0x258] sm:$0xff]
    %v240 = vld [vmem:[#allocation5 + $0x260] sm:$0xff]
    %v241 = vld [vmem:[#allocation5 + $0x268] sm:$0xff]
    %v242 = vld [vmem:[#allocation5 + $0x270] sm:$0xff]
    %v243 = vld [vmem:[#allocation5 + $0x278] sm:$0xff]
    %v244 = vld [vmem:[#allocation5 + $0x280] sm:$0xff]
    %v245 = vld [vmem:[#allocation5 + $0x288] sm:$0xff]
    %v246 = vld [vmem:[#allocation5 + $0x290] sm:$0xff]
    %v247 = vld [vmem:[#allocation5 + $0x298] sm:$0xff]
    %v248 = vld [vmem:[#allocation5 + $0x2a0] sm:$0xff]
    %v249 = vld [vmem:[#allocation5 + $0x2a8] sm:$0xff]
    %v250 = vld [vmem:[#allocation5 + $0x2b0] sm:$0xff]
    %v251 = vld [vmem:[#allocation5 + $0x2b8] sm:$0xff]
    %v252 = vld [vmem:[#allocation5 + $0x2c0] sm:$0xff]
    %v253 = vld [vmem:[#allocation5 + $0x2c8] sm:$0xff]
    %v254 = vld [vmem:[#allocation5 + $0x2d0] sm:$0xff]
    %v255 = vld [vmem:[#allocation5 + $0x2d8] sm:$0xff]
    %v256 = vld [vmem:[#allocation5 + $0x2e0] sm:$0xff]
    %v257 = vld [vmem:[#allocation5 + $0x2e8] sm:$0xff]
    %v258 = vld [vmem:[#allocation5 + $0x2f0] sm:$0xff]
    %v259 = vld [vmem:[#allocation5 + $0x2f8] sm:$0xff]
    %v260 = vld [vmem:[#allocation5 + $0x300] sm:$0xff]
    %v261 = vld [vmem:[#allocation5 + $0x308] sm:$0xff]
    %v262 = vld [vmem:[#allocation5 + $0x310] sm:$0xff]
    %v263 = vld [vmem:[#allocation5 + $0x318] sm:$0xff]
    %v264 = vld [vmem:[#allocation5 + $0x320] sm:$0xff]
    %v265 = vld [vmem:[#allocation5 + $0x328] sm:$0xff]
    %v266 = vld [vmem:[#allocation5 + $0x330] sm:$0xff]
    %v267 = vld [vmem:[#allocation5 + $0x338] sm:$0xff]
    %v268 = vld [vmem:[#allocation5 + $0x340] sm:$0xff]
    %v269 = vld [vmem:[#allocation5 + $0x348] sm:$0xff]
    %v270 = vld [vmem:[#allocation5 + $0x350] sm:$0xff]
    %v271 = vld [vmem:[#allocation5 + $0x358] sm:$0xff]
    %v272 = vld [vmem:[#allocation5 + $0x360] sm:$0xff]
    %v273 = vld [vmem:[#allocation5 + $0x368] sm:$0xff]
    %v274 = vld [vmem:[#allocation5 + $0x370] sm:$0xff]
    %v275 = vld [vmem:[#allocation5 + $0x378] sm:$0xff]
    %v276 = vld [vmem:[#allocation5 + $0x380] sm:$0xff]
    %v277 = vld [vmem:[#allocation5 + $0x388] sm:$0xff]
    %v278 = vld [vmem:[#allocation5 + $0x390] sm:$0xff]
    %v279 = vld [vmem:[#allocation5 + $0x398] sm:$0xff]
    %v280 = vld [vmem:[#allocation5 + $0x3a0] sm:$0xff]
    %v281 = vld [vmem:[#allocation5 + $0x3a8] sm:$0xff]
    %v282 = vld [vmem:[#allocation5 + $0x3b0] sm:$0xff]
    %v283 = vld [vmem:[#allocation5 + $0x3b8] sm:$0xff]
    %v284 = vld [vmem:[#allocation5 + $0x3c0] sm:$0xff]
    %v285 = vld [vmem:[#allocation5 + $0x3c8] sm:$0xff]
    %v286 = vld [vmem:[#allocation5 + $0x3d0] sm:$0xff]
    %v287 = vld [vmem:[#allocation5 + $0x3d8] sm:$0xff]
    %v288 = vld [vmem:[#allocation5 + $0x3e0] sm:$0xff]
    %v289 = vld [vmem:[#allocation5 + $0x3e8] sm:$0xff]
    %v290 = vld [vmem:[#allocation5 + $0x3f0] sm:$0xff]
    %v291 = vld [vmem:[#allocation5 + $0x3f8] sm:$0xff]
    %v292 = vld [vmem:[#allocation5 + $0x400] sm:$0xff]
    %v293 = vld [vmem:[#allocation5 + $0x408] sm:$0xff]
    %v294 = vld [vmem:[#allocation5 + $0x410] sm:$0xff]
    %v295 = vld [vmem:[#allocation5 + $0x418] sm:$0xff]
    %v296 = vld [vmem:[#allocation5 + $0x420] sm:$0xff]
    %v297 = vld [vmem:[#allocation5 + $0x428] sm:$0xff]
    %v298 = vld [vmem:[#allocation5 + $0x430] sm:$0xff]
    %v299 = vld [vmem:[#allocation5 + $0x438] sm:$0xff]
    %v300 = vld [vmem:[#allocation5 + $0x440] sm:$0xff]
    %v301 = vld [vmem:[#allocation5 + $0x448] sm:$0xff]
    %v302 = vld [vmem:[#allocation5 + $0x450] sm:$0xff]
    %v303 = vld [vmem:[#allocation5 + $0x458] sm:$0xff]
    %v304 = vld [vmem:[#allocation5 + $0x460] sm:$0xff]
    %v305 = vld [vmem:[#allocation5 + $0x468] sm:$0xff]
    %v306 = vld [vmem:[#allocation5 + $0x470] sm:$0xff]
    %v307 = vld [vmem:[#allocation5 + $0x478] sm:$0xff]
    %v308 = vld [vmem:[#allocation5 + $0x480] sm:$0xff]
    %v309 = vld [vmem:[#allocation5 + $0x488] sm:$0xff]
    %v310 = vld [vmem:[#allocation5 + $0x490] sm:$0xff]
    %v311 = vld [vmem:[#allocation5 + $0x498] sm:$0xff]
    %v312 = vld [vmem:[#allocation5 + $0x4a0] sm:$0xff]
    %v313 = vld [vmem:[#allocation5 + $0x4a8] sm:$0xff]
    %v314 = vld [vmem:[#allocation5 + $0x4b0] sm:$0xff]
    %v315 = vld [vmem:[#allocation5 + $0x4b8] sm:$0xff]
    %v316 = vld [vmem:[#allocation5 + $0x4c0] sm:$0xff]
    %v317 = vld [vmem:[#allocation5 + $0x4c8] sm:$0xff]
    %v318 = vld [vmem:[#allocation5 + $0x4d0] sm:$0xff]
    %v319 = vld [vmem:[#allocation5 + $0x4d8] sm:$0xff]
    %v320 = vld [vmem:[#allocation5 + $0x4e0] sm:$0xff]
    %v321 = vld [vmem:[#allocation5 + $0x4e8] sm:$0xff]
    %v322 = vld [vmem:[#allocation5 + $0x4f0] sm:$0xff]
    %v323 = vld [vmem:[#allocation5 + $0x4f8] sm:$0xff]
    %v324 = vld [vmem:[#allocation5 + $0x500] sm:$0xff]
    %v325 = vld [vmem:[#allocation5 + $0x508] sm:$0xff]
    %v326 = vld [vmem:[#allocation5 + $0x510] sm:$0xff]
    %v327 = vld [vmem:[#allocation5 + $0x518] sm:$0xff]
    %v328 = vld [vmem:[#allocation5 + $0x520] sm:$0xff]
    %v329 = vld [vmem:[#allocation5 + $0x528] sm:$0xff]
    %v330 = vld [vmem:[#allocation5 + $0x530] sm:$0xff]
    %v331 = vld [vmem:[#allocation5 + $0x538] sm:$0xff]
    %v332 = vld [vmem:[#allocation5 + $0x540] sm:$0xff]
    %v333 = vld [vmem:[#allocation5 + $0x548] sm:$0xff]
    %v334 = vld [vmem:[#allocation5 + $0x550] sm:$0xff]
    %v335 = vld [vmem:[#allocation5 + $0x558] sm:$0xff]
    %v336 = vld [vmem:[#allocation5 + $0x560] sm:$0xff]
    %v337 = vld [vmem:[#allocation5 + $0x568] sm:$0xff]
    %v338 = vld [vmem:[#allocation5 + $0x570] sm:$0xff]
    %v339 = vld [vmem:[#allocation5 + $0x578] sm:$0xff]
    %v340 = vld [vmem:[#allocation5 + $0x580] sm:$0xff]
    %v341 = vld [vmem:[#allocation5 + $0x588] sm:$0xff]
    %v342 = vld [vmem:[#allocation5 + $0x590] sm:$0xff]
    %v343 = vld [vmem:[#allocation5 + $0x598] sm:$0xff]
    %v344 = vld [vmem:[#allocation5 + $0x5a0] sm:$0xff]
    %v345 = vld [vmem:[#allocation5 + $0x5a8] sm:$0xff]
    %v346 = vld [vmem:[#allocation5 + $0x5b0] sm:$0xff]
    %v347 = vld [vmem:[#allocation5 + $0x5b8] sm:$0xff]
    %v348 = vld [vmem:[#allocation5 + $0x5c0] sm:$0xff]
    %v349 = vld [vmem:[#allocation5 + $0x5c8] sm:$0xff]
    %v350 = vld [vmem:[#allocation5 + $0x5d0] sm:$0xff]
    %v351 = vld [vmem:[#allocation5 + $0x5d8] sm:$0xff]
    %v352 = vld [vmem:[#allocation5 + $0x5e0] sm:$0xff]
    %v353 = vld [vmem:[#allocation5 + $0x5e8] sm:$0xff]
    %v354 = vld [vmem:[#allocation5 + $0x5f0] sm:$0xff]
    %v355 = vld [vmem:[#allocation5 + $0x5f8] sm:$0xff]
    %v356 = vld [vmem:[#allocation5 + $0x600] sm:$0xff]
    %v357 = vld [vmem:[#allocation5 + $0x608] sm:$0xff]
    %v358 = vld [vmem:[#allocation5 + $0x610] sm:$0xff]
    %v359 = vld [vmem:[#allocation5 + $0x618] sm:$0xff]
    %v360 = vld [vmem:[#allocation5 + $0x620] sm:$0xff]
    %v361 = vld [vmem:[#allocation5 + $0x628] sm:$0xff]
    %v362 = vld [vmem:[#allocation5 + $0x630] sm:$0xff]
    %v363 = vld [vmem:[#allocation5 + $0x638] sm:$0xff]
    %v364 = vld [vmem:[#allocation5 + $0x640] sm:$0xff]
    %v365 = vld [vmem:[#allocation5 + $0x648] sm:$0xff]
    %v366 = vld [vmem:[#allocation5 + $0x650] sm:$0xff]
    %v367 = vld [vmem:[#allocation5 + $0x658] sm:$0xff]
    %v368 = vld [vmem:[#allocation5 + $0x660] sm:$0xff]
    %v369 = vld [vmem:[#allocation5 + $0x668] sm:$0xff]
    %v370 = vld [vmem:[#allocation5 + $0x670] sm:$0xff]
    %v371 = vld [vmem:[#allocation5 + $0x678] sm:$0xff]
    %v372 = vld [vmem:[#allocation5 + $0x680] sm:$0xff]
    %v373 = vld [vmem:[#allocation5 + $0x688] sm:$0xff]
    %v374 = vld [vmem:[#allocation5 + $0x690] sm:$0xff]
    %v375 = vld [vmem:[#allocation5 + $0x698] sm:$0xff]
    %v376 = vld [vmem:[#allocation5 + $0x6a0] sm:$0xff]
    %v377 = vld [vmem:[#allocation5 + $0x6a8] sm:$0xff]
    %v378 = vld [vmem:[#allocation5 + $0x6b0] sm:$0xff]
    %v379 = vld [vmem:[#allocation5 + $0x6b8] sm:$0xff]
    %v380 = vld [vmem:[#allocation5 + $0x6c0] sm:$0xff]
    %v381 = vld [vmem:[#allocation5 + $0x6c8] sm:$0xff]
    %v382 = vld [vmem:[#allocation5 + $0x6d0] sm:$0xff]
    %v383 = vld [vmem:[#allocation5 + $0x6d8] sm:$0xff]
    %v384 = vld [vmem:[#allocation5 + $0x6e0] sm:$0xff]
    %v385 = vld [vmem:[#allocation5 + $0x6e8] sm:$0xff]
    %v386 = vld [vmem:[#allocation5 + $0x6f0] sm:$0xff]
    %v387 = vld [vmem:[#allocation5 + $0x6f8] sm:$0xff]
    %v388 = vld [vmem:[#allocation5 + $0x700] sm:$0xff]
    %v389 = vld [vmem:[#allocation5 + $0x708] sm:$0xff]
    %v390 = vld [vmem:[#allocation5 + $0x710] sm:$0xff]
    %v391 = vld [vmem:[#allocation5 + $0x718] sm:$0xff]
    %v392 = vld [vmem:[#allocation5 + $0x720] sm:$0xff]
    %v393 = vld [vmem:[#allocation5 + $0x728] sm:$0xff]
    %v394 = vld [vmem:[#allocation5 + $0x730] sm:$0xff]
    %v395 = vld [vmem:[#allocation5 + $0x738] sm:$0xff]
    %v396 = vld [vmem:[#allocation5 + $0x740] sm:$0xff]
    %v397 = vld [vmem:[#allocation5 + $0x748] sm:$0xff]
    %v398 = vld [vmem:[#allocation5 + $0x750] sm:$0xff]
    %v399 = vld [vmem:[#allocation5 + $0x758] sm:$0xff]
    %v400 = vld [vmem:[#allocation5 + $0x760] sm:$0xff]
    %v401 = vld [vmem:[#allocation5 + $0x768] sm:$0xff]
    %v402 = vld [vmem:[#allocation5 + $0x770] sm:$0xff]
    %v403 = vld [vmem:[#allocation5 + $0x778] sm:$0xff]
    %v404 = vld [vmem:[#allocation5 + $0x780] sm:$0xff]
    %v405 = vld [vmem:[#allocation5 + $0x788] sm:$0xff]
    %v406 = vld [vmem:[#allocation5 + $0x790] sm:$0xff]
    %v407 = vld [vmem:[#allocation5 + $0x798] sm:$0xff]
    %v408 = vld [vmem:[#allocation5 + $0x7a0] sm:$0xff]
    %v409 = vld [vmem:[#allocation5 + $0x7a8] sm:$0xff]
    %v410 = vld [vmem:[#allocation5 + $0x7b0] sm:$0xff]
    %v411 = vld [vmem:[#allocation5 + $0x7b8] sm:$0xff]
    %v412 = vld [vmem:[#allocation5 + $0x7c0] sm:$0xff]
    %v413 = vld [vmem:[#allocation5 + $0x7c8] sm:$0xff]
    %v414 = vld [vmem:[#allocation5 + $0x7d0] sm:$0xff]
    %v415 = vld [vmem:[#allocation5 + $0x7d8] sm:$0xff]
    %v416 = vld [vmem:[#allocation5 + $0x7e0] sm:$0xff]
    %v417 = vld [vmem:[#allocation5 + $0x7e8] sm:$0xff]
    %v418 = vld [vmem:[#allocation5 + $0x7f0] sm:$0xff]
    %v419 = vld [vmem:[#allocation5 + $0x7f8] sm:$0xff]
    %v420 = vld [vmem:[#allocation5 + $0x800] sm:$0xff]
    %v421 = vld [vmem:[#allocation5 + $0x808] sm:$0xff]
    %v422 = vld [vmem:[#allocation5 + $0x810] sm:$0xff]
    %v423 = vld [vmem:[#allocation5 + $0x818] sm:$0xff]
    %v424 = vld [vmem:[#allocation5 + $0x820] sm:$0xff]
    %v425 = vld [vmem:[#allocation5 + $0x828] sm:$0xff]
    %v426 = vld [vmem:[#allocation5 + $0x830] sm:$0xff]
    %v427 = vld [vmem:[#allocation5 + $0x838] sm:$0xff]
    %v428 = vld [vmem:[#allocation5 + $0x840] sm:$0xff]
    %v429 = vld [vmem:[#allocation5 + $0x848] sm:$0xff]
    %v430 = vld [vmem:[#allocation5 + $0x850] sm:$0xff]
    %v431 = vld [vmem:[#allocation5 + $0x858] sm:$0xff]
    %v432 = vld [vmem:[#allocation5 + $0x860] sm:$0xff]
    %v433 = vld [vmem:[#allocation5 + $0x868] sm:$0xff]
    %v434 = vld [vmem:[#allocation5 + $0x870] sm:$0xff]
    %v435 = vld [vmem:[#allocation5 + $0x878] sm:$0xff]
    %v436 = vld [vmem:[#allocation5 + $0x880] sm:$0xff]
    %v437 = vld [vmem:[#allocation5 + $0x888] sm:$0xff]
    %v438 = vld [vmem:[#allocation5 + $0x890] sm:$0xff]
    %v439 = vld [vmem:[#allocation5 + $0x898] sm:$0xff]
    %v440 = vld [vmem:[#allocation5 + $0x8a0] sm:$0xff]
    %v441 = vld [vmem:[#allocation5 + $0x8a8] sm:$0xff]
    %v442 = vld [vmem:[#allocation5 + $0x8b0] sm:$0xff]
    %v443 = vld [vmem:[#allocation5 + $0x8b8] sm:$0xff]
    %v444 = vld [vmem:[#allocation5 + $0x8c0] sm:$0xff]
    %v445 = vld [vmem:[#allocation5 + $0x8c8] sm:$0xff]
    %v446 = vld [vmem:[#allocation5 + $0x8d0] sm:$0xff]
    %v447 = vld [vmem:[#allocation5 + $0x8d8] sm:$0xff]
    %v448 = vld [vmem:[#allocation5 + $0x8e0] sm:$0xff]
    %v449 = vld [vmem:[#allocation5 + $0x8e8] sm:$0xff]
    %v450 = vld [vmem:[#allocation5 + $0x8f0] sm:$0xff]
    %v451 = vld [vmem:[#allocation5 + $0x8f8] sm:$0xff]
    %v452 = vld [vmem:[#allocation5 + $0x900] sm:$0xff]
    %v453 = vld [vmem:[#allocation5 + $0x908] sm:$0xff]
    %v454 = vld [vmem:[#allocation5 + $0x910] sm:$0xff]
    %v455 = vld [vmem:[#allocation5 + $0x918] sm:$0xff]
    %v456 = vld [vmem:[#allocation5 + $0x920] sm:$0xff]
    %v457 = vld [vmem:[#allocation5 + $0x928] sm:$0xff]
    %v458 = vld [vmem:[#allocation5 + $0x930] sm:$0xff]
    %v459 = vld [vmem:[#allocation5 + $0x938] sm:$0xff]
    %v460 = vld [vmem:[#allocation5 + $0x940] sm:$0xff]
    %v461 = vld [vmem:[#allocation5 + $0x948] sm:$0xff]
    %v462 = vld [vmem:[#allocation5 + $0x950] sm:$0xff]
    %v463 = vld [vmem:[#allocation5 + $0x958] sm:$0xff]
    %v464 = vld [vmem:[#allocation5 + $0x960] sm:$0xff]
    %v465 = vld [vmem:[#allocation5 + $0x968] sm:$0xff]
    %v466 = vld [vmem:[#allocation5 + $0x970] sm:$0xff]
    %v467 = vld [vmem:[#allocation5 + $0x978] sm:$0xff]
    %v468 = vld [vmem:[#allocation5 + $0x980] sm:$0xff]
    %v469 = vld [vmem:[#allocation5 + $0x988] sm:$0xff]
    %v470 = vld [vmem:[#allocation5 + $0x990] sm:$0xff]
    %v471 = vld [vmem:[#allocation5 + $0x998] sm:$0xff]
    %v472 = vld [vmem:[#allocation5 + $0x9a0] sm:$0xff]
    %v473 = vld [vmem:[#allocation5 + $0x9a8] sm:$0xff]
    %v474 = vld [vmem:[#allocation5 + $0x9b0] sm:$0xff]
    %v475 = vld [vmem:[#allocation5 + $0x9b8] sm:$0xff]
    %v476 = vld [vmem:[#allocation5 + $0x9c0] sm:$0xff]
    %v477 = vld [vmem:[#allocation5 + $0x9c8] sm:$0xff]
    %v478 = vld [vmem:[#allocation5 + $0x9d0] sm:$0xff]
    %v479 = vld [vmem:[#allocation5 + $0x9d8] sm:$0xff]
    %v480 = vld [vmem:[#allocation5 + $0x9e0] sm:$0xff]
    %v481 = vld [vmem:[#allocation5 + $0x9e8] sm:$0xff]
    %v482 = vld [vmem:[#allocation5 + $0x9f0] sm:$0xff]
    %v483 = vld [vmem:[#allocation5 + $0x9f8] sm:$0xff]
    %v484 = vld [vmem:[#allocation5 + $0xa00] sm:$0xff]
    %v485 = vld [vmem:[#allocation5 + $0xa08] sm:$0xff]
    %v486 = vld [vmem:[#allocation5 + $0xa10] sm:$0xff]
    %v487 = vld [vmem:[#allocation5 + $0xa18] sm:$0xff]
    %v488 = vld [vmem:[#allocation5 + $0xa20] sm:$0xff]
    %v489 = vld [vmem:[#allocation5 + $0xa28] sm:$0xff]
    %v490 = vld [vmem:[#allocation5 + $0xa30] sm:$0xff]
    %v491 = vld [vmem:[#allocation5 + $0xa38] sm:$0xff]
    %v492 = vld [vmem:[#allocation5 + $0xa40] sm:$0xff]
    %v493 = vld [vmem:[#allocation5 + $0xa48] sm:$0xff]
    %v494 = vld [vmem:[#allocation5 + $0xa50] sm:$0xff]
    %v495 = vld [vmem:[#allocation5 + $0xa58] sm:$0xff]
    %v496 = vld [vmem:[#allocation5 + $0xa60] sm:$0xff]
    %v497 = vld [vmem:[#allocation5 + $0xa68] sm:$0xff]
    %v498 = vld [vmem:[#allocation5 + $0xa70] sm:$0xff]
    %v499 = vld [vmem:[#allocation5 + $0xa78] sm:$0xff]
    %v500 = vld [vmem:[#allocation5 + $0xa80] sm:$0xff]
    %v501 = vld [vmem:[#allocation5 + $0xa88] sm:$0xff]
    %v502 = vld [vmem:[#allocation5 + $0xa90] sm:$0xff]
    %v503 = vld [vmem:[#allocation5 + $0xa98] sm:$0xff]
    %v504 = vld [vmem:[#allocation5 + $0xaa0] sm:$0xff]
    %v505 = vld [vmem:[#allocation5 + $0xaa8] sm:$0xff]
    %v506 = vld [vmem:[#allocation5 + $0xab0] sm:$0xff]
    %v507 = vld [vmem:[#allocation5 + $0xab8] sm:$0xff]
    %v508 = vld [vmem:[#allocation5 + $0xac0] sm:$0xff]
    %v509 = vld [vmem:[#allocation5 + $0xac8] sm:$0xff]
    %v510 = vld [vmem:[#allocation5 + $0xad0] sm:$0xff]
    %v511 = vld [vmem:[#allocation5 + $0xad8] sm:$0xff]
    %v512 = vld [vmem:[#allocation5 + $0xae0] sm:$0xff]
    %v513 = vld [vmem:[#allocation5 + $0xae8] sm:$0xff]
    %v514 = vld [vmem:[#allocation5 + $0xaf0] sm:$0xff]
    %v515 = vld [vmem:[#allocation5 + $0xaf8] sm:$0xff]
    %v516 = vld [vmem:[#allocation5 + $0xb00] sm:$0xff]
    %v517 = vld [vmem:[#allocation5 + $0xb08] sm:$0xff]
    %v518 = vld [vmem:[#allocation5 + $0xb10] sm:$0xff]
    %v519 = vld [vmem:[#allocation5 + $0xb18] sm:$0xff]
    %v520 = vld [vmem:[#allocation5 + $0xb20] sm:$0xff]
    %v521 = vld [vmem:[#allocation5 + $0xb28] sm:$0xff]
    %v522 = vld [vmem:[#allocation5 + $0xb30] sm:$0xff]
    %v523 = vld [vmem:[#allocation5 + $0xb38] sm:$0xff]
    %v524 = vld [vmem:[#allocation5 + $0xb40] sm:$0xff]
    %v525 = vld [vmem:[#allocation5 + $0xb48] sm:$0xff]
    %v526 = vld [vmem:[#allocation5 + $0xb50] sm:$0xff]
    %v527 = vld [vmem:[#allocation5 + $0xb58] sm:$0xff]
    %v528 = vld [vmem:[#allocation5 + $0xb60] sm:$0xff]
    %v529 = vld [vmem:[#allocation5 + $0xb68] sm:$0xff]
    %v530 = vld [vmem:[#allocation5 + $0xb70] sm:$0xff]
    %v531 = vld [vmem:[#allocation5 + $0xb78] sm:$0xff]
    %v532 = vld [vmem:[#allocation5 + $0xb80] sm:$0xff]
    %v533 = vld [vmem:[#allocation5 + $0xb88] sm:$0xff]
    %v534 = vld [vmem:[#allocation5 + $0xb90] sm:$0xff]
    %v535 = vld [vmem:[#allocation5 + $0xb98] sm:$0xff]
    %v536 = vld [vmem:[#allocation5 + $0xba0] sm:$0xff]
    %v537 = vld [vmem:[#allocation5 + $0xba8] sm:$0xff]
    %v538 = vld [vmem:[#allocation5 + $0xbb0] sm:$0xff]
    %v539 = vld [vmem:[#allocation5 + $0xbb8] sm:$0xff]
    %v540 = vld [vmem:[#allocation5 + $0xbc0] sm:$0xff]
    %v541 = vld [vmem:[#allocation5 + $0xbc8] sm:$0xff]
    %v542 = vld [vmem:[#allocation5 + $0xbd0] sm:$0xff]
    %v543 = vld [vmem:[#allocation5 + $0xbd8] sm:$0xff]
    %v544 = vld [vmem:[#allocation5 + $0xbe0] sm:$0xff]
    %v545 = vld [vmem:[#allocation5 + $0xbe8] sm:$0xff]
    %v546 = vld [vmem:[#allocation5 + $0xbf0] sm:$0xff]
    %v547 = vld [vmem:[#allocation5 + $0xbf8] sm:$0xff]
    %v548 = vld [vmem:[#allocation5 + $0xc00] sm:$0xff]
    %v549 = vld [vmem:[#allocation5 + $0xc08] sm:$0xff]
    %v550 = vld [vmem:[#allocation5 + $0xc10] sm:$0xff]
    %v551 = vld [vmem:[#allocation5 + $0xc18] sm:$0xff]
    %v552 = vld [vmem:[#allocation5 + $0xc20] sm:$0xff]
    %v553 = vld [vmem:[#allocation5 + $0xc28] sm:$0xff]
    %v554 = vld [vmem:[#allocation5 + $0xc30] sm:$0xff]
    %v555 = vld [vmem:[#allocation5 + $0xc38] sm:$0xff]
    %v556 = vld [vmem:[#allocation7] sm:$0xff]
    %v558 = vperm.slane %v556, 0
    %v559 = vperm.slane %v556, 1
    %v560 = vperm.slane %v556, 2
    %v561 = vperm.slane %v556, 3
    %v562 = vperm.slane %v556, 4
    %v563 = vperm.slane %v556, 5
    %v564 = vperm.slane %v556, 6
    %v565 = vperm.slane %v556, 7
    %v966 = vunpack.c.l.b16 %v164
    %v967 = vunpack.c.h.b16 %v164
    %v968 = vunpack.c.l.b16 %v165
    %v969 = vunpack.c.h.b16 %v165
    %v970 = vunpack.c.l.b16 %v166
    %v971 = vunpack.c.h.b16 %v166
    %v972 = vunpack.c.l.b16 %v167
    %v973 = vunpack.c.h.b16 %v167
    %v974 = vunpack.c.l.b16 %v168
    %v975 = vunpack.c.h.b16 %v168
    %v976 = vunpack.c.l.b16 %v169
    %v977 = vunpack.c.h.b16 %v169
    %v978 = vunpack.c.l.b16 %v170
    %v979 = vunpack.c.h.b16 %v170
    %v980 = vunpack.c.l.b16 %v171
    %v981 = vunpack.c.h.b16 %v171
    %v982 = vunpack.c.l.b16 %v172
    %v983 = vunpack.c.h.b16 %v172
    %v984 = vunpack.c.l.b16 %v173
    %v985 = vunpack.c.h.b16 %v173
    %v986 = vunpack.c.l.b16 %v174
    %v987 = vunpack.c.h.b16 %v174
    %v988 = vunpack.c.l.b16 %v175
    %v989 = vunpack.c.h.b16 %v175
    %v990 = vunpack.c.l.b16 %v176
    %v991 = vunpack.c.h.b16 %v176
    %v992 = vunpack.c.l.b16 %v177
    %v993 = vunpack.c.h.b16 %v177
    %v994 = vunpack.c.l.b16 %v178
    %v995 = vunpack.c.h.b16 %v178
    %v996 = vunpack.c.l.b16 %v179
    %v997 = vunpack.c.h.b16 %v179
    %v998 = vunpack.c.l.b16 %v180
    %v999 = vunpack.c.h.b16 %v180
    %v1000 = vunpack.c.l.b16 %v181
    %v1001 = vunpack.c.h.b16 %v181
    %v1002 = vunpack.c.l.b16 %v182
    %v1003 = vunpack.c.h.b16 %v182
    %v1004 = vunpack.c.l.b16 %v183
    %v1005 = vunpack.c.h.b16 %v183
    %v1006 = vunpack.c.l.b16 %v184
    %v1007 = vunpack.c.h.b16 %v184
    %v1008 = vunpack.c.l.b16 %v185
    %v1009 = vunpack.c.h.b16 %v185
    %v1010 = vunpack.c.l.b16 %v186
    %v1011 = vunpack.c.h.b16 %v186
    %v1012 = vunpack.c.l.b16 %v187
    %v1013 = vunpack.c.h.b16 %v187
    %v1014 = vunpack.c.l.b16 %v188
    %v1015 = vunpack.c.h.b16 %v188
    %v1016 = vunpack.c.l.b16 %v189
    %v1017 = vunpack.c.h.b16 %v189
    %v1018 = vunpack.c.l.b16 %v190
    %v1019 = vunpack.c.h.b16 %v190
    %v1020 = vunpack.c.l.b16 %v191
    %v1021 = vunpack.c.h.b16 %v191
    %v1022 = vunpack.c.l.b16 %v192
    %v1023 = vunpack.c.h.b16 %v192
    %v1024 = vunpack.c.l.b16 %v193
    %v1025 = vunpack.c.h.b16 %v193
    %v1026 = vunpack.c.l.b16 %v194
    %v1027 = vunpack.c.h.b16 %v194
    %v1028 = vunpack.c.l.b16 %v195
    %v1029 = vunpack.c.h.b16 %v195
    %v1030 = vunpack.c.l.b16 %v196
    %v1031 = vunpack.c.h.b16 %v196
    %v1032 = vunpack.c.l.b16 %v197
    %v1033 = vunpack.c.h.b16 %v197
    %v1034 = vunpack.c.l.b16 %v198
    %v1035 = vunpack.c.h.b16 %v198
    %v1036 = vunpack.c.l.b16 %v199
    %v1037 = vunpack.c.h.b16 %v199
    %v1038 = vunpack.c.l.b16 %v200
    %v1039 = vunpack.c.h.b16 %v200
    %v1040 = vunpack.c.l.b16 %v201
    %v1041 = vunpack.c.h.b16 %v201
    %v1042 = vunpack.c.l.b16 %v202
    %v1043 = vunpack.c.h.b16 %v202
    %v1044 = vunpack.c.l.b16 %v203
    %v1045 = vunpack.c.h.b16 %v203
    %v1046 = vunpack.c.l.b16 %v204
    %v1047 = vunpack.c.h.b16 %v204
    %v1048 = vunpack.c.l.b16 %v205
    %v1049 = vunpack.c.h.b16 %v205
    %v1050 = vunpack.c.l.b16 %v206
    %v1051 = vunpack.c.h.b16 %v206
    %v1052 = vunpack.c.l.b16 %v207
    %v1053 = vunpack.c.h.b16 %v207
    %v1054 = vunpack.c.l.b16 %v208
    %v1055 = vunpack.c.h.b16 %v208
    %v1056 = vunpack.c.l.b16 %v209
    %v1057 = vunpack.c.h.b16 %v209
    %v1058 = vunpack.c.l.b16 %v210
    %v1059 = vunpack.c.h.b16 %v210
    %v1060 = vunpack.c.l.b16 %v211
    %v1061 = vunpack.c.h.b16 %v211
    %v1062 = vunpack.c.l.b16 %v212
    %v1063 = vunpack.c.h.b16 %v212
    %v1064 = vunpack.c.l.b16 %v213
    %v1065 = vunpack.c.h.b16 %v213
    %v1066 = vunpack.c.l.b16 %v214
    %v1067 = vunpack.c.h.b16 %v214
    %v1068 = vunpack.c.l.b16 %v215
    %v1069 = vunpack.c.h.b16 %v215
    %v1070 = vunpack.c.l.b16 %v216
    %v1071 = vunpack.c.h.b16 %v216
    %v1072 = vunpack.c.l.b16 %v217
    %v1073 = vunpack.c.h.b16 %v217
    %v1074 = vunpack.c.l.b16 %v218
    %v1075 = vunpack.c.h.b16 %v218
    %v1076 = vunpack.c.l.b16 %v219
    %v1077 = vunpack.c.h.b16 %v219
    %v1078 = vunpack.c.l.b16 %v220
    %v1079 = vunpack.c.h.b16 %v220
    %v1080 = vunpack.c.l.b16 %v221
    %v1081 = vunpack.c.h.b16 %v221
    %v1082 = vunpack.c.l.b16 %v222
    %v1083 = vunpack.c.h.b16 %v222
    %v1084 = vunpack.c.l.b16 %v223
    %v1085 = vunpack.c.h.b16 %v223
    %v1086 = vunpack.c.l.b16 %v224
    %v1087 = vunpack.c.h.b16 %v224
    %v1088 = vunpack.c.l.b16 %v225
    %v1089 = vunpack.c.h.b16 %v225
    %v1090 = vunpack.c.l.b16 %v226
    %v1091 = vunpack.c.h.b16 %v226
    %v1092 = vunpack.c.l.b16 %v227
    %v1093 = vunpack.c.h.b16 %v227
    %v1094 = vunpack.c.l.b16 %v228
    %v1095 = vunpack.c.h.b16 %v228
    %v1096 = vunpack.c.l.b16 %v229
    %v1097 = vunpack.c.h.b16 %v229
    %v1098 = vunpack.c.l.b16 %v230
    %v1099 = vunpack.c.h.b16 %v230
    %v1100 = vunpack.c.l.b16 %v231
    %v1101 = vunpack.c.h.b16 %v231
    %v1102 = vunpack.c.l.b16 %v232
    %v1103 = vunpack.c.h.b16 %v232
    %v1104 = vunpack.c.l.b16 %v233
    %v1105 = vunpack.c.h.b16 %v233
    %v1106 = vunpack.c.l.b16 %v234
    %v1107 = vunpack.c.h.b16 %v234
    %v1108 = vunpack.c.l.b16 %v235
    %v1109 = vunpack.c.h.b16 %v235
    %v1110 = vunpack.c.l.b16 %v236
    %v1111 = vunpack.c.h.b16 %v236
    %v1112 = vunpack.c.l.b16 %v237
    %v1113 = vunpack.c.h.b16 %v237
    %v1114 = vunpack.c.l.b16 %v238
    %v1115 = vunpack.c.h.b16 %v238
    %v1116 = vunpack.c.l.b16 %v239
    %v1117 = vunpack.c.h.b16 %v239
    %v1118 = vunpack.c.l.b16 %v240
    %v1119 = vunpack.c.h.b16 %v240
    %v1120 = vunpack.c.l.b16 %v241
    %v1121 = vunpack.c.h.b16 %v241
    %v1122 = vunpack.c.l.b16 %v242
    %v1123 = vunpack.c.h.b16 %v242
    %v1124 = vunpack.c.l.b16 %v243
    %v1125 = vunpack.c.h.b16 %v243
    %v1126 = vunpack.c.l.b16 %v244
    %v1127 = vunpack.c.h.b16 %v244
    %v1128 = vunpack.c.l.b16 %v245
    %v1129 = vunpack.c.h.b16 %v245
    %v1130 = vunpack.c.l.b16 %v246
    %v1131 = vunpack.c.h.b16 %v246
    %v1132 = vunpack.c.l.b16 %v247
    %v1133 = vunpack.c.h.b16 %v247
    %v1134 = vunpack.c.l.b16 %v248
    %v1135 = vunpack.c.h.b16 %v248
    %v1136 = vunpack.c.l.b16 %v249
    %v1137 = vunpack.c.h.b16 %v249
    %v1138 = vunpack.c.l.b16 %v250
    %v1139 = vunpack.c.h.b16 %v250
    %v1140 = vunpack.c.l.b16 %v251
    %v1141 = vunpack.c.h.b16 %v251
    %v1142 = vunpack.c.l.b16 %v252
    %v1143 = vunpack.c.h.b16 %v252
    %v1144 = vunpack.c.l.b16 %v253
    %v1145 = vunpack.c.h.b16 %v253
    %v1146 = vunpack.c.l.b16 %v254
    %v1147 = vunpack.c.h.b16 %v254
    %v1148 = vunpack.c.l.b16 %v255
    %v1149 = vunpack.c.h.b16 %v255
    %v1150 = vunpack.c.l.b16 %v256
    %v1151 = vunpack.c.h.b16 %v256
    %v1152 = vunpack.c.l.b16 %v257
    %v1153 = vunpack.c.h.b16 %v257
    %v1154 = vunpack.c.l.b16 %v258
    %v1155 = vunpack.c.h.b16 %v258
    %v1156 = vunpack.c.l.b16 %v259
    %v1157 = vunpack.c.h.b16 %v259
    %v1158 = vunpack.c.l.b16 %v260
    %v1159 = vunpack.c.h.b16 %v260
    %v1160 = vunpack.c.l.b16 %v261
    %v1161 = vunpack.c.h.b16 %v261
    %v1162 = vunpack.c.l.b16 %v262
    %v1163 = vunpack.c.h.b16 %v262
    %v1164 = vunpack.c.l.b16 %v263
    %v1165 = vunpack.c.h.b16 %v263
    %v1166 = vunpack.c.l.b16 %v264
    %v1167 = vunpack.c.h.b16 %v264
    %v1168 = vunpack.c.l.b16 %v265
    %v1169 = vunpack.c.h.b16 %v265
    %v1170 = vunpack.c.l.b16 %v266
    %v1171 = vunpack.c.h.b16 %v266
    %v1172 = vunpack.c.l.b16 %v267
    %v1173 = vunpack.c.h.b16 %v267
    %v1174 = vunpack.c.l.b16 %v268
    %v1175 = vunpack.c.h.b16 %v268
    %v1176 = vunpack.c.l.b16 %v269
    %v1177 = vunpack.c.h.b16 %v269
    %v1178 = vunpack.c.l.b16 %v270
    %v1179 = vunpack.c.h.b16 %v270
    %v1180 = vunpack.c.l.b16 %v271
    %v1181 = vunpack.c.h.b16 %v271
    %v1182 = vunpack.c.l.b16 %v272
    %v1183 = vunpack.c.h.b16 %v272
    %v1184 = vunpack.c.l.b16 %v273
    %v1185 = vunpack.c.h.b16 %v273
    %v1186 = vunpack.c.l.b16 %v274
    %v1187 = vunpack.c.h.b16 %v274
    %v1188 = vunpack.c.l.b16 %v275
    %v1189 = vunpack.c.h.b16 %v275
    %v1190 = vunpack.c.l.b16 %v276
    %v1191 = vunpack.c.h.b16 %v276
    %v1192 = vunpack.c.l.b16 %v277
    %v1193 = vunpack.c.h.b16 %v277
    %v1194 = vunpack.c.l.b16 %v278
    %v1195 = vunpack.c.h.b16 %v278
    %v1196 = vunpack.c.l.b16 %v279
    %v1197 = vunpack.c.h.b16 %v279
    %v1198 = vunpack.c.l.b16 %v280
    %v1199 = vunpack.c.h.b16 %v280
    %v1200 = vunpack.c.l.b16 %v281
    %v1201 = vunpack.c.h.b16 %v281
    %v1202 = vunpack.c.l.b16 %v282
    %v1203 = vunpack.c.h.b16 %v282
    %v1204 = vunpack.c.l.b16 %v283
    %v1205 = vunpack.c.h.b16 %v283
    %v1206 = vunpack.c.l.b16 %v284
    %v1207 = vunpack.c.h.b16 %v284
    %v1208 = vunpack.c.l.b16 %v285
    %v1209 = vunpack.c.h.b16 %v285
    %v1210 = vunpack.c.l.b16 %v286
    %v1211 = vunpack.c.h.b16 %v286
    %v1212 = vunpack.c.l.b16 %v287
    %v1213 = vunpack.c.h.b16 %v287
    %v1214 = vunpack.c.l.b16 %v288
    %v1215 = vunpack.c.h.b16 %v288
    %v1216 = vunpack.c.l.b16 %v289
    %v1217 = vunpack.c.h.b16 %v289
    %v1218 = vunpack.c.l.b16 %v290
    %v1219 = vunpack.c.h.b16 %v290
    %v1220 = vunpack.c.l.b16 %v291
    %v1221 = vunpack.c.h.b16 %v291
    %v1222 = vunpack.c.l.b16 %v292
    %v1223 = vunpack.c.h.b16 %v292
    %v1224 = vunpack.c.l.b16 %v293
    %v1225 = vunpack.c.h.b16 %v293
    %v1226 = vunpack.c.l.b16 %v294
    %v1227 = vunpack.c.h.b16 %v294
    %v1228 = vunpack.c.l.b16 %v295
    %v1229 = vunpack.c.h.b16 %v295
    %v1230 = vunpack.c.l.b16 %v296
    %v1231 = vunpack.c.h.b16 %v296
    %v1232 = vunpack.c.l.b16 %v297
    %v1233 = vunpack.c.h.b16 %v297
    %v1234 = vunpack.c.l.b16 %v298
    %v1235 = vunpack.c.h.b16 %v298
    %v1236 = vunpack.c.l.b16 %v299
    %v1237 = vunpack.c.h.b16 %v299
    %v1238 = vunpack.c.l.b16 %v300
    %v1239 = vunpack.c.h.b16 %v300
    %v1240 = vunpack.c.l.b16 %v301
    %v1241 = vunpack.c.h.b16 %v301
    %v1242 = vunpack.c.l.b16 %v302
    %v1243 = vunpack.c.h.b16 %v302
    %v1244 = vunpack.c.l.b16 %v303
    %v1245 = vunpack.c.h.b16 %v303
    %v1246 = vunpack.c.l.b16 %v304
    %v1247 = vunpack.c.h.b16 %v304
    %v1248 = vunpack.c.l.b16 %v305
    %v1249 = vunpack.c.h.b16 %v305
    %v1250 = vunpack.c.l.b16 %v306
    %v1251 = vunpack.c.h.b16 %v306
    %v1252 = vunpack.c.l.b16 %v307
    %v1253 = vunpack.c.h.b16 %v307
    %v1254 = vunpack.c.l.b16 %v308
    %v1255 = vunpack.c.h.b16 %v308
    %v1256 = vunpack.c.l.b16 %v309
    %v1257 = vunpack.c.h.b16 %v309
    %v1258 = vunpack.c.l.b16 %v310
    %v1259 = vunpack.c.h.b16 %v310
    %v1260 = vunpack.c.l.b16 %v311
    %v1261 = vunpack.c.h.b16 %v311
    %v1262 = vunpack.c.l.b16 %v312
    %v1263 = vunpack.c.h.b16 %v312
    %v1264 = vunpack.c.l.b16 %v313
    %v1265 = vunpack.c.h.b16 %v313
    %v1266 = vunpack.c.l.b16 %v314
    %v1267 = vunpack.c.h.b16 %v314
    %v1268 = vunpack.c.l.b16 %v315
    %v1269 = vunpack.c.h.b16 %v315
    %v1270 = vunpack.c.l.b16 %v316
    %v1271 = vunpack.c.h.b16 %v316
    %v1272 = vunpack.c.l.b16 %v317
    %v1273 = vunpack.c.h.b16 %v317
    %v1274 = vunpack.c.l.b16 %v318
    %v1275 = vunpack.c.h.b16 %v318
    %v1276 = vunpack.c.l.b16 %v319
    %v1277 = vunpack.c.h.b16 %v319
    %v1278 = vunpack.c.l.b16 %v320
    %v1279 = vunpack.c.h.b16 %v320
    %v1280 = vunpack.c.l.b16 %v321
    %v1281 = vunpack.c.h.b16 %v321
    %v1282 = vunpack.c.l.b16 %v322
    %v1283 = vunpack.c.h.b16 %v322
    %v1284 = vunpack.c.l.b16 %v323
    %v1285 = vunpack.c.h.b16 %v323
    %v1286 = vunpack.c.l.b16 %v324
    %v1287 = vunpack.c.h.b16 %v324
    %v1288 = vunpack.c.l.b16 %v325
    %v1289 = vunpack.c.h.b16 %v325
    %v1290 = vunpack.c.l.b16 %v326
    %v1291 = vunpack.c.h.b16 %v326
    %v1292 = vunpack.c.l.b16 %v327
    %v1293 = vunpack.c.h.b16 %v327
    %v1294 = vunpack.c.l.b16 %v328
    %v1295 = vunpack.c.h.b16 %v328
    %v1296 = vunpack.c.l.b16 %v329
    %v1297 = vunpack.c.h.b16 %v329
    %v1298 = vunpack.c.l.b16 %v330
    %v1299 = vunpack.c.h.b16 %v330
    %v1300 = vunpack.c.l.b16 %v331
    %v1301 = vunpack.c.h.b16 %v331
    %v1302 = vunpack.c.l.b16 %v332
    %v1303 = vunpack.c.h.b16 %v332
    %v1304 = vunpack.c.l.b16 %v333
    %v1305 = vunpack.c.h.b16 %v333
    %v1306 = vunpack.c.l.b16 %v334
    %v1307 = vunpack.c.h.b16 %v334
    %v1308 = vunpack.c.l.b16 %v335
    %v1309 = vunpack.c.h.b16 %v335
    %v1310 = vunpack.c.l.b16 %v336
    %v1311 = vunpack.c.h.b16 %v336
    %v1312 = vunpack.c.l.b16 %v337
    %v1313 = vunpack.c.h.b16 %v337
    %v1314 = vunpack.c.l.b16 %v338
    %v1315 = vunpack.c.h.b16 %v338
    %v1316 = vunpack.c.l.b16 %v339
    %v1317 = vunpack.c.h.b16 %v339
    %v1318 = vunpack.c.l.b16 %v340
    %v1319 = vunpack.c.h.b16 %v340
    %v1320 = vunpack.c.l.b16 %v341
    %v1321 = vunpack.c.h.b16 %v341
    %v1322 = vunpack.c.l.b16 %v342
    %v1323 = vunpack.c.h.b16 %v342
    %v1324 = vunpack.c.l.b16 %v343
    %v1325 = vunpack.c.h.b16 %v343
    %v1326 = vunpack.c.l.b16 %v344
    %v1327 = vunpack.c.h.b16 %v344
    %v1328 = vunpack.c.l.b16 %v345
    %v1329 = vunpack.c.h.b16 %v345
    %v1330 = vunpack.c.l.b16 %v346
    %v1331 = vunpack.c.h.b16 %v346
    %v1332 = vunpack.c.l.b16 %v347
    %v1333 = vunpack.c.h.b16 %v347
    %v1334 = vunpack.c.l.b16 %v348
    %v1335 = vunpack.c.h.b16 %v348
    %v1336 = vunpack.c.l.b16 %v349
    %v1337 = vunpack.c.h.b16 %v349
    %v1338 = vunpack.c.l.b16 %v350
    %v1339 = vunpack.c.h.b16 %v350
    %v1340 = vunpack.c.l.b16 %v351
    %v1341 = vunpack.c.h.b16 %v351
    %v1342 = vunpack.c.l.b16 %v352
    %v1343 = vunpack.c.h.b16 %v352
    %v1344 = vunpack.c.l.b16 %v353
    %v1345 = vunpack.c.h.b16 %v353
    %v1346 = vunpack.c.l.b16 %v354
    %v1347 = vunpack.c.h.b16 %v354
    %v1348 = vunpack.c.l.b16 %v355
    %v1349 = vunpack.c.h.b16 %v355
    %v1350 = vunpack.c.l.b16 %v356
    %v1351 = vunpack.c.h.b16 %v356
    %v1352 = vunpack.c.l.b16 %v357
    %v1353 = vunpack.c.h.b16 %v357
    %v1354 = vunpack.c.l.b16 %v358
    %v1355 = vunpack.c.h.b16 %v358
    %v1356 = vunpack.c.l.b16 %v359
    %v1357 = vunpack.c.h.b16 %v359
    %v1358 = vunpack.c.l.b16 %v360
    %v1359 = vunpack.c.h.b16 %v360
    %v1360 = vunpack.c.l.b16 %v361
    %v1361 = vunpack.c.h.b16 %v361
    %v1362 = vunpack.c.l.b16 %v362
    %v1363 = vunpack.c.h.b16 %v362
    %v1364 = vunpack.c.l.b16 %v363
    %v1365 = vunpack.c.h.b16 %v363
    %v1366 = vunpack.c.l.b16 %v364
    %v1367 = vunpack.c.h.b16 %v364
    %v1368 = vunpack.c.l.b16 %v365
    %v1369 = vunpack.c.h.b16 %v365
    %v1370 = vunpack.c.l.b16 %v366
    %v1371 = vunpack.c.h.b16 %v366
    %v1372 = vunpack.c.l.b16 %v367
    %v1373 = vunpack.c.h.b16 %v367
    %v1374 = vunpack.c.l.b16 %v368
    %v1375 = vunpack.c.h.b16 %v368
    %v1376 = vunpack.c.l.b16 %v369
    %v1377 = vunpack.c.h.b16 %v369
    %v1378 = vunpack.c.l.b16 %v370
    %v1379 = vunpack.c.h.b16 %v370
    %v1380 = vunpack.c.l.b16 %v371
    %v1381 = vunpack.c.h.b16 %v371
    %v1382 = vunpack.c.l.b16 %v372
    %v1383 = vunpack.c.h.b16 %v372
    %v1384 = vunpack.c.l.b16 %v373
    %v1385 = vunpack.c.h.b16 %v373
    %v1386 = vunpack.c.l.b16 %v374
    %v1387 = vunpack.c.h.b16 %v374
    %v1388 = vunpack.c.l.b16 %v375
    %v1389 = vunpack.c.h.b16 %v375
    %v1390 = vunpack.c.l.b16 %v376
    %v1391 = vunpack.c.h.b16 %v376
    %v1392 = vunpack.c.l.b16 %v377
    %v1393 = vunpack.c.h.b16 %v377
    %v1394 = vunpack.c.l.b16 %v378
    %v1395 = vunpack.c.h.b16 %v378
    %v1396 = vunpack.c.l.b16 %v379
    %v1397 = vunpack.c.h.b16 %v379
    %v1398 = vunpack.c.l.b16 %v380
    %v1399 = vunpack.c.h.b16 %v380
    %v1400 = vunpack.c.l.b16 %v381
    %v1401 = vunpack.c.h.b16 %v381
    %v1402 = vunpack.c.l.b16 %v382
    %v1403 = vunpack.c.h.b16 %v382
    %v1404 = vunpack.c.l.b16 %v383
    %v1405 = vunpack.c.h.b16 %v383
    %v1406 = vunpack.c.l.b16 %v384
    %v1407 = vunpack.c.h.b16 %v384
    %v1408 = vunpack.c.l.b16 %v385
    %v1409 = vunpack.c.h.b16 %v385
    %v1410 = vunpack.c.l.b16 %v386
    %v1411 = vunpack.c.h.b16 %v386
    %v1412 = vunpack.c.l.b16 %v387
    %v1413 = vunpack.c.h.b16 %v387
    %v1414 = vunpack.c.l.b16 %v388
    %v1415 = vunpack.c.h.b16 %v388
    %v1416 = vunpack.c.l.b16 %v389
    %v1417 = vunpack.c.h.b16 %v389
    %v1418 = vunpack.c.l.b16 %v390
    %v1419 = vunpack.c.h.b16 %v390
    %v1420 = vunpack.c.l.b16 %v391
    %v1421 = vunpack.c.h.b16 %v391
    %v1422 = vunpack.c.l.b16 %v392
    %v1423 = vunpack.c.h.b16 %v392
    %v1424 = vunpack.c.l.b16 %v393
    %v1425 = vunpack.c.h.b16 %v393
    %v1426 = vunpack.c.l.b16 %v394
    %v1427 = vunpack.c.h.b16 %v394
    %v1428 = vunpack.c.l.b16 %v395
    %v1429 = vunpack.c.h.b16 %v395
    %v1430 = vunpack.c.l.b16 %v396
    %v1431 = vunpack.c.h.b16 %v396
    %v1432 = vunpack.c.l.b16 %v397
    %v1433 = vunpack.c.h.b16 %v397
    %v1434 = vunpack.c.l.b16 %v398
    %v1435 = vunpack.c.h.b16 %v398
    %v1436 = vunpack.c.l.b16 %v399
    %v1437 = vunpack.c.h.b16 %v399
    %v1438 = vunpack.c.l.b16 %v400
    %v1439 = vunpack.c.h.b16 %v400
    %v1440 = vunpack.c.l.b16 %v401
    %v1441 = vunpack.c.h.b16 %v401
    %v1442 = vunpack.c.l.b16 %v402
    %v1443 = vunpack.c.h.b16 %v402
    %v1444 = vunpack.c.l.b16 %v403
    %v1445 = vunpack.c.h.b16 %v403
    %v1446 = vunpack.c.l.b16 %v404
    %v1447 = vunpack.c.h.b16 %v404
    %v1448 = vunpack.c.l.b16 %v405
    %v1449 = vunpack.c.h.b16 %v405
    %v1450 = vunpack.c.l.b16 %v406
    %v1451 = vunpack.c.h.b16 %v406
    %v1452 = vunpack.c.l.b16 %v407
    %v1453 = vunpack.c.h.b16 %v407
    %v1454 = vunpack.c.l.b16 %v408
    %v1455 = vunpack.c.h.b16 %v408
    %v1456 = vunpack.c.l.b16 %v409
    %v1457 = vunpack.c.h.b16 %v409
    %v1458 = vunpack.c.l.b16 %v410
    %v1459 = vunpack.c.h.b16 %v410
    %v1460 = vunpack.c.l.b16 %v411
    %v1461 = vunpack.c.h.b16 %v411
    %v1462 = vunpack.c.l.b16 %v412
    %v1463 = vunpack.c.h.b16 %v412
    %v1464 = vunpack.c.l.b16 %v413
    %v1465 = vunpack.c.h.b16 %v413
    %v1466 = vunpack.c.l.b16 %v414
    %v1467 = vunpack.c.h.b16 %v414
    %v1468 = vunpack.c.l.b16 %v415
    %v1469 = vunpack.c.h.b16 %v415
    %v1470 = vunpack.c.l.b16 %v416
    %v1471 = vunpack.c.h.b16 %v416
    %v1472 = vunpack.c.l.b16 %v417
    %v1473 = vunpack.c.h.b16 %v417
    %v1474 = vunpack.c.l.b16 %v418
    %v1475 = vunpack.c.h.b16 %v418
    %v1476 = vunpack.c.l.b16 %v419
    %v1477 = vunpack.c.h.b16 %v419
    %v1478 = vunpack.c.l.b16 %v420
    %v1479 = vunpack.c.h.b16 %v420
    %v1480 = vunpack.c.l.b16 %v421
    %v1481 = vunpack.c.h.b16 %v421
    %v1482 = vunpack.c.l.b16 %v422
    %v1483 = vunpack.c.h.b16 %v422
    %v1484 = vunpack.c.l.b16 %v423
    %v1485 = vunpack.c.h.b16 %v423
    %v1486 = vunpack.c.l.b16 %v424
    %v1487 = vunpack.c.h.b16 %v424
    %v1488 = vunpack.c.l.b16 %v425
    %v1489 = vunpack.c.h.b16 %v425
    %v1490 = vunpack.c.l.b16 %v426
    %v1491 = vunpack.c.h.b16 %v426
    %v1492 = vunpack.c.l.b16 %v427
    %v1493 = vunpack.c.h.b16 %v427
    %v1494 = vunpack.c.l.b16 %v428
    %v1495 = vunpack.c.h.b16 %v428
    %v1496 = vunpack.c.l.b16 %v429
    %v1497 = vunpack.c.h.b16 %v429
    %v1498 = vunpack.c.l.b16 %v430
    %v1499 = vunpack.c.h.b16 %v430
    %v1500 = vunpack.c.l.b16 %v431
    %v1501 = vunpack.c.h.b16 %v431
    %v1502 = vunpack.c.l.b16 %v432
    %v1503 = vunpack.c.h.b16 %v432
    %v1504 = vunpack.c.l.b16 %v433
    %v1505 = vunpack.c.h.b16 %v433
    %v1506 = vunpack.c.l.b16 %v434
    %v1507 = vunpack.c.h.b16 %v434
    %v1508 = vunpack.c.l.b16 %v435
    %v1509 = vunpack.c.h.b16 %v435
    %v1510 = vunpack.c.l.b16 %v436
    %v1511 = vunpack.c.h.b16 %v436
    %v1512 = vunpack.c.l.b16 %v437
    %v1513 = vunpack.c.h.b16 %v437
    %v1514 = vunpack.c.l.b16 %v438
    %v1515 = vunpack.c.h.b16 %v438
    %v1516 = vunpack.c.l.b16 %v439
    %v1517 = vunpack.c.h.b16 %v439
    %v1518 = vunpack.c.l.b16 %v440
    %v1519 = vunpack.c.h.b16 %v440
    %v1520 = vunpack.c.l.b16 %v441
    %v1521 = vunpack.c.h.b16 %v441
    %v1522 = vunpack.c.l.b16 %v442
    %v1523 = vunpack.c.h.b16 %v442
    %v1524 = vunpack.c.l.b16 %v443
    %v1525 = vunpack.c.h.b16 %v443
    %v1526 = vunpack.c.l.b16 %v444
    %v1527 = vunpack.c.h.b16 %v444
    %v1528 = vunpack.c.l.b16 %v445
    %v1529 = vunpack.c.h.b16 %v445
    %v1530 = vunpack.c.l.b16 %v446
    %v1531 = vunpack.c.h.b16 %v446
    %v1532 = vunpack.c.l.b16 %v447
    %v1533 = vunpack.c.h.b16 %v447
    %v1534 = vunpack.c.l.b16 %v448
    %v1535 = vunpack.c.h.b16 %v448
    %v1536 = vunpack.c.l.b16 %v449
    %v1537 = vunpack.c.h.b16 %v449
    %v1538 = vunpack.c.l.b16 %v450
    %v1539 = vunpack.c.h.b16 %v450
    %v1540 = vunpack.c.l.b16 %v451
    %v1541 = vunpack.c.h.b16 %v451
    %v1542 = vunpack.c.l.b16 %v452
    %v1543 = vunpack.c.h.b16 %v452
    %v1544 = vunpack.c.l.b16 %v453
    %v1545 = vunpack.c.h.b16 %v453
    %v1546 = vunpack.c.l.b16 %v454
    %v1547 = vunpack.c.h.b16 %v454
    %v1548 = vunpack.c.l.b16 %v455
    %v1549 = vunpack.c.h.b16 %v455
    %v1550 = vunpack.c.l.b16 %v456
    %v1551 = vunpack.c.h.b16 %v456
    %v1552 = vunpack.c.l.b16 %v457
    %v1553 = vunpack.c.h.b16 %v457
    %v1554 = vunpack.c.l.b16 %v458
    %v1555 = vunpack.c.h.b16 %v458
    %v1556 = vunpack.c.l.b16 %v459
    %v1557 = vunpack.c.h.b16 %v459
    %v1558 = vunpack.c.l.b16 %v460
    %v1559 = vunpack.c.h.b16 %v460
    %v1560 = vunpack.c.l.b16 %v461
    %v1561 = vunpack.c.h.b16 %v461
    %v1562 = vunpack.c.l.b16 %v462
    %v1563 = vunpack.c.h.b16 %v462
    %v1564 = vunpack.c.l.b16 %v463
    %v1565 = vunpack.c.h.b16 %v463
    %v1566 = vunpack.c.l.b16 %v464
    %v1567 = vunpack.c.h.b16 %v464
    %v1568 = vunpack.c.l.b16 %v465
    %v1569 = vunpack.c.h.b16 %v465
    %v1570 = vunpack.c.l.b16 %v466
    %v1571 = vunpack.c.h.b16 %v466
    %v1572 = vunpack.c.l.b16 %v467
    %v1573 = vunpack.c.h.b16 %v467
    %v1574 = vunpack.c.l.b16 %v468
    %v1575 = vunpack.c.h.b16 %v468
    %v1576 = vunpack.c.l.b16 %v469
    %v1577 = vunpack.c.h.b16 %v469
    %v1578 = vunpack.c.l.b16 %v470
    %v1579 = vunpack.c.h.b16 %v470
    %v1580 = vunpack.c.l.b16 %v471
    %v1581 = vunpack.c.h.b16 %v471
    %v1582 = vunpack.c.l.b16 %v472
    %v1583 = vunpack.c.h.b16 %v472
    %v1584 = vunpack.c.l.b16 %v473
    %v1585 = vunpack.c.h.b16 %v473
    %v1586 = vunpack.c.l.b16 %v474
    %v1587 = vunpack.c.h.b16 %v474
    %v1588 = vunpack.c.l.b16 %v475
    %v1589 = vunpack.c.h.b16 %v475
    %v1590 = vunpack.c.l.b16 %v476
    %v1591 = vunpack.c.h.b16 %v476
    %v1592 = vunpack.c.l.b16 %v477
    %v1593 = vunpack.c.h.b16 %v477
    %v1594 = vunpack.c.l.b16 %v478
    %v1595 = vunpack.c.h.b16 %v478
    %v1596 = vunpack.c.l.b16 %v479
    %v1597 = vunpack.c.h.b16 %v479
    %v1598 = vunpack.c.l.b16 %v480
    %v1599 = vunpack.c.h.b16 %v480
    %v1600 = vunpack.c.l.b16 %v481
    %v1601 = vunpack.c.h.b16 %v481
    %v1602 = vunpack.c.l.b16 %v482
    %v1603 = vunpack.c.h.b16 %v482
    %v1604 = vunpack.c.l.b16 %v483
    %v1605 = vunpack.c.h.b16 %v483
    %v1606 = vunpack.c.l.b16 %v484
    %v1607 = vunpack.c.h.b16 %v484
    %v1608 = vunpack.c.l.b16 %v485
    %v1609 = vunpack.c.h.b16 %v485
    %v1610 = vunpack.c.l.b16 %v486
    %v1611 = vunpack.c.h.b16 %v486
    %v1612 = vunpack.c.l.b16 %v487
    %v1613 = vunpack.c.h.b16 %v487
    %v1614 = vunpack.c.l.b16 %v488
    %v1615 = vunpack.c.h.b16 %v488
    %v1616 = vunpack.c.l.b16 %v489
    %v1617 = vunpack.c.h.b16 %v489
    %v1618 = vunpack.c.l.b16 %v490
    %v1619 = vunpack.c.h.b16 %v490
    %v1620 = vunpack.c.l.b16 %v491
    %v1621 = vunpack.c.h.b16 %v491
    %v1622 = vunpack.c.l.b16 %v492
    %v1623 = vunpack.c.h.b16 %v492
    %v1624 = vunpack.c.l.b16 %v493
    %v1625 = vunpack.c.h.b16 %v493
    %v1626 = vunpack.c.l.b16 %v494
    %v1627 = vunpack.c.h.b16 %v494
    %v1628 = vunpack.c.l.b16 %v495
    %v1629 = vunpack.c.h.b16 %v495
    %v1630 = vunpack.c.l.b16 %v496
    %v1631 = vunpack.c.h.b16 %v496
    %v1632 = vunpack.c.l.b16 %v497
    %v1633 = vunpack.c.h.b16 %v497
    %v1634 = vunpack.c.l.b16 %v498
    %v1635 = vunpack.c.h.b16 %v498
    %v1636 = vunpack.c.l.b16 %v499
    %v1637 = vunpack.c.h.b16 %v499
    %v1638 = vunpack.c.l.b16 %v500
    %v1639 = vunpack.c.h.b16 %v500
    %v1640 = vunpack.c.l.b16 %v501
    %v1641 = vunpack.c.h.b16 %v501
    %v1642 = vunpack.c.l.b16 %v502
    %v1643 = vunpack.c.h.b16 %v502
    %v1644 = vunpack.c.l.b16 %v503
    %v1645 = vunpack.c.h.b16 %v503
    %v1646 = vunpack.c.l.b16 %v504
    %v1647 = vunpack.c.h.b16 %v504
    %v1648 = vunpack.c.l.b16 %v505
    %v1649 = vunpack.c.h.b16 %v505
    %v1650 = vunpack.c.l.b16 %v506
    %v1651 = vunpack.c.h.b16 %v506
    %v1652 = vunpack.c.l.b16 %v507
    %v1653 = vunpack.c.h.b16 %v507
    %v1654 = vunpack.c.l.b16 %v508
    %v1655 = vunpack.c.h.b16 %v508
    %v1656 = vunpack.c.l.b16 %v509
    %v1657 = vunpack.c.h.b16 %v509
    %v1658 = vunpack.c.l.b16 %v510
    %v1659 = vunpack.c.h.b16 %v510
    %v1660 = vunpack.c.l.b16 %v511
    %v1661 = vunpack.c.h.b16 %v511
    %v1662 = vunpack.c.l.b16 %v512
    %v1663 = vunpack.c.h.b16 %v512
    %v1664 = vunpack.c.l.b16 %v513
    %v1665 = vunpack.c.h.b16 %v513
    %v1666 = vunpack.c.l.b16 %v514
    %v1667 = vunpack.c.h.b16 %v514
    %v1668 = vunpack.c.l.b16 %v515
    %v1669 = vunpack.c.h.b16 %v515
    %v1670 = vunpack.c.l.b16 %v516
    %v1671 = vunpack.c.h.b16 %v516
    %v1672 = vunpack.c.l.b16 %v517
    %v1673 = vunpack.c.h.b16 %v517
    %v1674 = vunpack.c.l.b16 %v518
    %v1675 = vunpack.c.h.b16 %v518
    %v1676 = vunpack.c.l.b16 %v519
    %v1677 = vunpack.c.h.b16 %v519
    %v1678 = vunpack.c.l.b16 %v520
    %v1679 = vunpack.c.h.b16 %v520
    %v1680 = vunpack.c.l.b16 %v521
    %v1681 = vunpack.c.h.b16 %v521
    %v1682 = vunpack.c.l.b16 %v522
    %v1683 = vunpack.c.h.b16 %v522
    %v1684 = vunpack.c.l.b16 %v523
    %v1685 = vunpack.c.h.b16 %v523
    %v1686 = vunpack.c.l.b16 %v524
    %v1687 = vunpack.c.h.b16 %v524
    %v1688 = vunpack.c.l.b16 %v525
    %v1689 = vunpack.c.h.b16 %v525
    %v1690 = vunpack.c.l.b16 %v526
    %v1691 = vunpack.c.h.b16 %v526
    %v1692 = vunpack.c.l.b16 %v527
    %v1693 = vunpack.c.h.b16 %v527
    %v1694 = vunpack.c.l.b16 %v528
    %v1695 = vunpack.c.h.b16 %v528
    %v1696 = vunpack.c.l.b16 %v529
    %v1697 = vunpack.c.h.b16 %v529
    %v1698 = vunpack.c.l.b16 %v530
    %v1699 = vunpack.c.h.b16 %v530
    %v1700 = vunpack.c.l.b16 %v531
    %v1701 = vunpack.c.h.b16 %v531
    %v1702 = vunpack.c.l.b16 %v532
    %v1703 = vunpack.c.h.b16 %v532
    %v1704 = vunpack.c.l.b16 %v533
    %v1705 = vunpack.c.h.b16 %v533
    %v1706 = vunpack.c.l.b16 %v534
    %v1707 = vunpack.c.h.b16 %v534
    %v1708 = vunpack.c.l.b16 %v535
    %v1709 = vunpack.c.h.b16 %v535
    %v1710 = vunpack.c.l.b16 %v536
    %v1711 = vunpack.c.h.b16 %v536
    %v1712 = vunpack.c.l.b16 %v537
    %v1713 = vunpack.c.h.b16 %v537
    %v1714 = vunpack.c.l.b16 %v538
    %v1715 = vunpack.c.h.b16 %v538
    %v1716 = vunpack.c.l.b16 %v539
    %v1717 = vunpack.c.h.b16 %v539
    %v1718 = vunpack.c.l.b16 %v540
    %v1719 = vunpack.c.h.b16 %v540
    %v1720 = vunpack.c.l.b16 %v541
    %v1721 = vunpack.c.h.b16 %v541
    %v1722 = vunpack.c.l.b16 %v542
    %v1723 = vunpack.c.h.b16 %v542
    %v1724 = vunpack.c.l.b16 %v543
    %v1725 = vunpack.c.h.b16 %v543
    %v1726 = vunpack.c.l.b16 %v544
    %v1727 = vunpack.c.h.b16 %v544
    %v1728 = vunpack.c.l.b16 %v545
    %v1729 = vunpack.c.h.b16 %v545
    %v1730 = vunpack.c.l.b16 %v546
    %v1731 = vunpack.c.h.b16 %v546
    %v1732 = vunpack.c.l.b16 %v547
    %v1733 = vunpack.c.h.b16 %v547
    %v1734 = vunpack.c.l.b16 %v548
    %v1735 = vunpack.c.h.b16 %v548
    %v1736 = vunpack.c.l.b16 %v549
    %v1737 = vunpack.c.h.b16 %v549
    %v1738 = vunpack.c.l.b16 %v550
    %v1739 = vunpack.c.h.b16 %v550
    %v1740 = vunpack.c.l.b16 %v551
    %v1741 = vunpack.c.h.b16 %v551
    %v1742 = vunpack.c.l.b16 %v552
    %v1743 = vunpack.c.h.b16 %v552
    %v1744 = vunpack.c.l.b16 %v553
    %v1745 = vunpack.c.h.b16 %v553
    %v1746 = vunpack.c.l.b16 %v554
    %v1747 = vunpack.c.h.b16 %v554
    %v1748 = vunpack.c.l.b16 %v555
    %v1749 = vunpack.c.h.b16 %v555
    %v1750 = vpack.c.b16 %v974, %v966
    %v1751 = vpack.c.b16 %v975, %v967
    %v1752 = vpack.c.b16 %v976, %v968
    %v1753 = vpack.c.b16 %v977, %v969
    %v1754 = vpack.c.b16 %v978, %v970
    %v1755 = vpack.c.b16 %v979, %v971
    %v1756 = vpack.c.b16 %v980, %v972
    %v1757 = vpack.c.b16 %v981, %v973
    %v1758 = vpack.c.b16 %v990, %v982
    %v1759 = vpack.c.b16 %v991, %v983
    %v1760 = vpack.c.b16 %v992, %v984
    %v1761 = vpack.c.b16 %v993, %v985
    %v1762 = vpack.c.b16 %v994, %v986
    %v1763 = vpack.c.b16 %v995, %v987
    %v1764 = vpack.c.b16 %v996, %v988
    %v1765 = vpack.c.b16 %v997, %v989
    %v1766 = vpack.c.b16 %v1006, %v998
    %v1767 = vpack.c.b16 %v1007, %v999
    %v1768 = vpack.c.b16 %v1008, %v1000
    %v1769 = vpack.c.b16 %v1009, %v1001
    %v1770 = vpack.c.b16 %v1010, %v1002
    %v1771 = vpack.c.b16 %v1011, %v1003
    %v1772 = vpack.c.b16 %v1012, %v1004
    %v1773 = vpack.c.b16 %v1013, %v1005
    %v1774 = vpack.c.b16 %v1022, %v1014
    %v1775 = vpack.c.b16 %v1023, %v1015
    %v1776 = vpack.c.b16 %v1024, %v1016
    %v1777 = vpack.c.b16 %v1025, %v1017
    %v1778 = vpack.c.b16 %v1026, %v1018
    %v1779 = vpack.c.b16 %v1027, %v1019
    %v1780 = vpack.c.b16 %v1028, %v1020
    %v1781 = vpack.c.b16 %v1029, %v1021
    %v1782 = vpack.c.b16 %v1038, %v1030
    %v1783 = vpack.c.b16 %v1039, %v1031
    %v1784 = vpack.c.b16 %v1040, %v1032
    %v1785 = vpack.c.b16 %v1041, %v1033
    %v1786 = vpack.c.b16 %v1042, %v1034
    %v1787 = vpack.c.b16 %v1043, %v1035
    %v1788 = vpack.c.b16 %v1044, %v1036
    %v1789 = vpack.c.b16 %v1045, %v1037
    %v1790 = vpack.c.b16 %v1054, %v1046
    %v1791 = vpack.c.b16 %v1055, %v1047
    %v1792 = vpack.c.b16 %v1056, %v1048
    %v1793 = vpack.c.b16 %v1057, %v1049
    %v1794 = vpack.c.b16 %v1058, %v1050
    %v1795 = vpack.c.b16 %v1059, %v1051
    %v1796 = vpack.c.b16 %v1060, %v1052
    %v1797 = vpack.c.b16 %v1061, %v1053
    %v1798 = vpack.c.b16 %v1070, %v1062
    %v1799 = vpack.c.b16 %v1071, %v1063
    %v1800 = vpack.c.b16 %v1072, %v1064
    %v1801 = vpack.c.b16 %v1073, %v1065
    %v1802 = vpack.c.b16 %v1074, %v1066
    %v1803 = vpack.c.b16 %v1075, %v1067
    %v1804 = vpack.c.b16 %v1076, %v1068
    %v1805 = vpack.c.b16 %v1077, %v1069
    %v1806 = vpack.c.b16 %v1086, %v1078
    %v1807 = vpack.c.b16 %v1087, %v1079
    %v1808 = vpack.c.b16 %v1088, %v1080
    %v1809 = vpack.c.b16 %v1089, %v1081
    %v1810 = vpack.c.b16 %v1090, %v1082
    %v1811 = vpack.c.b16 %v1091, %v1083
    %v1812 = vpack.c.b16 %v1092, %v1084
    %v1813 = vpack.c.b16 %v1093, %v1085
    %v1814 = vpack.c.b16 %v1102, %v1094
    %v1815 = vpack.c.b16 %v1103, %v1095
    %v1816 = vpack.c.b16 %v1104, %v1096
    %v1817 = vpack.c.b16 %v1105, %v1097
    %v1818 = vpack.c.b16 %v1106, %v1098
    %v1819 = vpack.c.b16 %v1107, %v1099
    %v1820 = vpack.c.b16 %v1108, %v1100
    %v1821 = vpack.c.b16 %v1109, %v1101
    %v1822 = vpack.c.b16 %v1118, %v1110
    %v1823 = vpack.c.b16 %v1119, %v1111
    %v1824 = vpack.c.b16 %v1120, %v1112
    %v1825 = vpack.c.b16 %v1121, %v1113
    %v1826 = vpack.c.b16 %v1122, %v1114
    %v1827 = vpack.c.b16 %v1123, %v1115
    %v1828 = vpack.c.b16 %v1124, %v1116
    %v1829 = vpack.c.b16 %v1125, %v1117
    %v1830 = vpack.c.b16 %v1134, %v1126
    %v1831 = vpack.c.b16 %v1135, %v1127
    %v1832 = vpack.c.b16 %v1136, %v1128
    %v1833 = vpack.c.b16 %v1137, %v1129
    %v1834 = vpack.c.b16 %v1138, %v1130
    %v1835 = vpack.c.b16 %v1139, %v1131
    %v1836 = vpack.c.b16 %v1140, %v1132
    %v1837 = vpack.c.b16 %v1141, %v1133
    %v1838 = vpack.c.b16 %v1150, %v1142
    %v1839 = vpack.c.b16 %v1151, %v1143
    %v1840 = vpack.c.b16 %v1152, %v1144
    %v1841 = vpack.c.b16 %v1153, %v1145
    %v1842 = vpack.c.b16 %v1154, %v1146
    %v1843 = vpack.c.b16 %v1155, %v1147
    %v1844 = vpack.c.b16 %v1156, %v1148
    %v1845 = vpack.c.b16 %v1157, %v1149
    %v1846 = vpack.c.b16 %v1166, %v1158
    %v1847 = vpack.c.b16 %v1167, %v1159
    %v1848 = vpack.c.b16 %v1168, %v1160
    %v1849 = vpack.c.b16 %v1169, %v1161
    %v1850 = vpack.c.b16 %v1170, %v1162
    %v1851 = vpack.c.b16 %v1171, %v1163
    %v1852 = vpack.c.b16 %v1172, %v1164
    %v1853 = vpack.c.b16 %v1173, %v1165
    %v1854 = vpack.c.b16 %v1182, %v1174
    %v1855 = vpack.c.b16 %v1183, %v1175
    %v1856 = vpack.c.b16 %v1184, %v1176
    %v1857 = vpack.c.b16 %v1185, %v1177
    %v1858 = vpack.c.b16 %v1186, %v1178
    %v1859 = vpack.c.b16 %v1187, %v1179
    %v1860 = vpack.c.b16 %v1188, %v1180
    %v1861 = vpack.c.b16 %v1189, %v1181
    %v1862 = vpack.c.b16 %v1198, %v1190
    %v1863 = vpack.c.b16 %v1199, %v1191
    %v1864 = vpack.c.b16 %v1200, %v1192
    %v1865 = vpack.c.b16 %v1201, %v1193
    %v1866 = vpack.c.b16 %v1202, %v1194
    %v1867 = vpack.c.b16 %v1203, %v1195
    %v1868 = vpack.c.b16 %v1204, %v1196
    %v1869 = vpack.c.b16 %v1205, %v1197
    %v1870 = vpack.c.b16 %v1214, %v1206
    %v1871 = vpack.c.b16 %v1215, %v1207
    %v1872 = vpack.c.b16 %v1216, %v1208
    %v1873 = vpack.c.b16 %v1217, %v1209
    %v1874 = vpack.c.b16 %v1218, %v1210
    %v1875 = vpack.c.b16 %v1219, %v1211
    %v1876 = vpack.c.b16 %v1220, %v1212
    %v1877 = vpack.c.b16 %v1221, %v1213
    %v1878 = vpack.c.b16 %v1230, %v1222
    %v1879 = vpack.c.b16 %v1231, %v1223
    %v1880 = vpack.c.b16 %v1232, %v1224
    %v1881 = vpack.c.b16 %v1233, %v1225
    %v1882 = vpack.c.b16 %v1234, %v1226
    %v1883 = vpack.c.b16 %v1235, %v1227
    %v1884 = vpack.c.b16 %v1236, %v1228
    %v1885 = vpack.c.b16 %v1237, %v1229
    %v1886 = vpack.c.b16 %v1246, %v1238
    %v1887 = vpack.c.b16 %v1247, %v1239
    %v1888 = vpack.c.b16 %v1248, %v1240
    %v1889 = vpack.c.b16 %v1249, %v1241
    %v1890 = vpack.c.b16 %v1250, %v1242
    %v1891 = vpack.c.b16 %v1251, %v1243
    %v1892 = vpack.c.b16 %v1252, %v1244
    %v1893 = vpack.c.b16 %v1253, %v1245
    %v1894 = vpack.c.b16 %v1262, %v1254
    %v1895 = vpack.c.b16 %v1263, %v1255
    %v1896 = vpack.c.b16 %v1264, %v1256
    %v1897 = vpack.c.b16 %v1265, %v1257
    %v1898 = vpack.c.b16 %v1266, %v1258
    %v1899 = vpack.c.b16 %v1267, %v1259
    %v1900 = vpack.c.b16 %v1268, %v1260
    %v1901 = vpack.c.b16 %v1269, %v1261
    %v1902 = vpack.c.b16 %v1278, %v1270
    %v1903 = vpack.c.b16 %v1279, %v1271
    %v1904 = vpack.c.b16 %v1280, %v1272
    %v1905 = vpack.c.b16 %v1281, %v1273
    %v1906 = vpack.c.b16 %v1282, %v1274
    %v1907 = vpack.c.b16 %v1283, %v1275
    %v1908 = vpack.c.b16 %v1284, %v1276
    %v1909 = vpack.c.b16 %v1285, %v1277
    %v1910 = vpack.c.b16 %v1294, %v1286
    %v1911 = vpack.c.b16 %v1295, %v1287
    %v1912 = vpack.c.b16 %v1296, %v1288
    %v1913 = vpack.c.b16 %v1297, %v1289
    %v1914 = vpack.c.b16 %v1298, %v1290
    %v1915 = vpack.c.b16 %v1299, %v1291
    %v1916 = vpack.c.b16 %v1300, %v1292
    %v1917 = vpack.c.b16 %v1301, %v1293
    %v1918 = vpack.c.b16 %v1310, %v1302
    %v1919 = vpack.c.b16 %v1311, %v1303
    %v1920 = vpack.c.b16 %v1312, %v1304
    %v1921 = vpack.c.b16 %v1313, %v1305
    %v1922 = vpack.c.b16 %v1314, %v1306
    %v1923 = vpack.c.b16 %v1315, %v1307
    %v1924 = vpack.c.b16 %v1316, %v1308
    %v1925 = vpack.c.b16 %v1317, %v1309
    %v1926 = vpack.c.b16 %v1326, %v1318
    %v1927 = vpack.c.b16 %v1327, %v1319
    %v1928 = vpack.c.b16 %v1328, %v1320
    %v1929 = vpack.c.b16 %v1329, %v1321
    %v1930 = vpack.c.b16 %v1330, %v1322
    %v1931 = vpack.c.b16 %v1331, %v1323
    %v1932 = vpack.c.b16 %v1332, %v1324
    %v1933 = vpack.c.b16 %v1333, %v1325
    %v1934 = vpack.c.b16 %v1342, %v1334
    %v1935 = vpack.c.b16 %v1343, %v1335
    %v1936 = vpack.c.b16 %v1344, %v1336
    %v1937 = vpack.c.b16 %v1345, %v1337
    %v1938 = vpack.c.b16 %v1346, %v1338
    %v1939 = vpack.c.b16 %v1347, %v1339
    %v1940 = vpack.c.b16 %v1348, %v1340
    %v1941 = vpack.c.b16 %v1349, %v1341
    %v1942 = vpack.c.b16 %v1358, %v1350
    %v1943 = vpack.c.b16 %v1359, %v1351
    %v1944 = vpack.c.b16 %v1360, %v1352
    %v1945 = vpack.c.b16 %v1361, %v1353
    %v1946 = vpack.c.b16 %v1362, %v1354
    %v1947 = vpack.c.b16 %v1363, %v1355
    %v1948 = vpack.c.b16 %v1364, %v1356
    %v1949 = vpack.c.b16 %v1365, %v1357
    %v1950 = vpack.c.b16 %v1374, %v1366
    %v1951 = vpack.c.b16 %v1375, %v1367
    %v1952 = vpack.c.b16 %v1376, %v1368
    %v1953 = vpack.c.b16 %v1377, %v1369
    %v1954 = vpack.c.b16 %v1378, %v1370
    %v1955 = vpack.c.b16 %v1379, %v1371
    %v1956 = vpack.c.b16 %v1380, %v1372
    %v1957 = vpack.c.b16 %v1381, %v1373
    %v1958 = vpack.c.b16 %v1390, %v1382
    %v1959 = vpack.c.b16 %v1391, %v1383
    %v1960 = vpack.c.b16 %v1392, %v1384
    %v1961 = vpack.c.b16 %v1393, %v1385
    %v1962 = vpack.c.b16 %v1394, %v1386
    %v1963 = vpack.c.b16 %v1395, %v1387
    %v1964 = vpack.c.b16 %v1396, %v1388
    %v1965 = vpack.c.b16 %v1397, %v1389
    %v1966 = vpack.c.b16 %v1406, %v1398
    %v1967 = vpack.c.b16 %v1407, %v1399
    %v1968 = vpack.c.b16 %v1408, %v1400
    %v1969 = vpack.c.b16 %v1409, %v1401
    %v1970 = vpack.c.b16 %v1410, %v1402
    %v1971 = vpack.c.b16 %v1411, %v1403
    %v1972 = vpack.c.b16 %v1412, %v1404
    %v1973 = vpack.c.b16 %v1413, %v1405
    %v1974 = vpack.c.b16 %v1422, %v1414
    %v1975 = vpack.c.b16 %v1423, %v1415
    %v1976 = vpack.c.b16 %v1424, %v1416
    %v1977 = vpack.c.b16 %v1425, %v1417
    %v1978 = vpack.c.b16 %v1426, %v1418
    %v1979 = vpack.c.b16 %v1427, %v1419
    %v1980 = vpack.c.b16 %v1428, %v1420
    %v1981 = vpack.c.b16 %v1429, %v1421
    %v1982 = vpack.c.b16 %v1438, %v1430
    %v1983 = vpack.c.b16 %v1439, %v1431
    %v1984 = vpack.c.b16 %v1440, %v1432
    %v1985 = vpack.c.b16 %v1441, %v1433
    %v1986 = vpack.c.b16 %v1442, %v1434
    %v1987 = vpack.c.b16 %v1443, %v1435
    %v1988 = vpack.c.b16 %v1444, %v1436
    %v1989 = vpack.c.b16 %v1445, %v1437
    %v1990 = vpack.c.b16 %v1454, %v1446
    %v1991 = vpack.c.b16 %v1455, %v1447
    %v1992 = vpack.c.b16 %v1456, %v1448
    %v1993 = vpack.c.b16 %v1457, %v1449
    %v1994 = vpack.c.b16 %v1458, %v1450
    %v1995 = vpack.c.b16 %v1459, %v1451
    %v1996 = vpack.c.b16 %v1460, %v1452
    %v1997 = vpack.c.b16 %v1461, %v1453
    %v1998 = vpack.c.b16 %v1470, %v1462
    %v1999 = vpack.c.b16 %v1471, %v1463
    %v2000 = vpack.c.b16 %v1472, %v1464
    %v2001 = vpack.c.b16 %v1473, %v1465
    %v2002 = vpack.c.b16 %v1474, %v1466
    %v2003 = vpack.c.b16 %v1475, %v1467
    %v2004 = vpack.c.b16 %v1476, %v1468
    %v2005 = vpack.c.b16 %v1477, %v1469
    %v2006 = vpack.c.b16 %v1486, %v1478
    %v2007 = vpack.c.b16 %v1487, %v1479
    %v2008 = vpack.c.b16 %v1488, %v1480
    %v2009 = vpack.c.b16 %v1489, %v1481
    %v2010 = vpack.c.b16 %v1490, %v1482
    %v2011 = vpack.c.b16 %v1491, %v1483
    %v2012 = vpack.c.b16 %v1492, %v1484
    %v2013 = vpack.c.b16 %v1493, %v1485
    %v2014 = vpack.c.b16 %v1502, %v1494
    %v2015 = vpack.c.b16 %v1503, %v1495
    %v2016 = vpack.c.b16 %v1504, %v1496
    %v2017 = vpack.c.b16 %v1505, %v1497
    %v2018 = vpack.c.b16 %v1506, %v1498
    %v2019 = vpack.c.b16 %v1507, %v1499
    %v2020 = vpack.c.b16 %v1508, %v1500
    %v2021 = vpack.c.b16 %v1509, %v1501
    %v2022 = vpack.c.b16 %v1518, %v1510
    %v2023 = vpack.c.b16 %v1519, %v1511
    %v2024 = vpack.c.b16 %v1520, %v1512
    %v2025 = vpack.c.b16 %v1521, %v1513
    %v2026 = vpack.c.b16 %v1522, %v1514
    %v2027 = vpack.c.b16 %v1523, %v1515
    %v2028 = vpack.c.b16 %v1524, %v1516
    %v2029 = vpack.c.b16 %v1525, %v1517
    %v2030 = vpack.c.b16 %v1534, %v1526
    %v2031 = vpack.c.b16 %v1535, %v1527
    %v2032 = vpack.c.b16 %v1536, %v1528
    %v2033 = vpack.c.b16 %v1537, %v1529
    %v2034 = vpack.c.b16 %v1538, %v1530
    %v2035 = vpack.c.b16 %v1539, %v1531
    %v2036 = vpack.c.b16 %v1540, %v1532
    %v2037 = vpack.c.b16 %v1541, %v1533
    %v2038 = vpack.c.b16 %v1550, %v1542
    %v2039 = vpack.c.b16 %v1551, %v1543
    %v2040 = vpack.c.b16 %v1552, %v1544
    %v2041 = vpack.c.b16 %v1553, %v1545
    %v2042 = vpack.c.b16 %v1554, %v1546
    %v2043 = vpack.c.b16 %v1555, %v1547
    %v2044 = vpack.c.b16 %v1556, %v1548
    %v2045 = vpack.c.b16 %v1557, %v1549
    %v2046 = vpack.c.b16 %v1566, %v1558
    %v2047 = vpack.c.b16 %v1567, %v1559
    %v2048 = vpack.c.b16 %v1568, %v1560
    %v2049 = vpack.c.b16 %v1569, %v1561
    %v2050 = vpack.c.b16 %v1570, %v1562
    %v2051 = vpack.c.b16 %v1571, %v1563
    %v2052 = vpack.c.b16 %v1572, %v1564
    %v2053 = vpack.c.b16 %v1573, %v1565
    %v2054 = vpack.c.b16 %v1582, %v1574
    %v2055 = vpack.c.b16 %v1583, %v1575
    %v2056 = vpack.c.b16 %v1584, %v1576
    %v2057 = vpack.c.b16 %v1585, %v1577
    %v2058 = vpack.c.b16 %v1586, %v1578
    %v2059 = vpack.c.b16 %v1587, %v1579
    %v2060 = vpack.c.b16 %v1588, %v1580
    %v2061 = vpack.c.b16 %v1589, %v1581
    %v2062 = vpack.c.b16 %v1598, %v1590
    %v2063 = vpack.c.b16 %v1599, %v1591
    %v2064 = vpack.c.b16 %v1600, %v1592
    %v2065 = vpack.c.b16 %v1601, %v1593
    %v2066 = vpack.c.b16 %v1602, %v1594
    %v2067 = vpack.c.b16 %v1603, %v1595
    %v2068 = vpack.c.b16 %v1604, %v1596
    %v2069 = vpack.c.b16 %v1605, %v1597
    %v2070 = vpack.c.b16 %v1614, %v1606
    %v2071 = vpack.c.b16 %v1615, %v1607
    %v2072 = vpack.c.b16 %v1616, %v1608
    %v2073 = vpack.c.b16 %v1617, %v1609
    %v2074 = vpack.c.b16 %v1618, %v1610
    %v2075 = vpack.c.b16 %v1619, %v1611
    %v2076 = vpack.c.b16 %v1620, %v1612
    %v2077 = vpack.c.b16 %v1621, %v1613
    %v2078 = vpack.c.b16 %v1630, %v1622
    %v2079 = vpack.c.b16 %v1631, %v1623
    %v2080 = vpack.c.b16 %v1632, %v1624
    %v2081 = vpack.c.b16 %v1633, %v1625
    %v2082 = vpack.c.b16 %v1634, %v1626
    %v2083 = vpack.c.b16 %v1635, %v1627
    %v2084 = vpack.c.b16 %v1636, %v1628
    %v2085 = vpack.c.b16 %v1637, %v1629
    %v2086 = vpack.c.b16 %v1646, %v1638
    %v2087 = vpack.c.b16 %v1647, %v1639
    %v2088 = vpack.c.b16 %v1648, %v1640
    %v2089 = vpack.c.b16 %v1649, %v1641
    %v2090 = vpack.c.b16 %v1650, %v1642
    %v2091 = vpack.c.b16 %v1651, %v1643
    %v2092 = vpack.c.b16 %v1652, %v1644
    %v2093 = vpack.c.b16 %v1653, %v1645
    %v2094 = vpack.c.b16 %v1662, %v1654
    %v2095 = vpack.c.b16 %v1663, %v1655
    %v2096 = vpack.c.b16 %v1664, %v1656
    %v2097 = vpack.c.b16 %v1665, %v1657
    %v2098 = vpack.c.b16 %v1666, %v1658
    %v2099 = vpack.c.b16 %v1667, %v1659
    %v2100 = vpack.c.b16 %v1668, %v1660
    %v2101 = vpack.c.b16 %v1669, %v1661
    %v2102 = vpack.c.b16 %v1678, %v1670
    %v2103 = vpack.c.b16 %v1679, %v1671
    %v2104 = vpack.c.b16 %v1680, %v1672
    %v2105 = vpack.c.b16 %v1681, %v1673
    %v2106 = vpack.c.b16 %v1682, %v1674
    %v2107 = vpack.c.b16 %v1683, %v1675
    %v2108 = vpack.c.b16 %v1684, %v1676
    %v2109 = vpack.c.b16 %v1685, %v1677
    %v2110 = vpack.c.b16 %v1694, %v1686
    %v2111 = vpack.c.b16 %v1695, %v1687
    %v2112 = vpack.c.b16 %v1696, %v1688
    %v2113 = vpack.c.b16 %v1697, %v1689
    %v2114 = vpack.c.b16 %v1698, %v1690
    %v2115 = vpack.c.b16 %v1699, %v1691
    %v2116 = vpack.c.b16 %v1700, %v1692
    %v2117 = vpack.c.b16 %v1701, %v1693
    %v2118 = vpack.c.b16 %v1710, %v1702
    %v2119 = vpack.c.b16 %v1711, %v1703
    %v2120 = vpack.c.b16 %v1712, %v1704
    %v2121 = vpack.c.b16 %v1713, %v1705
    %v2122 = vpack.c.b16 %v1714, %v1706
    %v2123 = vpack.c.b16 %v1715, %v1707
    %v2124 = vpack.c.b16 %v1716, %v1708
    %v2125 = vpack.c.b16 %v1717, %v1709
    %v2126 = vpack.c.b16 %v1726, %v1718
    %v2127 = vpack.c.b16 %v1727, %v1719
    %v2128 = vpack.c.b16 %v1728, %v1720
    %v2129 = vpack.c.b16 %v1729, %v1721
    %v2130 = vpack.c.b16 %v1730, %v1722
    %v2131 = vpack.c.b16 %v1731, %v1723
    %v2132 = vpack.c.b16 %v1732, %v1724
    %v2133 = vpack.c.b16 %v1733, %v1725
    %v2134 = vpack.c.b16 %v1742, %v1734
    %v2135 = vpack.c.b16 %v1743, %v1735
    %v2136 = vpack.c.b16 %v1744, %v1736
    %v2137 = vpack.c.b16 %v1745, %v1737
    %v2138 = vpack.c.b16 %v1746, %v1738
    %v2139 = vpack.c.b16 %v1747, %v1739
    %v2140 = vpack.c.b16 %v1748, %v1740
    %v2141 = vpack.c.b16 %v1749, %v1741
    %vm2534 = vcmask 130048
    %v2536 = vsel %vm2534, %v163, 0
    %2538 = vmatpush.bf16.msra.mxu0 %v1806
    %2539 = vmatpush.bf16.msra.mxu0 %v1798
    %2540 = vmatpush.bf16.msra.mxu0 %v1790
    %2541 = vmatpush.bf16.msra.mxu0 %v1782
    %2542 = vmatpush.bf16.msra.mxu0 %v1774
    %2543 = vmatpush.bf16.msra.mxu0 %v1766
    %2544 = vmatpush.bf16.msra.mxu0 %v1758
    %2545 = vmatpush.bf16.msra.mxu0 %v1750
    %2546 = vmatmul.bf16.gmra.mxu0 %v157
    %v2547 = vpop.f32.mrf.mxu0
    %v2548 = vadd.f32 %v558, %v2547
    %v2549 = vpop.f32.mrf.mxu0
    %2550 = vdwg.mxu0
    %2551 = vmatpush.bf16.msra.mxu0 %v1870
    %2552 = vmatpush.bf16.msra.mxu0 %v1862
    %2553 = vmatpush.bf16.msra.mxu0 %v1854
    %2554 = vmatpush.bf16.msra.mxu0 %v1846
    %2555 = vmatpush.bf16.msra.mxu0 %v1838
    %2556 = vmatpush.bf16.msra.mxu0 %v1830
    %2557 = vmatpush.bf16.msra.mxu0 %v1822
    %2558 = vmatpush.bf16.msra.mxu0 %v1814
    %2559 = vmatmul.bf16.gmra.mxu0 %v158
    %v2560 = vpop.f32.mrf.mxu0
    %v2561 = vadd.f32 %v2548, %v2560
    %v2562 = vpop.f32.mrf.mxu0
    %2563 = vdwg.mxu0
    %2564 = vmatpush.bf16.msra.mxu0 %v1934
    %2565 = vmatpush.bf16.msra.mxu0 %v1926
    %2566 = vmatpush.bf16.msra.mxu0 %v1918
    %2567 = vmatpush.bf16.msra.mxu0 %v1910
    %2568 = vmatpush.bf16.msra.mxu0 %v1902
    %2569 = vmatpush.bf16.msra.mxu0 %v1894
    %2570 = vmatpush.bf16.msra.mxu0 %v1886
    %2571 = vmatpush.bf16.msra.mxu0 %v1878
    %2572 = vmatmul.bf16.gmra.mxu0 %v159
    %v2573 = vpop.f32.mrf.mxu0
    %v2574 = vadd.f32 %v2561, %v2573
    %v2575 = vpop.f32.mrf.mxu0
    %2576 = vdwg.mxu0
    %2577 = vmatpush.bf16.msra.mxu0 %v1998
    %2578 = vmatpush.bf16.msra.mxu0 %v1990
    %2579 = vmatpush.bf16.msra.mxu0 %v1982
    %2580 = vmatpush.bf16.msra.mxu0 %v1974
    %2581 = vmatpush.bf16.msra.mxu0 %v1966
    %2582 = vmatpush.bf16.msra.mxu0 %v1958
    %2583 = vmatpush.bf16.msra.mxu0 %v1950
    %2584 = vmatpush.bf16.msra.mxu0 %v1942
    %2585 = vmatmul.bf16.gmra.mxu0 %v160
    %v2586 = vpop.f32.mrf.mxu0
    %v2587 = vadd.f32 %v2574, %v2586
    %v2588 = vpop.f32.mrf.mxu0
    %2589 = vdwg.mxu0
    %2590 = vmatpush.bf16.msra.mxu0 %v2062
    %2591 = vmatpush.bf16.msra.mxu0 %v2054
    %2592 = vmatpush.bf16.msra.mxu0 %v2046
    %2593 = vmatpush.bf16.msra.mxu0 %v2038
    %2594 = vmatpush.bf16.msra.mxu0 %v2030
    %2595 = vmatpush.bf16.msra.mxu0 %v2022
    %2596 = vmatpush.bf16.msra.mxu0 %v2014
    %2597 = vmatpush.bf16.msra.mxu0 %v2006
    %2598 = vmatmul.bf16.gmra.mxu0 %v161
    %v2599 = vpop.f32.mrf.mxu0
    %v2600 = vadd.f32 %v2587, %v2599
    %v2601 = vpop.f32.mrf.mxu0
    %2602 = vdwg.mxu0
    %2603 = vmatpush.bf16.msra.mxu0 %v2126
    %2604 = vmatpush.bf16.msra.mxu0 %v2118
    %2605 = vmatpush.bf16.msra.mxu0 %v2110
    %2606 = vmatpush.bf16.msra.mxu0 %v2102
    %2607 = vmatpush.bf16.msra.mxu0 %v2094
    %2608 = vmatpush.bf16.msra.mxu0 %v2086
    %2609 = vmatpush.bf16.msra.mxu0 %v2078
    %2610 = vmatpush.bf16.msra.mxu0 %v2070
    %2611 = vmatmul.bf16.gmra.mxu0 %v162
    %v2612 = vpop.f32.mrf.mxu0
    %v2613 = vadd.f32 %v2600, %v2612
    %v2614 = vpop.f32.mrf.mxu0
    %2615 = vdwg.mxu0
    %2616 = vmatpush.bf16.msra.mxu0 0
    %2617 = vmatpush.bf16.msra.mxu0 0
    %2618 = vmatpush.bf16.msra.mxu0 0
    %2619 = vmatpush.bf16.msra.mxu0 0
    %2620 = vmatpush.bf16.msra.mxu0 0
    %2621 = vmatpush.bf16.msra.mxu0 0
    %2622 = vmatpush.bf16.msra.mxu0 0
    %2623 = vmatpush.bf16.msra.mxu0 %v2134
    %2624 = vmatmul.bf16.gmra.mxu0 %v2536
    %v2625 = vpop.f32.mrf.mxu0
    %v2626 = vadd.f32 %v2613, %v2625
    %v2627 = vpop.f32.mrf.mxu0
    %2628 = vdwg.mxu0
    %2629 = vmatpush.bf16.msra.mxu0 %v1807
    %2630 = vmatpush.bf16.msra.mxu0 %v1799
    %2631 = vmatpush.bf16.msra.mxu0 %v1791
    %2632 = vmatpush.bf16.msra.mxu0 %v1783
    %2633 = vmatpush.bf16.msra.mxu0 %v1775
    %2634 = vmatpush.bf16.msra.mxu0 %v1767
    %2635 = vmatpush.bf16.msra.mxu0 %v1759
    %2636 = vmatpush.bf16.msra.mxu0 %v1751
    %2637 = vmatmul.bf16.gmra.mxu0 %v157
    %v2638 = vpop.f32.mrf.mxu0
    %v2639 = vadd.f32 %v559, %v2638
    %v2640 = vpop.f32.mrf.mxu0
    %2641 = vdwg.mxu0
    %2642 = vmatpush.bf16.msra.mxu0 %v1871
    %2643 = vmatpush.bf16.msra.mxu0 %v1863
    %2644 = vmatpush.bf16.msra.mxu0 %v1855
    %2645 = vmatpush.bf16.msra.mxu0 %v1847
    %2646 = vmatpush.bf16.msra.mxu0 %v1839
    %2647 = vmatpush.bf16.msra.mxu0 %v1831
    %2648 = vmatpush.bf16.msra.mxu0 %v1823
    %2649 = vmatpush.bf16.msra.mxu0 %v1815
    %2650 = vmatmul.bf16.gmra.mxu0 %v158
    %v2651 = vpop.f32.mrf.mxu0
    %v2652 = vadd.f32 %v2639, %v2651
    %v2653 = vpop.f32.mrf.mxu0
    %2654 = vdwg.mxu0
    %2655 = vmatpush.bf16.msra.mxu0 %v1935
    %2656 = vmatpush.bf16.msra.mxu0 %v1927
    %2657 = vmatpush.bf16.msra.mxu0 %v1919
    %2658 = vmatpush.bf16.msra.mxu0 %v1911
    %2659 = vmatpush.bf16.msra.mxu0 %v1903
    %2660 = vmatpush.bf16.msra.mxu0 %v1895
    %2661 = vmatpush.bf16.msra.mxu0 %v1887
    %2662 = vmatpush.bf16.msra.mxu0 %v1879
    %2663 = vmatmul.bf16.gmra.mxu0 %v159
    %v2664 = vpop.f32.mrf.mxu0
    %v2665 = vadd.f32 %v2652, %v2664
    %v2666 = vpop.f32.mrf.mxu0
    %2667 = vdwg.mxu0
    %2668 = vmatpush.bf16.msra.mxu0 %v1999
    %2669 = vmatpush.bf16.msra.mxu0 %v1991
    %2670 = vmatpush.bf16.msra.mxu0 %v1983
    %2671 = vmatpush.bf16.msra.mxu0 %v1975
    %2672 = vmatpush.bf16.msra.mxu0 %v1967
    %2673 = vmatpush.bf16.msra.mxu0 %v1959
    %2674 = vmatpush.bf16.msra.mxu0 %v1951
    %2675 = vmatpush.bf16.msra.mxu0 %v1943
    %2676 = vmatmul.bf16.gmra.mxu0 %v160
    %v2677 = vpop.f32.mrf.mxu0
    %v2678 = vadd.f32 %v2665, %v2677
    %v2679 = vpop.f32.mrf.mxu0
    %2680 = vdwg.mxu0
    %2681 = vmatpush.bf16.msra.mxu0 %v2063
    %2682 = vmatpush.bf16.msra.mxu0 %v2055
    %2683 = vmatpush.bf16.msra.mxu0 %v2047
    %2684 = vmatpush.bf16.msra.mxu0 %v2039
    %2685 = vmatpush.bf16.msra.mxu0 %v2031
    %2686 = vmatpush.bf16.msra.mxu0 %v2023
    %2687 = vmatpush.bf16.msra.mxu0 %v2015
    %2688 = vmatpush.bf16.msra.mxu0 %v2007
    %2689 = vmatmul.bf16.gmra.mxu0 %v161
    %v2690 = vpop.f32.mrf.mxu0
    %v2691 = vadd.f32 %v2678, %v2690
    %v2692 = vpop.f32.mrf.mxu0
    %2693 = vdwg.mxu0
    %2694 = vmatpush.bf16.msra.mxu0 %v2127
    %2695 = vmatpush.bf16.msra.mxu0 %v2119
    %2696 = vmatpush.bf16.msra.mxu0 %v2111
    %2697 = vmatpush.bf16.msra.mxu0 %v2103
    %2698 = vmatpush.bf16.msra.mxu0 %v2095
    %2699 = vmatpush.bf16.msra.mxu0 %v2087
    %2700 = vmatpush.bf16.msra.mxu0 %v2079
    %2701 = vmatpush.bf16.msra.mxu0 %v2071
    %2702 = vmatmul.bf16.gmra.mxu0 %v162
    %v2703 = vpop.f32.mrf.mxu0
    %v2704 = vadd.f32 %v2691, %v2703
    %v2705 = vpop.f32.mrf.mxu0
    %2706 = vdwg.mxu0
    %2707 = vmatpush.bf16.msra.mxu0 0
    %2708 = vmatpush.bf16.msra.mxu0 0
    %2709 = vmatpush.bf16.msra.mxu0 0
    %2710 = vmatpush.bf16.msra.mxu0 0
    %2711 = vmatpush.bf16.msra.mxu0 0
    %2712 = vmatpush.bf16.msra.mxu0 0
    %2713 = vmatpush.bf16.msra.mxu0 0
    %2714 = vmatpush.bf16.msra.mxu0 %v2135
    %2715 = vmatmul.bf16.gmra.mxu0 %v2536
    %v2716 = vpop.f32.mrf.mxu0
    %v2717 = vadd.f32 %v2704, %v2716
    %v2718 = vpop.f32.mrf.mxu0
    %2719 = vdwg.mxu0
    %2720 = vmatpush.bf16.msra.mxu0 %v1808
    %2721 = vmatpush.bf16.msra.mxu0 %v1800
    %2722 = vmatpush.bf16.msra.mxu0 %v1792
    %2723 = vmatpush.bf16.msra.mxu0 %v1784
    %2724 = vmatpush.bf16.msra.mxu0 %v1776
    %2725 = vmatpush.bf16.msra.mxu0 %v1768
    %2726 = vmatpush.bf16.msra.mxu0 %v1760
    %2727 = vmatpush.bf16.msra.mxu0 %v1752
    %2728 = vmatmul.bf16.gmra.mxu0 %v157
    %v2729 = vpop.f32.mrf.mxu0
    %v2730 = vadd.f32 %v560, %v2729
    %v2731 = vpop.f32.mrf.mxu0
    %2732 = vdwg.mxu0
    %2733 = vmatpush.bf16.msra.mxu0 %v1872
    %2734 = vmatpush.bf16.msra.mxu0 %v1864
    %2735 = vmatpush.bf16.msra.mxu0 %v1856
    %2736 = vmatpush.bf16.msra.mxu0 %v1848
    %2737 = vmatpush.bf16.msra.mxu0 %v1840
    %2738 = vmatpush.bf16.msra.mxu0 %v1832
    %2739 = vmatpush.bf16.msra.mxu0 %v1824
    %2740 = vmatpush.bf16.msra.mxu0 %v1816
    %2741 = vmatmul.bf16.gmra.mxu0 %v158
    %v2742 = vpop.f32.mrf.mxu0
    %v2743 = vadd.f32 %v2730, %v2742
    %v2744 = vpop.f32.mrf.mxu0
    %2745 = vdwg.mxu0
    %2746 = vmatpush.bf16.msra.mxu0 %v1936
    %2747 = vmatpush.bf16.msra.mxu0 %v1928
    %2748 = vmatpush.bf16.msra.mxu0 %v1920
    %2749 = vmatpush.bf16.msra.mxu0 %v1912
    %2750 = vmatpush.bf16.msra.mxu0 %v1904
    %2751 = vmatpush.bf16.msra.mxu0 %v1896
    %2752 = vmatpush.bf16.msra.mxu0 %v1888
    %2753 = vmatpush.bf16.msra.mxu0 %v1880
    %2754 = vmatmul.bf16.gmra.mxu0 %v159
    %v2755 = vpop.f32.mrf.mxu0
    %v2756 = vadd.f32 %v2743, %v2755
    %v2757 = vpop.f32.mrf.mxu0
    %2758 = vdwg.mxu0
    %2759 = vmatpush.bf16.msra.mxu0 %v2000
    %2760 = vmatpush.bf16.msra.mxu0 %v1992
    %2761 = vmatpush.bf16.msra.mxu0 %v1984
    %2762 = vmatpush.bf16.msra.mxu0 %v1976
    %2763 = vmatpush.bf16.msra.mxu0 %v1968
    %2764 = vmatpush.bf16.msra.mxu0 %v1960
    %2765 = vmatpush.bf16.msra.mxu0 %v1952
    %2766 = vmatpush.bf16.msra.mxu0 %v1944
    %2767 = vmatmul.bf16.gmra.mxu0 %v160
    %v2768 = vpop.f32.mrf.mxu0
    %v2769 = vadd.f32 %v2756, %v2768
    %v2770 = vpop.f32.mrf.mxu0
    %2771 = vdwg.mxu0
    %2772 = vmatpush.bf16.msra.mxu0 %v2064
    %2773 = vmatpush.bf16.msra.mxu0 %v2056
    %2774 = vmatpush.bf16.msra.mxu0 %v2048
    %2775 = vmatpush.bf16.msra.mxu0 %v2040
    %2776 = vmatpush.bf16.msra.mxu0 %v2032
    %2777 = vmatpush.bf16.msra.mxu0 %v2024
    %2778 = vmatpush.bf16.msra.mxu0 %v2016
    %2779 = vmatpush.bf16.msra.mxu0 %v2008
    %2780 = vmatmul.bf16.gmra.mxu0 %v161
    %v2781 = vpop.f32.mrf.mxu0
    %v2782 = vadd.f32 %v2769, %v2781
    %v2783 = vpop.f32.mrf.mxu0
    %2784 = vdwg.mxu0
    %2785 = vmatpush.bf16.msra.mxu0 %v2128
    %2786 = vmatpush.bf16.msra.mxu0 %v2120
    %2787 = vmatpush.bf16.msra.mxu0 %v2112
    %2788 = vmatpush.bf16.msra.mxu0 %v2104
    %2789 = vmatpush.bf16.msra.mxu0 %v2096
    %2790 = vmatpush.bf16.msra.mxu0 %v2088
    %2791 = vmatpush.bf16.msra.mxu0 %v2080
    %2792 = vmatpush.bf16.msra.mxu0 %v2072
    %2793 = vmatmul.bf16.gmra.mxu0 %v162
    %v2794 = vpop.f32.mrf.mxu0
    %v2795 = vadd.f32 %v2782, %v2794
    %v2796 = vpop.f32.mrf.mxu0
    %2797 = vdwg.mxu0
    %2798 = vmatpush.bf16.msra.mxu0 0
    %2799 = vmatpush.bf16.msra.mxu0 0
    %2800 = vmatpush.bf16.msra.mxu0 0
    %2801 = vmatpush.bf16.msra.mxu0 0
    %2802 = vmatpush.bf16.msra.mxu0 0
    %2803 = vmatpush.bf16.msra.mxu0 0
    %2804 = vmatpush.bf16.msra.mxu0 0
    %2805 = vmatpush.bf16.msra.mxu0 %v2136
    %2806 = vmatmul.bf16.gmra.mxu0 %v2536
    %v2807 = vpop.f32.mrf.mxu0
    %v2808 = vadd.f32 %v2795, %v2807
    %v2809 = vpop.f32.mrf.mxu0
    %2810 = vdwg.mxu0
    %2811 = vmatpush.bf16.msra.mxu0 %v1809
    %2812 = vmatpush.bf16.msra.mxu0 %v1801
    %2813 = vmatpush.bf16.msra.mxu0 %v1793
    %2814 = vmatpush.bf16.msra.mxu0 %v1785
    %2815 = vmatpush.bf16.msra.mxu0 %v1777
    %2816 = vmatpush.bf16.msra.mxu0 %v1769
    %2817 = vmatpush.bf16.msra.mxu0 %v1761
    %2818 = vmatpush.bf16.msra.mxu0 %v1753
    %2819 = vmatmul.bf16.gmra.mxu0 %v157
    %v2820 = vpop.f32.mrf.mxu0
    %v2821 = vadd.f32 %v561, %v2820
    %v2822 = vpop.f32.mrf.mxu0
    %2823 = vdwg.mxu0
    %2824 = vmatpush.bf16.msra.mxu0 %v1873
    %2825 = vmatpush.bf16.msra.mxu0 %v1865
    %2826 = vmatpush.bf16.msra.mxu0 %v1857
    %2827 = vmatpush.bf16.msra.mxu0 %v1849
    %2828 = vmatpush.bf16.msra.mxu0 %v1841
    %2829 = vmatpush.bf16.msra.mxu0 %v1833
    %2830 = vmatpush.bf16.msra.mxu0 %v1825
    %2831 = vmatpush.bf16.msra.mxu0 %v1817
    %2832 = vmatmul.bf16.gmra.mxu0 %v158
    %v2833 = vpop.f32.mrf.mxu0
    %v2834 = vadd.f32 %v2821, %v2833
    %v2835 = vpop.f32.mrf.mxu0
    %2836 = vdwg.mxu0
    %2837 = vmatpush.bf16.msra.mxu0 %v1937
    %2838 = vmatpush.bf16.msra.mxu0 %v1929
    %2839 = vmatpush.bf16.msra.mxu0 %v1921
    %2840 = vmatpush.bf16.msra.mxu0 %v1913
    %2841 = vmatpush.bf16.msra.mxu0 %v1905
    %2842 = vmatpush.bf16.msra.mxu0 %v1897
    %2843 = vmatpush.bf16.msra.mxu0 %v1889
    %2844 = vmatpush.bf16.msra.mxu0 %v1881
    %2845 = vmatmul.bf16.gmra.mxu0 %v159
    %v2846 = vpop.f32.mrf.mxu0
    %v2847 = vadd.f32 %v2834, %v2846
    %v2848 = vpop.f32.mrf.mxu0
    %2849 = vdwg.mxu0
    %2850 = vmatpush.bf16.msra.mxu0 %v2001
    %2851 = vmatpush.bf16.msra.mxu0 %v1993
    %2852 = vmatpush.bf16.msra.mxu0 %v1985
    %2853 = vmatpush.bf16.msra.mxu0 %v1977
    %2854 = vmatpush.bf16.msra.mxu0 %v1969
    %2855 = vmatpush.bf16.msra.mxu0 %v1961
    %2856 = vmatpush.bf16.msra.mxu0 %v1953
    %2857 = vmatpush.bf16.msra.mxu0 %v1945
    %2858 = vmatmul.bf16.gmra.mxu0 %v160
    %v2859 = vpop.f32.mrf.mxu0
    %v2860 = vadd.f32 %v2847, %v2859
    %v2861 = vpop.f32.mrf.mxu0
    %2862 = vdwg.mxu0
    %2863 = vmatpush.bf16.msra.mxu0 %v2065
    %2864 = vmatpush.bf16.msra.mxu0 %v2057
    %2865 = vmatpush.bf16.msra.mxu0 %v2049
    %2866 = vmatpush.bf16.msra.mxu0 %v2041
    %2867 = vmatpush.bf16.msra.mxu0 %v2033
    %2868 = vmatpush.bf16.msra.mxu0 %v2025
    %2869 = vmatpush.bf16.msra.mxu0 %v2017
    %2870 = vmatpush.bf16.msra.mxu0 %v2009
    %2871 = vmatmul.bf16.gmra.mxu0 %v161
    %v2872 = vpop.f32.mrf.mxu0
    %v2873 = vadd.f32 %v2860, %v2872
    %v2874 = vpop.f32.mrf.mxu0
    %2875 = vdwg.mxu0
    %2876 = vmatpush.bf16.msra.mxu0 %v2129
    %2877 = vmatpush.bf16.msra.mxu0 %v2121
    %2878 = vmatpush.bf16.msra.mxu0 %v2113
    %2879 = vmatpush.bf16.msra.mxu0 %v2105
    %2880 = vmatpush.bf16.msra.mxu0 %v2097
    %2881 = vmatpush.bf16.msra.mxu0 %v2089
    %2882 = vmatpush.bf16.msra.mxu0 %v2081
    %2883 = vmatpush.bf16.msra.mxu0 %v2073
    %2884 = vmatmul.bf16.gmra.mxu0 %v162
    %v2885 = vpop.f32.mrf.mxu0
    %v2886 = vadd.f32 %v2873, %v2885
    %v2887 = vpop.f32.mrf.mxu0
    %2888 = vdwg.mxu0
    %2889 = vmatpush.bf16.msra.mxu0 0
    %2890 = vmatpush.bf16.msra.mxu0 0
    %2891 = vmatpush.bf16.msra.mxu0 0
    %2892 = vmatpush.bf16.msra.mxu0 0
    %2893 = vmatpush.bf16.msra.mxu0 0
    %2894 = vmatpush.bf16.msra.mxu0 0
    %2895 = vmatpush.bf16.msra.mxu0 0
    %2896 = vmatpush.bf16.msra.mxu0 %v2137
    %2897 = vmatmul.bf16.gmra.mxu0 %v2536
    %v2898 = vpop.f32.mrf.mxu0
    %v2899 = vadd.f32 %v2886, %v2898
    %v2900 = vpop.f32.mrf.mxu0
    %2901 = vdwg.mxu0
    %2902 = vmatpush.bf16.msra.mxu0 %v1810
    %2903 = vmatpush.bf16.msra.mxu0 %v1802
    %2904 = vmatpush.bf16.msra.mxu0 %v1794
    %2905 = vmatpush.bf16.msra.mxu0 %v1786
    %2906 = vmatpush.bf16.msra.mxu0 %v1778
    %2907 = vmatpush.bf16.msra.mxu0 %v1770
    %2908 = vmatpush.bf16.msra.mxu0 %v1762
    %2909 = vmatpush.bf16.msra.mxu0 %v1754
    %2910 = vmatmul.bf16.gmra.mxu0 %v157
    %v2911 = vpop.f32.mrf.mxu0
    %v2912 = vadd.f32 %v562, %v2911
    %v2913 = vpop.f32.mrf.mxu0
    %2914 = vdwg.mxu0
    %2915 = vmatpush.bf16.msra.mxu0 %v1874
    %2916 = vmatpush.bf16.msra.mxu0 %v1866
    %2917 = vmatpush.bf16.msra.mxu0 %v1858
    %2918 = vmatpush.bf16.msra.mxu0 %v1850
    %2919 = vmatpush.bf16.msra.mxu0 %v1842
    %2920 = vmatpush.bf16.msra.mxu0 %v1834
    %2921 = vmatpush.bf16.msra.mxu0 %v1826
    %2922 = vmatpush.bf16.msra.mxu0 %v1818
    %2923 = vmatmul.bf16.gmra.mxu0 %v158
    %v2924 = vpop.f32.mrf.mxu0
    %v2925 = vadd.f32 %v2912, %v2924
    %v2926 = vpop.f32.mrf.mxu0
    %2927 = vdwg.mxu0
    %2928 = vmatpush.bf16.msra.mxu0 %v1938
    %2929 = vmatpush.bf16.msra.mxu0 %v1930
    %2930 = vmatpush.bf16.msra.mxu0 %v1922
    %2931 = vmatpush.bf16.msra.mxu0 %v1914
    %2932 = vmatpush.bf16.msra.mxu0 %v1906
    %2933 = vmatpush.bf16.msra.mxu0 %v1898
    %2934 = vmatpush.bf16.msra.mxu0 %v1890
    %2935 = vmatpush.bf16.msra.mxu0 %v1882
    %2936 = vmatmul.bf16.gmra.mxu0 %v159
    %v2937 = vpop.f32.mrf.mxu0
    %v2938 = vadd.f32 %v2925, %v2937
    %v2939 = vpop.f32.mrf.mxu0
    %2940 = vdwg.mxu0
    %2941 = vmatpush.bf16.msra.mxu0 %v2002
    %2942 = vmatpush.bf16.msra.mxu0 %v1994
    %2943 = vmatpush.bf16.msra.mxu0 %v1986
    %2944 = vmatpush.bf16.msra.mxu0 %v1978
    %2945 = vmatpush.bf16.msra.mxu0 %v1970
    %2946 = vmatpush.bf16.msra.mxu0 %v1962
    %2947 = vmatpush.bf16.msra.mxu0 %v1954
    %2948 = vmatpush.bf16.msra.mxu0 %v1946
    %2949 = vmatmul.bf16.gmra.mxu0 %v160
    %v2950 = vpop.f32.mrf.mxu0
    %v2951 = vadd.f32 %v2938, %v2950
    %v2952 = vpop.f32.mrf.mxu0
    %2953 = vdwg.mxu0
    %2954 = vmatpush.bf16.msra.mxu0 %v2066
    %2955 = vmatpush.bf16.msra.mxu0 %v2058
    %2956 = vmatpush.bf16.msra.mxu0 %v2050
    %2957 = vmatpush.bf16.msra.mxu0 %v2042
    %2958 = vmatpush.bf16.msra.mxu0 %v2034
    %2959 = vmatpush.bf16.msra.mxu0 %v2026
    %2960 = vmatpush.bf16.msra.mxu0 %v2018
    %2961 = vmatpush.bf16.msra.mxu0 %v2010
    %2962 = vmatmul.bf16.gmra.mxu0 %v161
    %v2963 = vpop.f32.mrf.mxu0
    %v2964 = vadd.f32 %v2951, %v2963
    %v2965 = vpop.f32.mrf.mxu0
    %2966 = vdwg.mxu0
    %2967 = vmatpush.bf16.msra.mxu0 %v2130
    %2968 = vmatpush.bf16.msra.mxu0 %v2122
    %2969 = vmatpush.bf16.msra.mxu0 %v2114
    %2970 = vmatpush.bf16.msra.mxu0 %v2106
    %2971 = vmatpush.bf16.msra.mxu0 %v2098
    %2972 = vmatpush.bf16.msra.mxu0 %v2090
    %2973 = vmatpush.bf16.msra.mxu0 %v2082
    %2974 = vmatpush.bf16.msra.mxu0 %v2074
    %2975 = vmatmul.bf16.gmra.mxu0 %v162
    %v2976 = vpop.f32.mrf.mxu0
    %v2977 = vadd.f32 %v2964, %v2976
    %v2978 = vpop.f32.mrf.mxu0
    %2979 = vdwg.mxu0
    %2980 = vmatpush.bf16.msra.mxu0 0
    %2981 = vmatpush.bf16.msra.mxu0 0
    %2982 = vmatpush.bf16.msra.mxu0 0
    %2983 = vmatpush.bf16.msra.mxu0 0
    %2984 = vmatpush.bf16.msra.mxu0 0
    %2985 = vmatpush.bf16.msra.mxu0 0
    %2986 = vmatpush.bf16.msra.mxu0 0
    %2987 = vmatpush.bf16.msra.mxu0 %v2138
    %2988 = vmatmul.bf16.gmra.mxu0 %v2536
    %v2989 = vpop.f32.mrf.mxu0
    %v2990 = vadd.f32 %v2977, %v2989
    %v2991 = vpop.f32.mrf.mxu0
    %2992 = vdwg.mxu0
    %2993 = vmatpush.bf16.msra.mxu0 %v1811
    %2994 = vmatpush.bf16.msra.mxu0 %v1803
    %2995 = vmatpush.bf16.msra.mxu0 %v1795
    %2996 = vmatpush.bf16.msra.mxu0 %v1787
    %2997 = vmatpush.bf16.msra.mxu0 %v1779
    %2998 = vmatpush.bf16.msra.mxu0 %v1771
    %2999 = vmatpush.bf16.msra.mxu0 %v1763
    %3000 = vmatpush.bf16.msra.mxu0 %v1755
    %3001 = vmatmul.bf16.gmra.mxu0 %v157
    %v3002 = vpop.f32.mrf.mxu0
    %v3003 = vadd.f32 %v563, %v3002
    %v3004 = vpop.f32.mrf.mxu0
    %3005 = vdwg.mxu0
    %3006 = vmatpush.bf16.msra.mxu0 %v1875
    %3007 = vmatpush.bf16.msra.mxu0 %v1867
    %3008 = vmatpush.bf16.msra.mxu0 %v1859
    %3009 = vmatpush.bf16.msra.mxu0 %v1851
    %3010 = vmatpush.bf16.msra.mxu0 %v1843
    %3011 = vmatpush.bf16.msra.mxu0 %v1835
    %3012 = vmatpush.bf16.msra.mxu0 %v1827
    %3013 = vmatpush.bf16.msra.mxu0 %v1819
    %3014 = vmatmul.bf16.gmra.mxu0 %v158
    %v3015 = vpop.f32.mrf.mxu0
    %v3016 = vadd.f32 %v3003, %v3015
    %v3017 = vpop.f32.mrf.mxu0
    %3018 = vdwg.mxu0
    %3019 = vmatpush.bf16.msra.mxu0 %v1939
    %3020 = vmatpush.bf16.msra.mxu0 %v1931
    %3021 = vmatpush.bf16.msra.mxu0 %v1923
    %3022 = vmatpush.bf16.msra.mxu0 %v1915
    %3023 = vmatpush.bf16.msra.mxu0 %v1907
    %3024 = vmatpush.bf16.msra.mxu0 %v1899
    %3025 = vmatpush.bf16.msra.mxu0 %v1891
    %3026 = vmatpush.bf16.msra.mxu0 %v1883
    %3027 = vmatmul.bf16.gmra.mxu0 %v159
    %v3028 = vpop.f32.mrf.mxu0
    %v3029 = vadd.f32 %v3016, %v3028
    %v3030 = vpop.f32.mrf.mxu0
    %3031 = vdwg.mxu0
    %3032 = vmatpush.bf16.msra.mxu0 %v2003
    %3033 = vmatpush.bf16.msra.mxu0 %v1995
    %3034 = vmatpush.bf16.msra.mxu0 %v1987
    %3035 = vmatpush.bf16.msra.mxu0 %v1979
    %3036 = vmatpush.bf16.msra.mxu0 %v1971
    %3037 = vmatpush.bf16.msra.mxu0 %v1963
    %3038 = vmatpush.bf16.msra.mxu0 %v1955
    %3039 = vmatpush.bf16.msra.mxu0 %v1947
    %3040 = vmatmul.bf16.gmra.mxu0 %v160
    %v3041 = vpop.f32.mrf.mxu0
    %v3042 = vadd.f32 %v3029, %v3041
    %v3043 = vpop.f32.mrf.mxu0
    %3044 = vdwg.mxu0
    %3045 = vmatpush.bf16.msra.mxu0 %v2067
    %3046 = vmatpush.bf16.msra.mxu0 %v2059
    %3047 = vmatpush.bf16.msra.mxu0 %v2051
    %3048 = vmatpush.bf16.msra.mxu0 %v2043
    %3049 = vmatpush.bf16.msra.mxu0 %v2035
    %3050 = vmatpush.bf16.msra.mxu0 %v2027
    %3051 = vmatpush.bf16.msra.mxu0 %v2019
    %3052 = vmatpush.bf16.msra.mxu0 %v2011
    %3053 = vmatmul.bf16.gmra.mxu0 %v161
    %v3054 = vpop.f32.mrf.mxu0
    %v3055 = vadd.f32 %v3042, %v3054
    %v3056 = vpop.f32.mrf.mxu0
    %3057 = vdwg.mxu0
    %3058 = vmatpush.bf16.msra.mxu0 %v2131
    %3059 = vmatpush.bf16.msra.mxu0 %v2123
    %3060 = vmatpush.bf16.msra.mxu0 %v2115
    %3061 = vmatpush.bf16.msra.mxu0 %v2107
    %3062 = vmatpush.bf16.msra.mxu0 %v2099
    %3063 = vmatpush.bf16.msra.mxu0 %v2091
    %3064 = vmatpush.bf16.msra.mxu0 %v2083
    %3065 = vmatpush.bf16.msra.mxu0 %v2075
    %3066 = vmatmul.bf16.gmra.mxu0 %v162
    %v3067 = vpop.f32.mrf.mxu0
    %v3068 = vadd.f32 %v3055, %v3067
    %v3069 = vpop.f32.mrf.mxu0
    %3070 = vdwg.mxu0
    %3071 = vmatpush.bf16.msra.mxu0 0
    %3072 = vmatpush.bf16.msra.mxu0 0
    %3073 = vmatpush.bf16.msra.mxu0 0
    %3074 = vmatpush.bf16.msra.mxu0 0
    %3075 = vmatpush.bf16.msra.mxu0 0
    %3076 = vmatpush.bf16.msra.mxu0 0
    %3077 = vmatpush.bf16.msra.mxu0 0
    %3078 = vmatpush.bf16.msra.mxu0 %v2139
    %3079 = vmatmul.bf16.gmra.mxu0 %v2536
    %v3080 = vpop.f32.mrf.mxu0
    %v3081 = vadd.f32 %v3068, %v3080
    %v3082 = vpop.f32.mrf.mxu0
    %3083 = vdwg.mxu0
    %3084 = vmatpush.bf16.msra.mxu0 %v1812
    %3085 = vmatpush.bf16.msra.mxu0 %v1804
    %3086 = vmatpush.bf16.msra.mxu0 %v1796
    %3087 = vmatpush.bf16.msra.mxu0 %v1788
    %3088 = vmatpush.bf16.msra.mxu0 %v1780
    %3089 = vmatpush.bf16.msra.mxu0 %v1772
    %3090 = vmatpush.bf16.msra.mxu0 %v1764
    %3091 = vmatpush.bf16.msra.mxu0 %v1756
    %3092 = vmatmul.bf16.gmra.mxu0 %v157
    %v3093 = vpop.f32.mrf.mxu0
    %v3094 = vadd.f32 %v564, %v3093
    %v3095 = vpop.f32.mrf.mxu0
    %3096 = vdwg.mxu0
    %3097 = vmatpush.bf16.msra.mxu0 %v1876
    %3098 = vmatpush.bf16.msra.mxu0 %v1868
    %3099 = vmatpush.bf16.msra.mxu0 %v1860
    %3100 = vmatpush.bf16.msra.mxu0 %v1852
    %3101 = vmatpush.bf16.msra.mxu0 %v1844
    %3102 = vmatpush.bf16.msra.mxu0 %v1836
    %3103 = vmatpush.bf16.msra.mxu0 %v1828
    %3104 = vmatpush.bf16.msra.mxu0 %v1820
    %3105 = vmatmul.bf16.gmra.mxu0 %v158
    %v3106 = vpop.f32.mrf.mxu0
    %v3107 = vadd.f32 %v3094, %v3106
    %v3108 = vpop.f32.mrf.mxu0
    %3109 = vdwg.mxu0
    %3110 = vmatpush.bf16.msra.mxu0 %v1940
    %3111 = vmatpush.bf16.msra.mxu0 %v1932
    %3112 = vmatpush.bf16.msra.mxu0 %v1924
    %3113 = vmatpush.bf16.msra.mxu0 %v1916
    %3114 = vmatpush.bf16.msra.mxu0 %v1908
    %3115 = vmatpush.bf16.msra.mxu0 %v1900
    %3116 = vmatpush.bf16.msra.mxu0 %v1892
    %3117 = vmatpush.bf16.msra.mxu0 %v1884
    %3118 = vmatmul.bf16.gmra.mxu0 %v159
    %v3119 = vpop.f32.mrf.mxu0
    %v3120 = vadd.f32 %v3107, %v3119
    %v3121 = vpop.f32.mrf.mxu0
    %3122 = vdwg.mxu0
    %3123 = vmatpush.bf16.msra.mxu0 %v2004
    %3124 = vmatpush.bf16.msra.mxu0 %v1996
    %3125 = vmatpush.bf16.msra.mxu0 %v1988
    %3126 = vmatpush.bf16.msra.mxu0 %v1980
    %3127 = vmatpush.bf16.msra.mxu0 %v1972
    %3128 = vmatpush.bf16.msra.mxu0 %v1964
    %3129 = vmatpush.bf16.msra.mxu0 %v1956
    %3130 = vmatpush.bf16.msra.mxu0 %v1948
    %3131 = vmatmul.bf16.gmra.mxu0 %v160
    %v3132 = vpop.f32.mrf.mxu0
    %v3133 = vadd.f32 %v3120, %v3132
    %v3134 = vpop.f32.mrf.mxu0
    %3135 = vdwg.mxu0
    %3136 = vmatpush.bf16.msra.mxu0 %v2068
    %3137 = vmatpush.bf16.msra.mxu0 %v2060
    %3138 = vmatpush.bf16.msra.mxu0 %v2052
    %3139 = vmatpush.bf16.msra.mxu0 %v2044
    %3140 = vmatpush.bf16.msra.mxu0 %v2036
    %3141 = vmatpush.bf16.msra.mxu0 %v2028
    %3142 = vmatpush.bf16.msra.mxu0 %v2020
    %3143 = vmatpush.bf16.msra.mxu0 %v2012
    %3144 = vmatmul.bf16.gmra.mxu0 %v161
    %v3145 = vpop.f32.mrf.mxu0
    %v3146 = vadd.f32 %v3133, %v3145
    %v3147 = vpop.f32.mrf.mxu0
    %3148 = vdwg.mxu0
    %3149 = vmatpush.bf16.msra.mxu0 %v2132
    %3150 = vmatpush.bf16.msra.mxu0 %v2124
    %3151 = vmatpush.bf16.msra.mxu0 %v2116
    %3152 = vmatpush.bf16.msra.mxu0 %v2108
    %3153 = vmatpush.bf16.msra.mxu0 %v2100
    %3154 = vmatpush.bf16.msra.mxu0 %v2092
    %3155 = vmatpush.bf16.msra.mxu0 %v2084
    %3156 = vmatpush.bf16.msra.mxu0 %v2076
    %3157 = vmatmul.bf16.gmra.mxu0 %v162
    %v3158 = vpop.f32.mrf.mxu0
    %v3159 = vadd.f32 %v3146, %v3158
    %v3160 = vpop.f32.mrf.mxu0
    %3161 = vdwg.mxu0
    %3162 = vmatpush.bf16.msra.mxu0 0
    %3163 = vmatpush.bf16.msra.mxu0 0
    %3164 = vmatpush.bf16.msra.mxu0 0
    %3165 = vmatpush.bf16.msra.mxu0 0
    %3166 = vmatpush.bf16.msra.mxu0 0
    %3167 = vmatpush.bf16.msra.mxu0 0
    %3168 = vmatpush.bf16.msra.mxu0 0
    %3169 = vmatpush.bf16.msra.mxu0 %v2140
    %3170 = vmatmul.bf16.gmra.mxu0 %v2536
    %v3171 = vpop.f32.mrf.mxu0
    %v3172 = vadd.f32 %v3159, %v3171
    %v3173 = vpop.f32.mrf.mxu0
    %3174 = vdwg.mxu0
    %3175 = vmatpush.bf16.msra.mxu0 %v1813
    %3176 = vmatpush.bf16.msra.mxu0 %v1805
    %3177 = vmatpush.bf16.msra.mxu0 %v1797
    %3178 = vmatpush.bf16.msra.mxu0 %v1789
    %3179 = vmatpush.bf16.msra.mxu0 %v1781
    %3180 = vmatpush.bf16.msra.mxu0 %v1773
    %3181 = vmatpush.bf16.msra.mxu0 %v1765
    %3182 = vmatpush.bf16.msra.mxu0 %v1757
    %3183 = vmatmul.bf16.gmra.mxu0 %v157
    %v3184 = vpop.f32.mrf.mxu0
    %v3185 = vadd.f32 %v565, %v3184
    %v3186 = vpop.f32.mrf.mxu0
    %3187 = vdwg.mxu0
    %3188 = vmatpush.bf16.msra.mxu0 %v1877
    %3189 = vmatpush.bf16.msra.mxu0 %v1869
    %3190 = vmatpush.bf16.msra.mxu0 %v1861
    %3191 = vmatpush.bf16.msra.mxu0 %v1853
    %3192 = vmatpush.bf16.msra.mxu0 %v1845
    %3193 = vmatpush.bf16.msra.mxu0 %v1837
    %3194 = vmatpush.bf16.msra.mxu0 %v1829
    %3195 = vmatpush.bf16.msra.mxu0 %v1821
    %3196 = vmatmul.bf16.gmra.mxu0 %v158
    %v3197 = vpop.f32.mrf.mxu0
    %v3198 = vadd.f32 %v3185, %v3197
    %v3199 = vpop.f32.mrf.mxu0
    %3200 = vdwg.mxu0
    %3201 = vmatpush.bf16.msra.mxu0 %v1941
    %3202 = vmatpush.bf16.msra.mxu0 %v1933
    %3203 = vmatpush.bf16.msra.mxu0 %v1925
    %3204 = vmatpush.bf16.msra.mxu0 %v1917
    %3205 = vmatpush.bf16.msra.mxu0 %v1909
    %3206 = vmatpush.bf16.msra.mxu0 %v1901
    %3207 = vmatpush.bf16.msra.mxu0 %v1893
    %3208 = vmatpush.bf16.msra.mxu0 %v1885
    %3209 = vmatmul.bf16.gmra.mxu0 %v159
    %v3210 = vpop.f32.mrf.mxu0
    %v3211 = vadd.f32 %v3198, %v3210
    %v3212 = vpop.f32.mrf.mxu0
    %3213 = vdwg.mxu0
    %3214 = vmatpush.bf16.msra.mxu0 %v2005
    %3215 = vmatpush.bf16.msra.mxu0 %v1997
    %3216 = vmatpush.bf16.msra.mxu0 %v1989
    %3217 = vmatpush.bf16.msra.mxu0 %v1981
    %3218 = vmatpush.bf16.msra.mxu0 %v1973
    %3219 = vmatpush.bf16.msra.mxu0 %v1965
    %3220 = vmatpush.bf16.msra.mxu0 %v1957
    %3221 = vmatpush.bf16.msra.mxu0 %v1949
    %3222 = vmatmul.bf16.gmra.mxu0 %v160
    %v3223 = vpop.f32.mrf.mxu0
    %v3224 = vadd.f32 %v3211, %v3223
    %v3225 = vpop.f32.mrf.mxu0
    %3226 = vdwg.mxu0
    %3227 = vmatpush.bf16.msra.mxu0 %v2069
    %3228 = vmatpush.bf16.msra.mxu0 %v2061
    %3229 = vmatpush.bf16.msra.mxu0 %v2053
    %3230 = vmatpush.bf16.msra.mxu0 %v2045
    %3231 = vmatpush.bf16.msra.mxu0 %v2037
    %3232 = vmatpush.bf16.msra.mxu0 %v2029
    %3233 = vmatpush.bf16.msra.mxu0 %v2021
    %3234 = vmatpush.bf16.msra.mxu0 %v2013
    %3235 = vmatmul.bf16.gmra.mxu0 %v161
    %v3236 = vpop.f32.mrf.mxu0
    %v3237 = vadd.f32 %v3224, %v3236
    %v3238 = vpop.f32.mrf.mxu0
    %3239 = vdwg.mxu0
    %3240 = vmatpush.bf16.msra.mxu0 %v2133
    %3241 = vmatpush.bf16.msra.mxu0 %v2125
    %3242 = vmatpush.bf16.msra.mxu0 %v2117
    %3243 = vmatpush.bf16.msra.mxu0 %v2109
    %3244 = vmatpush.bf16.msra.mxu0 %v2101
    %3245 = vmatpush.bf16.msra.mxu0 %v2093
    %3246 = vmatpush.bf16.msra.mxu0 %v2085
    %3247 = vmatpush.bf16.msra.mxu0 %v2077
    %3248 = vmatmul.bf16.gmra.mxu0 %v162
    %v3249 = vpop.f32.mrf.mxu0
    %v3250 = vadd.f32 %v3237, %v3249
    %v3251 = vpop.f32.mrf.mxu0
    %3252 = vdwg.mxu0
    %3253 = vmatpush.bf16.msra.mxu0 0
    %3254 = vmatpush.bf16.msra.mxu0 0
    %3255 = vmatpush.bf16.msra.mxu0 0
    %3256 = vmatpush.bf16.msra.mxu0 0
    %3257 = vmatpush.bf16.msra.mxu0 0
    %3258 = vmatpush.bf16.msra.mxu0 0
    %3259 = vmatpush.bf16.msra.mxu0 0
    %3260 = vmatpush.bf16.msra.mxu0 %v2141
    %3261 = vmatmul.bf16.gmra.mxu0 %v2536
    %v3262 = vpop.f32.mrf.mxu0
    %v3263 = vadd.f32 %v3250, %v3262
    %v3264 = vpop.f32.mrf.mxu0
    %3265 = vdwg.mxu0
    %vm3266 = vcmp.gt.f32.partialorder %v2626, 0.0
    %vm3267 = vcmp.gt.f32.partialorder %v2717, 0.0
    %vm3268 = vcmp.gt.f32.partialorder %v2808, 0.0
    %vm3269 = vcmp.gt.f32.partialorder %v2899, 0.0
    %vm3270 = vcmp.gt.f32.partialorder %v2990, 0.0
    %vm3271 = vcmp.gt.f32.partialorder %v3081, 0.0
    %vm3272 = vcmp.gt.f32.partialorder %v3172, 0.0
    %vm3273 = vcmp.gt.f32.partialorder %v3263, 0.0
    %v3274 = vmul.f32 %v2626, 0.2
    %v3275 = vmul.f32 %v2717, 0.2
    %v3276 = vmul.f32 %v2808, 0.2
    %v3277 = vmul.f32 %v2899, 0.2
    %v3278 = vmul.f32 %v2990, 0.2
    %v3279 = vmul.f32 %v3081, 0.2
    %v3280 = vmul.f32 %v3172, 0.2
    %v3281 = vmul.f32 %v3263, 0.2
    %v3282 = vsel %vm3266, %v2626, %v3274
    %v3283 = vsel %vm3267, %v2717, %v3275
    %v3284 = vsel %vm3268, %v2808, %v3276
    %v3285 = vsel %vm3269, %v2899, %v3277
    %v3286 = vsel %vm3270, %v2990, %v3278
    %v3287 = vsel %vm3271, %v3081, %v3279
    %v3288 = vsel %vm3272, %v3172, %v3280
    %v3289 = vsel %vm3273, %v3263, %v3281
    %v3290 = vpack.c.bf16 %v3282, %v3282
    %v3291 = vpack.c.bf16 %v3283, %v3283
    %v3292 = vpack.c.bf16 %v3284, %v3284
    %v3293 = vpack.c.bf16 %v3285, %v3285
    %v3294 = vpack.c.bf16 %v3286, %v3286
    %v3295 = vpack.c.bf16 %v3287, %v3287
    %v3296 = vpack.c.bf16 %v3288, %v3288
    %v3297 = vpack.c.bf16 %v3289, %v3289
    %v3298 = vld [vmem:[#allocation8] sm:$0xff]
    %v3299 = vld [vmem:[#allocation8 + $0x8] sm:$0xff]
    %v3300 = vld [vmem:[#allocation8 + $0x10] sm:$0xff]
    %v3301 = vld [vmem:[#allocation8 + $0x18] sm:$0xff]
    %v3302 = vld [vmem:[#allocation8 + $0x20] sm:$0xff]
    %v3303 = vld [vmem:[#allocation8 + $0x28] sm:$0xff]
    %v3304 = vld [vmem:[#allocation8 + $0x30] sm:$0xff]
    %v3305 = vld [vmem:[#allocation8 + $0x38] sm:$0xff]
    %v3306 = vld [vmem:[#allocation8 + $0x40] sm:$0xff]
    %v3307 = vld [vmem:[#allocation8 + $0x48] sm:$0xff]
    %v3308 = vld [vmem:[#allocation8 + $0x50] sm:$0xff]
    %v3309 = vld [vmem:[#allocation8 + $0x58] sm:$0xff]
    %v3310 = vld [vmem:[#allocation8 + $0x60] sm:$0xff]
    %v3311 = vld [vmem:[#allocation8 + $0x68] sm:$0xff]
    %v3312 = vld [vmem:[#allocation8 + $0x70] sm:$0xff]
    %v3313 = vld [vmem:[#allocation8 + $0x78] sm:$0xff]
    %v3314 = vld [vmem:[#allocation8 + $0x80] sm:$0xff]
    %v3315 = vld [vmem:[#allocation8 + $0x88] sm:$0xff]
    %v3316 = vld [vmem:[#allocation8 + $0x90] sm:$0xff]
    %v3317 = vld [vmem:[#allocation8 + $0x98] sm:$0xff]
    %v3318 = vld [vmem:[#allocation8 + $0xa0] sm:$0xff]
    %v3319 = vld [vmem:[#allocation8 + $0xa8] sm:$0xff]
    %v3320 = vld [vmem:[#allocation8 + $0xb0] sm:$0xff]
    %v3321 = vld [vmem:[#allocation8 + $0xb8] sm:$0xff]
    %v3322 = vld [vmem:[#allocation8 + $0xc0] sm:$0xff]
    %v3323 = vld [vmem:[#allocation8 + $0xc8] sm:$0xff]
    %v3324 = vld [vmem:[#allocation8 + $0xd0] sm:$0xff]
    %v3325 = vld [vmem:[#allocation8 + $0xd8] sm:$0xff]
    %v3326 = vld [vmem:[#allocation8 + $0xe0] sm:$0xff]
    %v3327 = vld [vmem:[#allocation8 + $0xe8] sm:$0xff]
    %v3328 = vld [vmem:[#allocation8 + $0xf0] sm:$0xff]
    %v3329 = vld [vmem:[#allocation8 + $0xf8] sm:$0xff]
    %v3330 = vld [vmem:[#allocation8 + $0x100] sm:$0xff]
    %v3331 = vld [vmem:[#allocation8 + $0x108] sm:$0xff]
    %v3332 = vld [vmem:[#allocation8 + $0x110] sm:$0xff]
    %v3333 = vld [vmem:[#allocation8 + $0x118] sm:$0xff]
    %v3334 = vld [vmem:[#allocation8 + $0x120] sm:$0xff]
    %v3335 = vld [vmem:[#allocation8 + $0x128] sm:$0xff]
    %v3336 = vld [vmem:[#allocation8 + $0x130] sm:$0xff]
    %v3337 = vld [vmem:[#allocation8 + $0x138] sm:$0xff]
    %v3338 = vld [vmem:[#allocation8 + $0x140] sm:$0xff]
    %v3339 = vld [vmem:[#allocation8 + $0x148] sm:$0xff]
    %v3340 = vld [vmem:[#allocation8 + $0x150] sm:$0xff]
    %v3341 = vld [vmem:[#allocation8 + $0x158] sm:$0xff]
    %v3342 = vld [vmem:[#allocation8 + $0x160] sm:$0xff]
    %v3343 = vld [vmem:[#allocation8 + $0x168] sm:$0xff]
    %v3344 = vld [vmem:[#allocation8 + $0x170] sm:$0xff]
    %v3345 = vld [vmem:[#allocation8 + $0x178] sm:$0xff]
    %v3346 = vld [vmem:[#allocation8 + $0x180] sm:$0xff]
    %v3347 = vld [vmem:[#allocation8 + $0x188] sm:$0xff]
    %v3348 = vld [vmem:[#allocation8 + $0x190] sm:$0xff]
    %v3349 = vld [vmem:[#allocation8 + $0x198] sm:$0xff]
    %v3350 = vld [vmem:[#allocation8 + $0x1a0] sm:$0xff]
    %v3351 = vld [vmem:[#allocation8 + $0x1a8] sm:$0xff]
    %v3352 = vld [vmem:[#allocation8 + $0x1b0] sm:$0xff]
    %v3353 = vld [vmem:[#allocation8 + $0x1b8] sm:$0xff]
    %v3354 = vld [vmem:[#allocation8 + $0x1c0] sm:$0xff]
    %v3355 = vld [vmem:[#allocation8 + $0x1c8] sm:$0xff]
    %v3356 = vld [vmem:[#allocation8 + $0x1d0] sm:$0xff]
    %v3357 = vld [vmem:[#allocation8 + $0x1d8] sm:$0xff]
    %v3358 = vld [vmem:[#allocation8 + $0x1e0] sm:$0xff]
    %v3359 = vld [vmem:[#allocation8 + $0x1e8] sm:$0xff]
    %v3360 = vld [vmem:[#allocation8 + $0x1f0] sm:$0xff]
    %v3361 = vld [vmem:[#allocation8 + $0x1f8] sm:$0xff]
    %v3362 = vld [vmem:[#allocation8 + $0x200] sm:$0xff]
    %v3363 = vld [vmem:[#allocation8 + $0x208] sm:$0xff]
    %v3364 = vld [vmem:[#allocation8 + $0x210] sm:$0xff]
    %v3365 = vld [vmem:[#allocation8 + $0x218] sm:$0xff]
    %v3366 = vld [vmem:[#allocation8 + $0x220] sm:$0xff]
    %v3367 = vld [vmem:[#allocation8 + $0x228] sm:$0xff]
    %v3368 = vld [vmem:[#allocation8 + $0x230] sm:$0xff]
    %v3369 = vld [vmem:[#allocation8 + $0x238] sm:$0xff]
    %v3370 = vld [vmem:[#allocation8 + $0x240] sm:$0xff]
    %v3371 = vld [vmem:[#allocation8 + $0x248] sm:$0xff]
    %v3372 = vld [vmem:[#allocation8 + $0x250] sm:$0xff]
    %v3373 = vld [vmem:[#allocation8 + $0x258] sm:$0xff]
    %v3374 = vld [vmem:[#allocation8 + $0x260] sm:$0xff]
    %v3375 = vld [vmem:[#allocation8 + $0x268] sm:$0xff]
    %v3376 = vld [vmem:[#allocation8 + $0x270] sm:$0xff]
    %v3377 = vld [vmem:[#allocation8 + $0x278] sm:$0xff]
    %v3378 = vld [vmem:[#allocation8 + $0x280] sm:$0xff]
    %v3379 = vld [vmem:[#allocation8 + $0x288] sm:$0xff]
    %v3380 = vld [vmem:[#allocation8 + $0x290] sm:$0xff]
    %v3381 = vld [vmem:[#allocation8 + $0x298] sm:$0xff]
    %v3382 = vld [vmem:[#allocation8 + $0x2a0] sm:$0xff]
    %v3383 = vld [vmem:[#allocation8 + $0x2a8] sm:$0xff]
    %v3384 = vld [vmem:[#allocation8 + $0x2b0] sm:$0xff]
    %v3385 = vld [vmem:[#allocation8 + $0x2b8] sm:$0xff]
    %v3386 = vld [vmem:[#allocation8 + $0x2c0] sm:$0xff]
    %v3387 = vld [vmem:[#allocation8 + $0x2c8] sm:$0xff]
    %v3388 = vld [vmem:[#allocation8 + $0x2d0] sm:$0xff]
    %v3389 = vld [vmem:[#allocation8 + $0x2d8] sm:$0xff]
    %v3390 = vld [vmem:[#allocation8 + $0x2e0] sm:$0xff]
    %v3391 = vld [vmem:[#allocation8 + $0x2e8] sm:$0xff]
    %v3392 = vld [vmem:[#allocation8 + $0x2f0] sm:$0xff]
    %v3393 = vld [vmem:[#allocation8 + $0x2f8] sm:$0xff]
    %v3394 = vld [vmem:[#allocation8 + $0x300] sm:$0xff]
    %v3395 = vld [vmem:[#allocation8 + $0x308] sm:$0xff]
    %v3396 = vld [vmem:[#allocation8 + $0x310] sm:$0xff]
    %v3397 = vld [vmem:[#allocation8 + $0x318] sm:$0xff]
    %v3398 = vld [vmem:[#allocation8 + $0x320] sm:$0xff]
    %v3399 = vld [vmem:[#allocation8 + $0x328] sm:$0xff]
    %v3400 = vld [vmem:[#allocation8 + $0x330] sm:$0xff]
    %v3401 = vld [vmem:[#allocation8 + $0x338] sm:$0xff]
    %v3402 = vld [vmem:[#allocation8 + $0x340] sm:$0xff]
    %v3403 = vld [vmem:[#allocation8 + $0x348] sm:$0xff]
    %v3404 = vld [vmem:[#allocation8 + $0x350] sm:$0xff]
    %v3405 = vld [vmem:[#allocation8 + $0x358] sm:$0xff]
    %v3406 = vld [vmem:[#allocation8 + $0x360] sm:$0xff]
    %v3407 = vld [vmem:[#allocation8 + $0x368] sm:$0xff]
    %v3408 = vld [vmem:[#allocation8 + $0x370] sm:$0xff]
    %v3409 = vld [vmem:[#allocation8 + $0x378] sm:$0xff]
    %v3410 = vld [vmem:[#allocation8 + $0x380] sm:$0xff]
    %v3411 = vld [vmem:[#allocation8 + $0x388] sm:$0xff]
    %v3412 = vld [vmem:[#allocation8 + $0x390] sm:$0xff]
    %v3413 = vld [vmem:[#allocation8 + $0x398] sm:$0xff]
    %v3414 = vld [vmem:[#allocation8 + $0x3a0] sm:$0xff]
    %v3415 = vld [vmem:[#allocation8 + $0x3a8] sm:$0xff]
    %v3416 = vld [vmem:[#allocation8 + $0x3b0] sm:$0xff]
    %v3417 = vld [vmem:[#allocation8 + $0x3b8] sm:$0xff]
    %v3418 = vld [vmem:[#allocation8 + $0x3c0] sm:$0xff]
    %v3419 = vld [vmem:[#allocation8 + $0x3c8] sm:$0xff]
    %v3420 = vld [vmem:[#allocation8 + $0x3d0] sm:$0xff]
    %v3421 = vld [vmem:[#allocation8 + $0x3d8] sm:$0xff]
    %v3422 = vld [vmem:[#allocation8 + $0x3e0] sm:$0xff]
    %v3423 = vld [vmem:[#allocation8 + $0x3e8] sm:$0xff]
    %v3424 = vld [vmem:[#allocation8 + $0x3f0] sm:$0xff]
    %v3425 = vld [vmem:[#allocation8 + $0x3f8] sm:$0xff]
    %v3426 = vld [vmem:[#allocation8 + $0x400] sm:$0xff]
    %v3427 = vld [vmem:[#allocation8 + $0x408] sm:$0xff]
    %v3428 = vld [vmem:[#allocation8 + $0x410] sm:$0xff]
    %v3429 = vld [vmem:[#allocation8 + $0x418] sm:$0xff]
    %v3430 = vld [vmem:[#allocation8 + $0x420] sm:$0xff]
    %v3431 = vld [vmem:[#allocation8 + $0x428] sm:$0xff]
    %v3432 = vld [vmem:[#allocation8 + $0x430] sm:$0xff]
    %v3433 = vld [vmem:[#allocation8 + $0x438] sm:$0xff]
    %v3434 = vld [vmem:[#allocation8 + $0x440] sm:$0xff]
    %v3435 = vld [vmem:[#allocation8 + $0x448] sm:$0xff]
    %v3436 = vld [vmem:[#allocation8 + $0x450] sm:$0xff]
    %v3437 = vld [vmem:[#allocation8 + $0x458] sm:$0xff]
    %v3438 = vld [vmem:[#allocation8 + $0x460] sm:$0xff]
    %v3439 = vld [vmem:[#allocation8 + $0x468] sm:$0xff]
    %v3440 = vld [vmem:[#allocation8 + $0x470] sm:$0xff]
    %v3441 = vld [vmem:[#allocation8 + $0x478] sm:$0xff]
    %v3442 = vld [vmem:[#allocation8 + $0x480] sm:$0xff]
    %v3443 = vld [vmem:[#allocation8 + $0x488] sm:$0xff]
    %v3444 = vld [vmem:[#allocation8 + $0x490] sm:$0xff]
    %v3445 = vld [vmem:[#allocation8 + $0x498] sm:$0xff]
    %v3446 = vld [vmem:[#allocation8 + $0x4a0] sm:$0xff]
    %v3447 = vld [vmem:[#allocation8 + $0x4a8] sm:$0xff]
    %v3448 = vld [vmem:[#allocation8 + $0x4b0] sm:$0xff]
    %v3449 = vld [vmem:[#allocation8 + $0x4b8] sm:$0xff]
    %v3450 = vld [vmem:[#allocation8 + $0x4c0] sm:$0xff]
    %v3451 = vld [vmem:[#allocation8 + $0x4c8] sm:$0xff]
    %v3452 = vld [vmem:[#allocation8 + $0x4d0] sm:$0xff]
    %v3453 = vld [vmem:[#allocation8 + $0x4d8] sm:$0xff]
    %v3454 = vld [vmem:[#allocation8 + $0x4e0] sm:$0xff]
    %v3455 = vld [vmem:[#allocation8 + $0x4e8] sm:$0xff]
    %v3456 = vld [vmem:[#allocation8 + $0x4f0] sm:$0xff]
    %v3457 = vld [vmem:[#allocation8 + $0x4f8] sm:$0xff]
    %v3458 = vld [vmem:[#allocation8 + $0x500] sm:$0xff]
    %v3459 = vld [vmem:[#allocation8 + $0x508] sm:$0xff]
    %v3460 = vld [vmem:[#allocation8 + $0x510] sm:$0xff]
    %v3461 = vld [vmem:[#allocation8 + $0x518] sm:$0xff]
    %v3462 = vld [vmem:[#allocation8 + $0x520] sm:$0xff]
    %v3463 = vld [vmem:[#allocation8 + $0x528] sm:$0xff]
    %v3464 = vld [vmem:[#allocation8 + $0x530] sm:$0xff]
    %v3465 = vld [vmem:[#allocation8 + $0x538] sm:$0xff]
    %v3466 = vld [vmem:[#allocation8 + $0x540] sm:$0xff]
    %v3467 = vld [vmem:[#allocation8 + $0x548] sm:$0xff]
    %v3468 = vld [vmem:[#allocation8 + $0x550] sm:$0xff]
    %v3469 = vld [vmem:[#allocation8 + $0x558] sm:$0xff]
    %v3470 = vld [vmem:[#allocation8 + $0x560] sm:$0xff]
    %v3471 = vld [vmem:[#allocation8 + $0x568] sm:$0xff]
    %v3472 = vld [vmem:[#allocation8 + $0x570] sm:$0xff]
    %v3473 = vld [vmem:[#allocation8 + $0x578] sm:$0xff]
    %v3474 = vld [vmem:[#allocation8 + $0x580] sm:$0xff]
    %v3475 = vld [vmem:[#allocation8 + $0x588] sm:$0xff]
    %v3476 = vld [vmem:[#allocation8 + $0x590] sm:$0xff]
    %v3477 = vld [vmem:[#allocation8 + $0x598] sm:$0xff]
    %v3478 = vld [vmem:[#allocation8 + $0x5a0] sm:$0xff]
    %v3479 = vld [vmem:[#allocation8 + $0x5a8] sm:$0xff]
    %v3480 = vld [vmem:[#allocation8 + $0x5b0] sm:$0xff]
    %v3481 = vld [vmem:[#allocation8 + $0x5b8] sm:$0xff]
    %v3482 = vld [vmem:[#allocation8 + $0x5c0] sm:$0xff]
    %v3483 = vld [vmem:[#allocation8 + $0x5c8] sm:$0xff]
    %v3484 = vld [vmem:[#allocation8 + $0x5d0] sm:$0xff]
    %v3485 = vld [vmem:[#allocation8 + $0x5d8] sm:$0xff]
    %v3486 = vld [vmem:[#allocation8 + $0x5e0] sm:$0xff]
    %v3487 = vld [vmem:[#allocation8 + $0x5e8] sm:$0xff]
    %v3488 = vld [vmem:[#allocation8 + $0x5f0] sm:$0xff]
    %v3489 = vld [vmem:[#allocation8 + $0x5f8] sm:$0xff]
    %v3490 = vld [vmem:[#allocation8 + $0x600] sm:$0xff]
    %v3491 = vld [vmem:[#allocation8 + $0x608] sm:$0xff]
    %v3492 = vld [vmem:[#allocation8 + $0x610] sm:$0xff]
    %v3493 = vld [vmem:[#allocation8 + $0x618] sm:$0xff]
    %v3494 = vld [vmem:[#allocation8 + $0x620] sm:$0xff]
    %v3495 = vld [vmem:[#allocation8 + $0x628] sm:$0xff]
    %v3496 = vld [vmem:[#allocation8 + $0x630] sm:$0xff]
    %v3497 = vld [vmem:[#allocation8 + $0x638] sm:$0xff]
    %v3498 = vld [vmem:[#allocation8 + $0x640] sm:$0xff]
    %v3499 = vld [vmem:[#allocation8 + $0x648] sm:$0xff]
    %v3500 = vld [vmem:[#allocation8 + $0x650] sm:$0xff]
    %v3501 = vld [vmem:[#allocation8 + $0x658] sm:$0xff]
    %v3502 = vld [vmem:[#allocation8 + $0x660] sm:$0xff]
    %v3503 = vld [vmem:[#allocation8 + $0x668] sm:$0xff]
    %v3504 = vld [vmem:[#allocation8 + $0x670] sm:$0xff]
    %v3505 = vld [vmem:[#allocation8 + $0x678] sm:$0xff]
    %v3506 = vld [vmem:[#allocation8 + $0x680] sm:$0xff]
    %v3507 = vld [vmem:[#allocation8 + $0x688] sm:$0xff]
    %v3508 = vld [vmem:[#allocation8 + $0x690] sm:$0xff]
    %v3509 = vld [vmem:[#allocation8 + $0x698] sm:$0xff]
    %v3510 = vld [vmem:[#allocation8 + $0x6a0] sm:$0xff]
    %v3511 = vld [vmem:[#allocation8 + $0x6a8] sm:$0xff]
    %v3512 = vld [vmem:[#allocation8 + $0x6b0] sm:$0xff]
    %v3513 = vld [vmem:[#allocation8 + $0x6b8] sm:$0xff]
    %v3514 = vld [vmem:[#allocation8 + $0x6c0] sm:$0xff]
    %v3515 = vld [vmem:[#allocation8 + $0x6c8] sm:$0xff]
    %v3516 = vld [vmem:[#allocation8 + $0x6d0] sm:$0xff]
    %v3517 = vld [vmem:[#allocation8 + $0x6d8] sm:$0xff]
    %v3518 = vld [vmem:[#allocation8 + $0x6e0] sm:$0xff]
    %v3519 = vld [vmem:[#allocation8 + $0x6e8] sm:$0xff]
    %v3520 = vld [vmem:[#allocation8 + $0x6f0] sm:$0xff]
    %v3521 = vld [vmem:[#allocation8 + $0x6f8] sm:$0xff]
    %v3522 = vld [vmem:[#allocation8 + $0x700] sm:$0xff]
    %v3523 = vld [vmem:[#allocation8 + $0x708] sm:$0xff]
    %v3524 = vld [vmem:[#allocation8 + $0x710] sm:$0xff]
    %v3525 = vld [vmem:[#allocation8 + $0x718] sm:$0xff]
    %v3526 = vld [vmem:[#allocation8 + $0x720] sm:$0xff]
    %v3527 = vld [vmem:[#allocation8 + $0x728] sm:$0xff]
    %v3528 = vld [vmem:[#allocation8 + $0x730] sm:$0xff]
    %v3529 = vld [vmem:[#allocation8 + $0x738] sm:$0xff]
    %v3530 = vld [vmem:[#allocation8 + $0x740] sm:$0xff]
    %v3531 = vld [vmem:[#allocation8 + $0x748] sm:$0xff]
    %v3532 = vld [vmem:[#allocation8 + $0x750] sm:$0xff]
    %v3533 = vld [vmem:[#allocation8 + $0x758] sm:$0xff]
    %v3534 = vld [vmem:[#allocation8 + $0x760] sm:$0xff]
    %v3535 = vld [vmem:[#allocation8 + $0x768] sm:$0xff]
    %v3536 = vld [vmem:[#allocation8 + $0x770] sm:$0xff]
    %v3537 = vld [vmem:[#allocation8 + $0x778] sm:$0xff]
    %v3538 = vld [vmem:[#allocation8 + $0x780] sm:$0xff]
    %v3539 = vld [vmem:[#allocation8 + $0x788] sm:$0xff]
    %v3540 = vld [vmem:[#allocation8 + $0x790] sm:$0xff]
    %v3541 = vld [vmem:[#allocation8 + $0x798] sm:$0xff]
    %v3542 = vld [vmem:[#allocation8 + $0x7a0] sm:$0xff]
    %v3543 = vld [vmem:[#allocation8 + $0x7a8] sm:$0xff]
    %v3544 = vld [vmem:[#allocation8 + $0x7b0] sm:$0xff]
    %v3545 = vld [vmem:[#allocation8 + $0x7b8] sm:$0xff]
    %v3546 = vld [vmem:[#allocation8 + $0x7c0] sm:$0xff]
    %v3547 = vld [vmem:[#allocation8 + $0x7c8] sm:$0xff]
    %v3548 = vld [vmem:[#allocation8 + $0x7d0] sm:$0xff]
    %v3549 = vld [vmem:[#allocation8 + $0x7d8] sm:$0xff]
    %v3550 = vld [vmem:[#allocation8 + $0x7e0] sm:$0xff]
    %v3551 = vld [vmem:[#allocation8 + $0x7e8] sm:$0xff]
    %v3552 = vld [vmem:[#allocation8 + $0x7f0] sm:$0xff]
    %v3553 = vld [vmem:[#allocation8 + $0x7f8] sm:$0xff]
    %v3554 = vld [vmem:[#allocation10] sm:$0xf]
    %v3556 = vperm.slane %v3554, 0
    %v3557 = vperm.slane %v3554, 1
    %v3558 = vperm.slane %v3554, 2
    %v3559 = vperm.slane %v3554, 3
    %v3820 = vunpack.c.l.b16 %v3298
    %v3821 = vunpack.c.h.b16 %v3298
    %v3822 = vunpack.c.l.b16 %v3299
    %v3823 = vunpack.c.h.b16 %v3299
    %v3824 = vunpack.c.l.b16 %v3300
    %v3825 = vunpack.c.h.b16 %v3300
    %v3826 = vunpack.c.l.b16 %v3301
    %v3827 = vunpack.c.h.b16 %v3301
    %v3828 = vunpack.c.l.b16 %v3302
    %v3829 = vunpack.c.h.b16 %v3302
    %v3830 = vunpack.c.l.b16 %v3303
    %v3831 = vunpack.c.h.b16 %v3303
    %v3832 = vunpack.c.l.b16 %v3304
    %v3833 = vunpack.c.h.b16 %v3304
    %v3834 = vunpack.c.l.b16 %v3305
    %v3835 = vunpack.c.h.b16 %v3305
    %v3836 = vunpack.c.l.b16 %v3306
    %v3837 = vunpack.c.h.b16 %v3306
    %v3838 = vunpack.c.l.b16 %v3307
    %v3839 = vunpack.c.h.b16 %v3307
    %v3840 = vunpack.c.l.b16 %v3308
    %v3841 = vunpack.c.h.b16 %v3308
    %v3842 = vunpack.c.l.b16 %v3309
    %v3843 = vunpack.c.h.b16 %v3309
    %v3844 = vunpack.c.l.b16 %v3310
    %v3845 = vunpack.c.h.b16 %v3310
    %v3846 = vunpack.c.l.b16 %v3311
    %v3847 = vunpack.c.h.b16 %v3311
    %v3848 = vunpack.c.l.b16 %v3312
    %v3849 = vunpack.c.h.b16 %v3312
    %v3850 = vunpack.c.l.b16 %v3313
    %v3851 = vunpack.c.h.b16 %v3313
    %v3852 = vunpack.c.l.b16 %v3314
    %v3853 = vunpack.c.h.b16 %v3314
    %v3854 = vunpack.c.l.b16 %v3315
    %v3855 = vunpack.c.h.b16 %v3315
    %v3856 = vunpack.c.l.b16 %v3316
    %v3857 = vunpack.c.h.b16 %v3316
    %v3858 = vunpack.c.l.b16 %v3317
    %v3859 = vunpack.c.h.b16 %v3317
    %v3860 = vunpack.c.l.b16 %v3318
    %v3861 = vunpack.c.h.b16 %v3318
    %v3862 = vunpack.c.l.b16 %v3319
    %v3863 = vunpack.c.h.b16 %v3319
    %v3864 = vunpack.c.l.b16 %v3320
    %v3865 = vunpack.c.h.b16 %v3320
    %v3866 = vunpack.c.l.b16 %v3321
    %v3867 = vunpack.c.h.b16 %v3321
    %v3868 = vunpack.c.l.b16 %v3322
    %v3869 = vunpack.c.h.b16 %v3322
    %v3870 = vunpack.c.l.b16 %v3323
    %v3871 = vunpack.c.h.b16 %v3323
    %v3872 = vunpack.c.l.b16 %v3324
    %v3873 = vunpack.c.h.b16 %v3324
    %v3874 = vunpack.c.l.b16 %v3325
    %v3875 = vunpack.c.h.b16 %v3325
    %v3876 = vunpack.c.l.b16 %v3326
    %v3877 = vunpack.c.h.b16 %v3326
    %v3878 = vunpack.c.l.b16 %v3327
    %v3879 = vunpack.c.h.b16 %v3327
    %v3880 = vunpack.c.l.b16 %v3328
    %v3881 = vunpack.c.h.b16 %v3328
    %v3882 = vunpack.c.l.b16 %v3329
    %v3883 = vunpack.c.h.b16 %v3329
    %v3884 = vunpack.c.l.b16 %v3330
    %v3885 = vunpack.c.h.b16 %v3330
    %v3886 = vunpack.c.l.b16 %v3331
    %v3887 = vunpack.c.h.b16 %v3331
    %v3888 = vunpack.c.l.b16 %v3332
    %v3889 = vunpack.c.h.b16 %v3332
    %v3890 = vunpack.c.l.b16 %v3333
    %v3891 = vunpack.c.h.b16 %v3333
    %v3892 = vunpack.c.l.b16 %v3334
    %v3893 = vunpack.c.h.b16 %v3334
    %v3894 = vunpack.c.l.b16 %v3335
    %v3895 = vunpack.c.h.b16 %v3335
    %v3896 = vunpack.c.l.b16 %v3336
    %v3897 = vunpack.c.h.b16 %v3336
    %v3898 = vunpack.c.l.b16 %v3337
    %v3899 = vunpack.c.h.b16 %v3337
    %v3900 = vunpack.c.l.b16 %v3338
    %v3901 = vunpack.c.h.b16 %v3338
    %v3902 = vunpack.c.l.b16 %v3339
    %v3903 = vunpack.c.h.b16 %v3339
    %v3904 = vunpack.c.l.b16 %v3340
    %v3905 = vunpack.c.h.b16 %v3340
    %v3906 = vunpack.c.l.b16 %v3341
    %v3907 = vunpack.c.h.b16 %v3341
    %v3908 = vunpack.c.l.b16 %v3342
    %v3909 = vunpack.c.h.b16 %v3342
    %v3910 = vunpack.c.l.b16 %v3343
    %v3911 = vunpack.c.h.b16 %v3343
    %v3912 = vunpack.c.l.b16 %v3344
    %v3913 = vunpack.c.h.b16 %v3344
    %v3914 = vunpack.c.l.b16 %v3345
    %v3915 = vunpack.c.h.b16 %v3345
    %v3916 = vunpack.c.l.b16 %v3346
    %v3917 = vunpack.c.h.b16 %v3346
    %v3918 = vunpack.c.l.b16 %v3347
    %v3919 = vunpack.c.h.b16 %v3347
    %v3920 = vunpack.c.l.b16 %v3348
    %v3921 = vunpack.c.h.b16 %v3348
    %v3922 = vunpack.c.l.b16 %v3349
    %v3923 = vunpack.c.h.b16 %v3349
    %v3924 = vunpack.c.l.b16 %v3350
    %v3925 = vunpack.c.h.b16 %v3350
    %v3926 = vunpack.c.l.b16 %v3351
    %v3927 = vunpack.c.h.b16 %v3351
    %v3928 = vunpack.c.l.b16 %v3352
    %v3929 = vunpack.c.h.b16 %v3352
    %v3930 = vunpack.c.l.b16 %v3353
    %v3931 = vunpack.c.h.b16 %v3353
    %v3932 = vunpack.c.l.b16 %v3354
    %v3933 = vunpack.c.h.b16 %v3354
    %v3934 = vunpack.c.l.b16 %v3355
    %v3935 = vunpack.c.h.b16 %v3355
    %v3936 = vunpack.c.l.b16 %v3356
    %v3937 = vunpack.c.h.b16 %v3356
    %v3938 = vunpack.c.l.b16 %v3357
    %v3939 = vunpack.c.h.b16 %v3357
    %v3940 = vunpack.c.l.b16 %v3358
    %v3941 = vunpack.c.h.b16 %v3358
    %v3942 = vunpack.c.l.b16 %v3359
    %v3943 = vunpack.c.h.b16 %v3359
    %v3944 = vunpack.c.l.b16 %v3360
    %v3945 = vunpack.c.h.b16 %v3360
    %v3946 = vunpack.c.l.b16 %v3361
    %v3947 = vunpack.c.h.b16 %v3361
    %v3948 = vunpack.c.l.b16 %v3362
    %v3949 = vunpack.c.h.b16 %v3362
    %v3950 = vunpack.c.l.b16 %v3363
    %v3951 = vunpack.c.h.b16 %v3363
    %v3952 = vunpack.c.l.b16 %v3364
    %v3953 = vunpack.c.h.b16 %v3364
    %v3954 = vunpack.c.l.b16 %v3365
    %v3955 = vunpack.c.h.b16 %v3365
    %v3956 = vunpack.c.l.b16 %v3366
    %v3957 = vunpack.c.h.b16 %v3366
    %v3958 = vunpack.c.l.b16 %v3367
    %v3959 = vunpack.c.h.b16 %v3367
    %v3960 = vunpack.c.l.b16 %v3368
    %v3961 = vunpack.c.h.b16 %v3368
    %v3962 = vunpack.c.l.b16 %v3369
    %v3963 = vunpack.c.h.b16 %v3369
    %v3964 = vunpack.c.l.b16 %v3370
    %v3965 = vunpack.c.h.b16 %v3370
    %v3966 = vunpack.c.l.b16 %v3371
    %v3967 = vunpack.c.h.b16 %v3371
    %v3968 = vunpack.c.l.b16 %v3372
    %v3969 = vunpack.c.h.b16 %v3372
    %v3970 = vunpack.c.l.b16 %v3373
    %v3971 = vunpack.c.h.b16 %v3373
    %v3972 = vunpack.c.l.b16 %v3374
    %v3973 = vunpack.c.h.b16 %v3374
    %v3974 = vunpack.c.l.b16 %v3375
    %v3975 = vunpack.c.h.b16 %v3375
    %v3976 = vunpack.c.l.b16 %v3376
    %v3977 = vunpack.c.h.b16 %v3376
    %v3978 = vunpack.c.l.b16 %v3377
    %v3979 = vunpack.c.h.b16 %v3377
    %v3980 = vunpack.c.l.b16 %v3378
    %v3981 = vunpack.c.h.b16 %v3378
    %v3982 = vunpack.c.l.b16 %v3379
    %v3983 = vunpack.c.h.b16 %v3379
    %v3984 = vunpack.c.l.b16 %v3380
    %v3985 = vunpack.c.h.b16 %v3380
    %v3986 = vunpack.c.l.b16 %v3381
    %v3987 = vunpack.c.h.b16 %v3381
    %v3988 = vunpack.c.l.b16 %v3382
    %v3989 = vunpack.c.h.b16 %v3382
    %v3990 = vunpack.c.l.b16 %v3383
    %v3991 = vunpack.c.h.b16 %v3383
    %v3992 = vunpack.c.l.b16 %v3384
    %v3993 = vunpack.c.h.b16 %v3384
    %v3994 = vunpack.c.l.b16 %v3385
    %v3995 = vunpack.c.h.b16 %v3385
    %v3996 = vunpack.c.l.b16 %v3386
    %v3997 = vunpack.c.h.b16 %v3386
    %v3998 = vunpack.c.l.b16 %v3387
    %v3999 = vunpack.c.h.b16 %v3387
    %v4000 = vunpack.c.l.b16 %v3388
    %v4001 = vunpack.c.h.b16 %v3388
    %v4002 = vunpack.c.l.b16 %v3389
    %v4003 = vunpack.c.h.b16 %v3389
    %v4004 = vunpack.c.l.b16 %v3390
    %v4005 = vunpack.c.h.b16 %v3390
    %v4006 = vunpack.c.l.b16 %v3391
    %v4007 = vunpack.c.h.b16 %v3391
    %v4008 = vunpack.c.l.b16 %v3392
    %v4009 = vunpack.c.h.b16 %v3392
    %v4010 = vunpack.c.l.b16 %v3393
    %v4011 = vunpack.c.h.b16 %v3393
    %v4012 = vunpack.c.l.b16 %v3394
    %v4013 = vunpack.c.h.b16 %v3394
    %v4014 = vunpack.c.l.b16 %v3395
    %v4015 = vunpack.c.h.b16 %v3395
    %v4016 = vunpack.c.l.b16 %v3396
    %v4017 = vunpack.c.h.b16 %v3396
    %v4018 = vunpack.c.l.b16 %v3397
    %v4019 = vunpack.c.h.b16 %v3397
    %v4020 = vunpack.c.l.b16 %v3398
    %v4021 = vunpack.c.h.b16 %v3398
    %v4022 = vunpack.c.l.b16 %v3399
    %v4023 = vunpack.c.h.b16 %v3399
    %v4024 = vunpack.c.l.b16 %v3400
    %v4025 = vunpack.c.h.b16 %v3400
    %v4026 = vunpack.c.l.b16 %v3401
    %v4027 = vunpack.c.h.b16 %v3401
    %v4028 = vunpack.c.l.b16 %v3402
    %v4029 = vunpack.c.h.b16 %v3402
    %v4030 = vunpack.c.l.b16 %v3403
    %v4031 = vunpack.c.h.b16 %v3403
    %v4032 = vunpack.c.l.b16 %v3404
    %v4033 = vunpack.c.h.b16 %v3404
    %v4034 = vunpack.c.l.b16 %v3405
    %v4035 = vunpack.c.h.b16 %v3405
    %v4036 = vunpack.c.l.b16 %v3406
    %v4037 = vunpack.c.h.b16 %v3406
    %v4038 = vunpack.c.l.b16 %v3407
    %v4039 = vunpack.c.h.b16 %v3407
    %v4040 = vunpack.c.l.b16 %v3408
    %v4041 = vunpack.c.h.b16 %v3408
    %v4042 = vunpack.c.l.b16 %v3409
    %v4043 = vunpack.c.h.b16 %v3409
    %v4044 = vunpack.c.l.b16 %v3410
    %v4045 = vunpack.c.h.b16 %v3410
    %v4046 = vunpack.c.l.b16 %v3411
    %v4047 = vunpack.c.h.b16 %v3411
    %v4048 = vunpack.c.l.b16 %v3412
    %v4049 = vunpack.c.h.b16 %v3412
    %v4050 = vunpack.c.l.b16 %v3413
    %v4051 = vunpack.c.h.b16 %v3413
    %v4052 = vunpack.c.l.b16 %v3414
    %v4053 = vunpack.c.h.b16 %v3414
    %v4054 = vunpack.c.l.b16 %v3415
    %v4055 = vunpack.c.h.b16 %v3415
    %v4056 = vunpack.c.l.b16 %v3416
    %v4057 = vunpack.c.h.b16 %v3416
    %v4058 = vunpack.c.l.b16 %v3417
    %v4059 = vunpack.c.h.b16 %v3417
    %v4060 = vunpack.c.l.b16 %v3418
    %v4061 = vunpack.c.h.b16 %v3418
    %v4062 = vunpack.c.l.b16 %v3419
    %v4063 = vunpack.c.h.b16 %v3419
    %v4064 = vunpack.c.l.b16 %v3420
    %v4065 = vunpack.c.h.b16 %v3420
    %v4066 = vunpack.c.l.b16 %v3421
    %v4067 = vunpack.c.h.b16 %v3421
    %v4068 = vunpack.c.l.b16 %v3422
    %v4069 = vunpack.c.h.b16 %v3422
    %v4070 = vunpack.c.l.b16 %v3423
    %v4071 = vunpack.c.h.b16 %v3423
    %v4072 = vunpack.c.l.b16 %v3424
    %v4073 = vunpack.c.h.b16 %v3424
    %v4074 = vunpack.c.l.b16 %v3425
    %v4075 = vunpack.c.h.b16 %v3425
    %v4076 = vunpack.c.l.b16 %v3426
    %v4077 = vunpack.c.h.b16 %v3426
    %v4078 = vunpack.c.l.b16 %v3427
    %v4079 = vunpack.c.h.b16 %v3427
    %v4080 = vunpack.c.l.b16 %v3428
    %v4081 = vunpack.c.h.b16 %v3428
    %v4082 = vunpack.c.l.b16 %v3429
    %v4083 = vunpack.c.h.b16 %v3429
    %v4084 = vunpack.c.l.b16 %v3430
    %v4085 = vunpack.c.h.b16 %v3430
    %v4086 = vunpack.c.l.b16 %v3431
    %v4087 = vunpack.c.h.b16 %v3431
    %v4088 = vunpack.c.l.b16 %v3432
    %v4089 = vunpack.c.h.b16 %v3432
    %v4090 = vunpack.c.l.b16 %v3433
    %v4091 = vunpack.c.h.b16 %v3433
    %v4092 = vunpack.c.l.b16 %v3434
    %v4093 = vunpack.c.h.b16 %v3434
    %v4094 = vunpack.c.l.b16 %v3435
    %v4095 = vunpack.c.h.b16 %v3435
    %v4096 = vunpack.c.l.b16 %v3436
    %v4097 = vunpack.c.h.b16 %v3436
    %v4098 = vunpack.c.l.b16 %v3437
    %v4099 = vunpack.c.h.b16 %v3437
    %v4100 = vunpack.c.l.b16 %v3438
    %v4101 = vunpack.c.h.b16 %v3438
    %v4102 = vunpack.c.l.b16 %v3439
    %v4103 = vunpack.c.h.b16 %v3439
    %v4104 = vunpack.c.l.b16 %v3440
    %v4105 = vunpack.c.h.b16 %v3440
    %v4106 = vunpack.c.l.b16 %v3441
    %v4107 = vunpack.c.h.b16 %v3441
    %v4108 = vunpack.c.l.b16 %v3442
    %v4109 = vunpack.c.h.b16 %v3442
    %v4110 = vunpack.c.l.b16 %v3443
    %v4111 = vunpack.c.h.b16 %v3443
    %v4112 = vunpack.c.l.b16 %v3444
    %v4113 = vunpack.c.h.b16 %v3444
    %v4114 = vunpack.c.l.b16 %v3445
    %v4115 = vunpack.c.h.b16 %v3445
    %v4116 = vunpack.c.l.b16 %v3446
    %v4117 = vunpack.c.h.b16 %v3446
    %v4118 = vunpack.c.l.b16 %v3447
    %v4119 = vunpack.c.h.b16 %v3447
    %v4120 = vunpack.c.l.b16 %v3448
    %v4121 = vunpack.c.h.b16 %v3448
    %v4122 = vunpack.c.l.b16 %v3449
    %v4123 = vunpack.c.h.b16 %v3449
    %v4124 = vunpack.c.l.b16 %v3450
    %v4125 = vunpack.c.h.b16 %v3450
    %v4126 = vunpack.c.l.b16 %v3451
    %v4127 = vunpack.c.h.b16 %v3451
    %v4128 = vunpack.c.l.b16 %v3452
    %v4129 = vunpack.c.h.b16 %v3452
    %v4130 = vunpack.c.l.b16 %v3453
    %v4131 = vunpack.c.h.b16 %v3453
    %v4132 = vunpack.c.l.b16 %v3454
    %v4133 = vunpack.c.h.b16 %v3454
    %v4134 = vunpack.c.l.b16 %v3455
    %v4135 = vunpack.c.h.b16 %v3455
    %v4136 = vunpack.c.l.b16 %v3456
    %v4137 = vunpack.c.h.b16 %v3456
    %v4138 = vunpack.c.l.b16 %v3457
    %v4139 = vunpack.c.h.b16 %v3457
    %v4140 = vunpack.c.l.b16 %v3458
    %v4141 = vunpack.c.h.b16 %v3458
    %v4142 = vunpack.c.l.b16 %v3459
    %v4143 = vunpack.c.h.b16 %v3459
    %v4144 = vunpack.c.l.b16 %v3460
    %v4145 = vunpack.c.h.b16 %v3460
    %v4146 = vunpack.c.l.b16 %v3461
    %v4147 = vunpack.c.h.b16 %v3461
    %v4148 = vunpack.c.l.b16 %v3462
    %v4149 = vunpack.c.h.b16 %v3462
    %v4150 = vunpack.c.l.b16 %v3463
    %v4151 = vunpack.c.h.b16 %v3463
    %v4152 = vunpack.c.l.b16 %v3464
    %v4153 = vunpack.c.h.b16 %v3464
    %v4154 = vunpack.c.l.b16 %v3465
    %v4155 = vunpack.c.h.b16 %v3465
    %v4156 = vunpack.c.l.b16 %v3466
    %v4157 = vunpack.c.h.b16 %v3466
    %v4158 = vunpack.c.l.b16 %v3467
    %v4159 = vunpack.c.h.b16 %v3467
    %v4160 = vunpack.c.l.b16 %v3468
    %v4161 = vunpack.c.h.b16 %v3468
    %v4162 = vunpack.c.l.b16 %v3469
    %v4163 = vunpack.c.h.b16 %v3469
    %v4164 = vunpack.c.l.b16 %v3470
    %v4165 = vunpack.c.h.b16 %v3470
    %v4166 = vunpack.c.l.b16 %v3471
    %v4167 = vunpack.c.h.b16 %v3471
    %v4168 = vunpack.c.l.b16 %v3472
    %v4169 = vunpack.c.h.b16 %v3472
    %v4170 = vunpack.c.l.b16 %v3473
    %v4171 = vunpack.c.h.b16 %v3473
    %v4172 = vunpack.c.l.b16 %v3474
    %v4173 = vunpack.c.h.b16 %v3474
    %v4174 = vunpack.c.l.b16 %v3475
    %v4175 = vunpack.c.h.b16 %v3475
    %v4176 = vunpack.c.l.b16 %v3476
    %v4177 = vunpack.c.h.b16 %v3476
    %v4178 = vunpack.c.l.b16 %v3477
    %v4179 = vunpack.c.h.b16 %v3477
    %v4180 = vunpack.c.l.b16 %v3478
    %v4181 = vunpack.c.h.b16 %v3478
    %v4182 = vunpack.c.l.b16 %v3479
    %v4183 = vunpack.c.h.b16 %v3479
    %v4184 = vunpack.c.l.b16 %v3480
    %v4185 = vunpack.c.h.b16 %v3480
    %v4186 = vunpack.c.l.b16 %v3481
    %v4187 = vunpack.c.h.b16 %v3481
    %v4188 = vunpack.c.l.b16 %v3482
    %v4189 = vunpack.c.h.b16 %v3482
    %v4190 = vunpack.c.l.b16 %v3483
    %v4191 = vunpack.c.h.b16 %v3483
    %v4192 = vunpack.c.l.b16 %v3484
    %v4193 = vunpack.c.h.b16 %v3484
    %v4194 = vunpack.c.l.b16 %v3485
    %v4195 = vunpack.c.h.b16 %v3485
    %v4196 = vunpack.c.l.b16 %v3486
    %v4197 = vunpack.c.h.b16 %v3486
    %v4198 = vunpack.c.l.b16 %v3487
    %v4199 = vunpack.c.h.b16 %v3487
    %v4200 = vunpack.c.l.b16 %v3488
    %v4201 = vunpack.c.h.b16 %v3488
    %v4202 = vunpack.c.l.b16 %v3489
    %v4203 = vunpack.c.h.b16 %v3489
    %v4204 = vunpack.c.l.b16 %v3490
    %v4205 = vunpack.c.h.b16 %v3490
    %v4206 = vunpack.c.l.b16 %v3491
    %v4207 = vunpack.c.h.b16 %v3491
    %v4208 = vunpack.c.l.b16 %v3492
    %v4209 = vunpack.c.h.b16 %v3492
    %v4210 = vunpack.c.l.b16 %v3493
    %v4211 = vunpack.c.h.b16 %v3493
    %v4212 = vunpack.c.l.b16 %v3494
    %v4213 = vunpack.c.h.b16 %v3494
    %v4214 = vunpack.c.l.b16 %v3495
    %v4215 = vunpack.c.h.b16 %v3495
    %v4216 = vunpack.c.l.b16 %v3496
    %v4217 = vunpack.c.h.b16 %v3496
    %v4218 = vunpack.c.l.b16 %v3497
    %v4219 = vunpack.c.h.b16 %v3497
    %v4220 = vunpack.c.l.b16 %v3498
    %v4221 = vunpack.c.h.b16 %v3498
    %v4222 = vunpack.c.l.b16 %v3499
    %v4223 = vunpack.c.h.b16 %v3499
    %v4224 = vunpack.c.l.b16 %v3500
    %v4225 = vunpack.c.h.b16 %v3500
    %v4226 = vunpack.c.l.b16 %v3501
    %v4227 = vunpack.c.h.b16 %v3501
    %v4228 = vunpack.c.l.b16 %v3502
    %v4229 = vunpack.c.h.b16 %v3502
    %v4230 = vunpack.c.l.b16 %v3503
    %v4231 = vunpack.c.h.b16 %v3503
    %v4232 = vunpack.c.l.b16 %v3504
    %v4233 = vunpack.c.h.b16 %v3504
    %v4234 = vunpack.c.l.b16 %v3505
    %v4235 = vunpack.c.h.b16 %v3505
    %v4236 = vunpack.c.l.b16 %v3506
    %v4237 = vunpack.c.h.b16 %v3506
    %v4238 = vunpack.c.l.b16 %v3507
    %v4239 = vunpack.c.h.b16 %v3507
    %v4240 = vunpack.c.l.b16 %v3508
    %v4241 = vunpack.c.h.b16 %v3508
    %v4242 = vunpack.c.l.b16 %v3509
    %v4243 = vunpack.c.h.b16 %v3509
    %v4244 = vunpack.c.l.b16 %v3510
    %v4245 = vunpack.c.h.b16 %v3510
    %v4246 = vunpack.c.l.b16 %v3511
    %v4247 = vunpack.c.h.b16 %v3511
    %v4248 = vunpack.c.l.b16 %v3512
    %v4249 = vunpack.c.h.b16 %v3512
    %v4250 = vunpack.c.l.b16 %v3513
    %v4251 = vunpack.c.h.b16 %v3513
    %v4252 = vunpack.c.l.b16 %v3514
    %v4253 = vunpack.c.h.b16 %v3514
    %v4254 = vunpack.c.l.b16 %v3515
    %v4255 = vunpack.c.h.b16 %v3515
    %v4256 = vunpack.c.l.b16 %v3516
    %v4257 = vunpack.c.h.b16 %v3516
    %v4258 = vunpack.c.l.b16 %v3517
    %v4259 = vunpack.c.h.b16 %v3517
    %v4260 = vunpack.c.l.b16 %v3518
    %v4261 = vunpack.c.h.b16 %v3518
    %v4262 = vunpack.c.l.b16 %v3519
    %v4263 = vunpack.c.h.b16 %v3519
    %v4264 = vunpack.c.l.b16 %v3520
    %v4265 = vunpack.c.h.b16 %v3520
    %v4266 = vunpack.c.l.b16 %v3521
    %v4267 = vunpack.c.h.b16 %v3521
    %v4268 = vunpack.c.l.b16 %v3522
    %v4269 = vunpack.c.h.b16 %v3522
    %v4270 = vunpack.c.l.b16 %v3523
    %v4271 = vunpack.c.h.b16 %v3523
    %v4272 = vunpack.c.l.b16 %v3524
    %v4273 = vunpack.c.h.b16 %v3524
    %v4274 = vunpack.c.l.b16 %v3525
    %v4275 = vunpack.c.h.b16 %v3525
    %v4276 = vunpack.c.l.b16 %v3526
    %v4277 = vunpack.c.h.b16 %v3526
    %v4278 = vunpack.c.l.b16 %v3527
    %v4279 = vunpack.c.h.b16 %v3527
    %v4280 = vunpack.c.l.b16 %v3528
    %v4281 = vunpack.c.h.b16 %v3528
    %v4282 = vunpack.c.l.b16 %v3529
    %v4283 = vunpack.c.h.b16 %v3529
    %v4284 = vunpack.c.l.b16 %v3530
    %v4285 = vunpack.c.h.b16 %v3530
    %v4286 = vunpack.c.l.b16 %v3531
    %v4287 = vunpack.c.h.b16 %v3531
    %v4288 = vunpack.c.l.b16 %v3532
    %v4289 = vunpack.c.h.b16 %v3532
    %v4290 = vunpack.c.l.b16 %v3533
    %v4291 = vunpack.c.h.b16 %v3533
    %v4292 = vunpack.c.l.b16 %v3534
    %v4293 = vunpack.c.h.b16 %v3534
    %v4294 = vunpack.c.l.b16 %v3535
    %v4295 = vunpack.c.h.b16 %v3535
    %v4296 = vunpack.c.l.b16 %v3536
    %v4297 = vunpack.c.h.b16 %v3536
    %v4298 = vunpack.c.l.b16 %v3537
    %v4299 = vunpack.c.h.b16 %v3537
    %v4300 = vunpack.c.l.b16 %v3538
    %v4301 = vunpack.c.h.b16 %v3538
    %v4302 = vunpack.c.l.b16 %v3539
    %v4303 = vunpack.c.h.b16 %v3539
    %v4304 = vunpack.c.l.b16 %v3540
    %v4305 = vunpack.c.h.b16 %v3540
    %v4306 = vunpack.c.l.b16 %v3541
    %v4307 = vunpack.c.h.b16 %v3541
    %v4308 = vunpack.c.l.b16 %v3542
    %v4309 = vunpack.c.h.b16 %v3542
    %v4310 = vunpack.c.l.b16 %v3543
    %v4311 = vunpack.c.h.b16 %v3543
    %v4312 = vunpack.c.l.b16 %v3544
    %v4313 = vunpack.c.h.b16 %v3544
    %v4314 = vunpack.c.l.b16 %v3545
    %v4315 = vunpack.c.h.b16 %v3545
    %v4316 = vunpack.c.l.b16 %v3546
    %v4317 = vunpack.c.h.b16 %v3546
    %v4318 = vunpack.c.l.b16 %v3547
    %v4319 = vunpack.c.h.b16 %v3547
    %v4320 = vunpack.c.l.b16 %v3548
    %v4321 = vunpack.c.h.b16 %v3548
    %v4322 = vunpack.c.l.b16 %v3549
    %v4323 = vunpack.c.h.b16 %v3549
    %v4324 = vunpack.c.l.b16 %v3550
    %v4325 = vunpack.c.h.b16 %v3550
    %v4326 = vunpack.c.l.b16 %v3551
    %v4327 = vunpack.c.h.b16 %v3551
    %v4328 = vunpack.c.l.b16 %v3552
    %v4329 = vunpack.c.h.b16 %v3552
    %v4330 = vunpack.c.l.b16 %v3553
    %v4331 = vunpack.c.h.b16 %v3553
    %v4332 = vpack.c.b16 %v3824, %v3820
    %v4333 = vpack.c.b16 %v3825, %v3821
    %v4334 = vpack.c.b16 %v3826, %v3822
    %v4335 = vpack.c.b16 %v3827, %v3823
    %v4336 = vpack.c.b16 %v3832, %v3828
    %v4337 = vpack.c.b16 %v3833, %v3829
    %v4338 = vpack.c.b16 %v3834, %v3830
    %v4339 = vpack.c.b16 %v3835, %v3831
    %v4340 = vpack.c.b16 %v3840, %v3836
    %v4341 = vpack.c.b16 %v3841, %v3837
    %v4342 = vpack.c.b16 %v3842, %v3838
    %v4343 = vpack.c.b16 %v3843, %v3839
    %v4344 = vpack.c.b16 %v3848, %v3844
    %v4345 = vpack.c.b16 %v3849, %v3845
    %v4346 = vpack.c.b16 %v3850, %v3846
    %v4347 = vpack.c.b16 %v3851, %v3847
    %v4348 = vpack.c.b16 %v3856, %v3852
    %v4349 = vpack.c.b16 %v3857, %v3853
    %v4350 = vpack.c.b16 %v3858, %v3854
    %v4351 = vpack.c.b16 %v3859, %v3855
    %v4352 = vpack.c.b16 %v3864, %v3860
    %v4353 = vpack.c.b16 %v3865, %v3861
    %v4354 = vpack.c.b16 %v3866, %v3862
    %v4355 = vpack.c.b16 %v3867, %v3863
    %v4356 = vpack.c.b16 %v3872, %v3868
    %v4357 = vpack.c.b16 %v3873, %v3869
    %v4358 = vpack.c.b16 %v3874, %v3870
    %v4359 = vpack.c.b16 %v3875, %v3871
    %v4360 = vpack.c.b16 %v3880, %v3876
    %v4361 = vpack.c.b16 %v3881, %v3877
    %v4362 = vpack.c.b16 %v3882, %v3878
    %v4363 = vpack.c.b16 %v3883, %v3879
    %v4364 = vpack.c.b16 %v3888, %v3884
    %v4365 = vpack.c.b16 %v3889, %v3885
    %v4366 = vpack.c.b16 %v3890, %v3886
    %v4367 = vpack.c.b16 %v3891, %v3887
    %v4368 = vpack.c.b16 %v3896, %v3892
    %v4369 = vpack.c.b16 %v3897, %v3893
    %v4370 = vpack.c.b16 %v3898, %v3894
    %v4371 = vpack.c.b16 %v3899, %v3895
    %v4372 = vpack.c.b16 %v3904, %v3900
    %v4373 = vpack.c.b16 %v3905, %v3901
    %v4374 = vpack.c.b16 %v3906, %v3902
    %v4375 = vpack.c.b16 %v3907, %v3903
    %v4376 = vpack.c.b16 %v3912, %v3908
    %v4377 = vpack.c.b16 %v3913, %v3909
    %v4378 = vpack.c.b16 %v3914, %v3910
    %v4379 = vpack.c.b16 %v3915, %v3911
    %v4380 = vpack.c.b16 %v3920, %v3916
    %v4381 = vpack.c.b16 %v3921, %v3917
    %v4382 = vpack.c.b16 %v3922, %v3918
    %v4383 = vpack.c.b16 %v3923, %v3919
    %v4384 = vpack.c.b16 %v3928, %v3924
    %v4385 = vpack.c.b16 %v3929, %v3925
    %v4386 = vpack.c.b16 %v3930, %v3926
    %v4387 = vpack.c.b16 %v3931, %v3927
    %v4388 = vpack.c.b16 %v3936, %v3932
    %v4389 = vpack.c.b16 %v3937, %v3933
    %v4390 = vpack.c.b16 %v3938, %v3934
    %v4391 = vpack.c.b16 %v3939, %v3935
    %v4392 = vpack.c.b16 %v3944, %v3940
    %v4393 = vpack.c.b16 %v3945, %v3941
    %v4394 = vpack.c.b16 %v3946, %v3942
    %v4395 = vpack.c.b16 %v3947, %v3943
    %v4396 = vpack.c.b16 %v3952, %v3948
    %v4397 = vpack.c.b16 %v3953, %v3949
    %v4398 = vpack.c.b16 %v3954, %v3950
    %v4399 = vpack.c.b16 %v3955, %v3951
    %v4400 = vpack.c.b16 %v3960, %v3956
    %v4401 = vpack.c.b16 %v3961, %v3957
    %v4402 = vpack.c.b16 %v3962, %v3958
    %v4403 = vpack.c.b16 %v3963, %v3959
    %v4404 = vpack.c.b16 %v3968, %v3964
    %v4405 = vpack.c.b16 %v3969, %v3965
    %v4406 = vpack.c.b16 %v3970, %v3966
    %v4407 = vpack.c.b16 %v3971, %v3967
    %v4408 = vpack.c.b16 %v3976, %v3972
    %v4409 = vpack.c.b16 %v3977, %v3973
    %v4410 = vpack.c.b16 %v3978, %v3974
    %v4411 = vpack.c.b16 %v3979, %v3975
    %v4412 = vpack.c.b16 %v3984, %v3980
    %v4413 = vpack.c.b16 %v3985, %v3981
    %v4414 = vpack.c.b16 %v3986, %v3982
    %v4415 = vpack.c.b16 %v3987, %v3983
    %v4416 = vpack.c.b16 %v3992, %v3988
    %v4417 = vpack.c.b16 %v3993, %v3989
    %v4418 = vpack.c.b16 %v3994, %v3990
    %v4419 = vpack.c.b16 %v3995, %v3991
    %v4420 = vpack.c.b16 %v4000, %v3996
    %v4421 = vpack.c.b16 %v4001, %v3997
    %v4422 = vpack.c.b16 %v4002, %v3998
    %v4423 = vpack.c.b16 %v4003, %v3999
    %v4424 = vpack.c.b16 %v4008, %v4004
    %v4425 = vpack.c.b16 %v4009, %v4005
    %v4426 = vpack.c.b16 %v4010, %v4006
    %v4427 = vpack.c.b16 %v4011, %v4007
    %v4428 = vpack.c.b16 %v4016, %v4012
    %v4429 = vpack.c.b16 %v4017, %v4013
    %v4430 = vpack.c.b16 %v4018, %v4014
    %v4431 = vpack.c.b16 %v4019, %v4015
    %v4432 = vpack.c.b16 %v4024, %v4020
    %v4433 = vpack.c.b16 %v4025, %v4021
    %v4434 = vpack.c.b16 %v4026, %v4022
    %v4435 = vpack.c.b16 %v4027, %v4023
    %v4436 = vpack.c.b16 %v4032, %v4028
    %v4437 = vpack.c.b16 %v4033, %v4029
    %v4438 = vpack.c.b16 %v4034, %v4030
    %v4439 = vpack.c.b16 %v4035, %v4031
    %v4440 = vpack.c.b16 %v4040, %v4036
    %v4441 = vpack.c.b16 %v4041, %v4037
    %v4442 = vpack.c.b16 %v4042, %v4038
    %v4443 = vpack.c.b16 %v4043, %v4039
    %v4444 = vpack.c.b16 %v4048, %v4044
    %v4445 = vpack.c.b16 %v4049, %v4045
    %v4446 = vpack.c.b16 %v4050, %v4046
    %v4447 = vpack.c.b16 %v4051, %v4047
    %v4448 = vpack.c.b16 %v4056, %v4052
    %v4449 = vpack.c.b16 %v4057, %v4053
    %v4450 = vpack.c.b16 %v4058, %v4054
    %v4451 = vpack.c.b16 %v4059, %v4055
    %v4452 = vpack.c.b16 %v4064, %v4060
    %v4453 = vpack.c.b16 %v4065, %v4061
    %v4454 = vpack.c.b16 %v4066, %v4062
    %v4455 = vpack.c.b16 %v4067, %v4063
    %v4456 = vpack.c.b16 %v4072, %v4068
    %v4457 = vpack.c.b16 %v4073, %v4069
    %v4458 = vpack.c.b16 %v4074, %v4070
    %v4459 = vpack.c.b16 %v4075, %v4071
    %v4460 = vpack.c.b16 %v4080, %v4076
    %v4461 = vpack.c.b16 %v4081, %v4077
    %v4462 = vpack.c.b16 %v4082, %v4078
    %v4463 = vpack.c.b16 %v4083, %v4079
    %v4464 = vpack.c.b16 %v4088, %v4084
    %v4465 = vpack.c.b16 %v4089, %v4085
    %v4466 = vpack.c.b16 %v4090, %v4086
    %v4467 = vpack.c.b16 %v4091, %v4087
    %v4468 = vpack.c.b16 %v4096, %v4092
    %v4469 = vpack.c.b16 %v4097, %v4093
    %v4470 = vpack.c.b16 %v4098, %v4094
    %v4471 = vpack.c.b16 %v4099, %v4095
    %v4472 = vpack.c.b16 %v4104, %v4100
    %v4473 = vpack.c.b16 %v4105, %v4101
    %v4474 = vpack.c.b16 %v4106, %v4102
    %v4475 = vpack.c.b16 %v4107, %v4103
    %v4476 = vpack.c.b16 %v4112, %v4108
    %v4477 = vpack.c.b16 %v4113, %v4109
    %v4478 = vpack.c.b16 %v4114, %v4110
    %v4479 = vpack.c.b16 %v4115, %v4111
    %v4480 = vpack.c.b16 %v4120, %v4116
    %v4481 = vpack.c.b16 %v4121, %v4117
    %v4482 = vpack.c.b16 %v4122, %v4118
    %v4483 = vpack.c.b16 %v4123, %v4119
    %v4484 = vpack.c.b16 %v4128, %v4124
    %v4485 = vpack.c.b16 %v4129, %v4125
    %v4486 = vpack.c.b16 %v4130, %v4126
    %v4487 = vpack.c.b16 %v4131, %v4127
    %v4488 = vpack.c.b16 %v4136, %v4132
    %v4489 = vpack.c.b16 %v4137, %v4133
    %v4490 = vpack.c.b16 %v4138, %v4134
    %v4491 = vpack.c.b16 %v4139, %v4135
    %v4492 = vpack.c.b16 %v4144, %v4140
    %v4493 = vpack.c.b16 %v4145, %v4141
    %v4494 = vpack.c.b16 %v4146, %v4142
    %v4495 = vpack.c.b16 %v4147, %v4143
    %v4496 = vpack.c.b16 %v4152, %v4148
    %v4497 = vpack.c.b16 %v4153, %v4149
    %v4498 = vpack.c.b16 %v4154, %v4150
    %v4499 = vpack.c.b16 %v4155, %v4151
    %v4500 = vpack.c.b16 %v4160, %v4156
    %v4501 = vpack.c.b16 %v4161, %v4157
    %v4502 = vpack.c.b16 %v4162, %v4158
    %v4503 = vpack.c.b16 %v4163, %v4159
    %v4504 = vpack.c.b16 %v4168, %v4164
    %v4505 = vpack.c.b16 %v4169, %v4165
    %v4506 = vpack.c.b16 %v4170, %v4166
    %v4507 = vpack.c.b16 %v4171, %v4167
    %v4508 = vpack.c.b16 %v4176, %v4172
    %v4509 = vpack.c.b16 %v4177, %v4173
    %v4510 = vpack.c.b16 %v4178, %v4174
    %v4511 = vpack.c.b16 %v4179, %v4175
    %v4512 = vpack.c.b16 %v4184, %v4180
    %v4513 = vpack.c.b16 %v4185, %v4181
    %v4514 = vpack.c.b16 %v4186, %v4182
    %v4515 = vpack.c.b16 %v4187, %v4183
    %v4516 = vpack.c.b16 %v4192, %v4188
    %v4517 = vpack.c.b16 %v4193, %v4189
    %v4518 = vpack.c.b16 %v4194, %v4190
    %v4519 = vpack.c.b16 %v4195, %v4191
    %v4520 = vpack.c.b16 %v4200, %v4196
    %v4521 = vpack.c.b16 %v4201, %v4197
    %v4522 = vpack.c.b16 %v4202, %v4198
    %v4523 = vpack.c.b16 %v4203, %v4199
    %v4524 = vpack.c.b16 %v4208, %v4204
    %v4525 = vpack.c.b16 %v4209, %v4205
    %v4526 = vpack.c.b16 %v4210, %v4206
    %v4527 = vpack.c.b16 %v4211, %v4207
    %v4528 = vpack.c.b16 %v4216, %v4212
    %v4529 = vpack.c.b16 %v4217, %v4213
    %v4530 = vpack.c.b16 %v4218, %v4214
    %v4531 = vpack.c.b16 %v4219, %v4215
    %v4532 = vpack.c.b16 %v4224, %v4220
    %v4533 = vpack.c.b16 %v4225, %v4221
    %v4534 = vpack.c.b16 %v4226, %v4222
    %v4535 = vpack.c.b16 %v4227, %v4223
    %v4536 = vpack.c.b16 %v4232, %v4228
    %v4537 = vpack.c.b16 %v4233, %v4229
    %v4538 = vpack.c.b16 %v4234, %v4230
    %v4539 = vpack.c.b16 %v4235, %v4231
    %v4540 = vpack.c.b16 %v4240, %v4236
    %v4541 = vpack.c.b16 %v4241, %v4237
    %v4542 = vpack.c.b16 %v4242, %v4238
    %v4543 = vpack.c.b16 %v4243, %v4239
    %v4544 = vpack.c.b16 %v4248, %v4244
    %v4545 = vpack.c.b16 %v4249, %v4245
    %v4546 = vpack.c.b16 %v4250, %v4246
    %v4547 = vpack.c.b16 %v4251, %v4247
    %v4548 = vpack.c.b16 %v4256, %v4252
    %v4549 = vpack.c.b16 %v4257, %v4253
    %v4550 = vpack.c.b16 %v4258, %v4254
    %v4551 = vpack.c.b16 %v4259, %v4255
    %v4552 = vpack.c.b16 %v4264, %v4260
    %v4553 = vpack.c.b16 %v4265, %v4261
    %v4554 = vpack.c.b16 %v4266, %v4262
    %v4555 = vpack.c.b16 %v4267, %v4263
    %v4556 = vpack.c.b16 %v4272, %v4268
    %v4557 = vpack.c.b16 %v4273, %v4269
    %v4558 = vpack.c.b16 %v4274, %v4270
    %v4559 = vpack.c.b16 %v4275, %v4271
    %v4560 = vpack.c.b16 %v4280, %v4276
    %v4561 = vpack.c.b16 %v4281, %v4277
    %v4562 = vpack.c.b16 %v4282, %v4278
    %v4563 = vpack.c.b16 %v4283, %v4279
    %v4564 = vpack.c.b16 %v4288, %v4284
    %v4565 = vpack.c.b16 %v4289, %v4285
    %v4566 = vpack.c.b16 %v4290, %v4286
    %v4567 = vpack.c.b16 %v4291, %v4287
    %v4568 = vpack.c.b16 %v4296, %v4292
    %v4569 = vpack.c.b16 %v4297, %v4293
    %v4570 = vpack.c.b16 %v4298, %v4294
    %v4571 = vpack.c.b16 %v4299, %v4295
    %v4572 = vpack.c.b16 %v4304, %v4300
    %v4573 = vpack.c.b16 %v4305, %v4301
    %v4574 = vpack.c.b16 %v4306, %v4302
    %v4575 = vpack.c.b16 %v4307, %v4303
    %v4576 = vpack.c.b16 %v4312, %v4308
    %v4577 = vpack.c.b16 %v4313, %v4309
    %v4578 = vpack.c.b16 %v4314, %v4310
    %v4579 = vpack.c.b16 %v4315, %v4311
    %v4580 = vpack.c.b16 %v4320, %v4316
    %v4581 = vpack.c.b16 %v4321, %v4317
    %v4582 = vpack.c.b16 %v4322, %v4318
    %v4583 = vpack.c.b16 %v4323, %v4319
    %v4584 = vpack.c.b16 %v4328, %v4324
    %v4585 = vpack.c.b16 %v4329, %v4325
    %v4586 = vpack.c.b16 %v4330, %v4326
    %v4587 = vpack.c.b16 %v4331, %v4327
    %4844 = vmatpush.bf16.msra.mxu0 %v4360
    %4845 = vmatpush.bf16.msra.mxu0 %v4356
    %4846 = vmatpush.bf16.msra.mxu0 %v4352
    %4847 = vmatpush.bf16.msra.mxu0 %v4348
    %4848 = vmatpush.bf16.msra.mxu0 %v4344
    %4849 = vmatpush.bf16.msra.mxu0 %v4340
    %4850 = vmatpush.bf16.msra.mxu0 %v4336
    %4851 = vmatpush.bf16.msra.mxu0 %v4332
    %4852 = vmatmul.bf16.gmra.mxu0 %v3290
    %v4853 = vpop.f32.mrf.mxu0
    %v4854 = vadd.f32 %v3556, %v4853
    %v4855 = vpop.f32.mrf.mxu0
    %4856 = vdwg.mxu0
    %4857 = vmatpush.bf16.msra.mxu0 %v4392
    %4858 = vmatpush.bf16.msra.mxu0 %v4388
    %4859 = vmatpush.bf16.msra.mxu0 %v4384
    %4860 = vmatpush.bf16.msra.mxu0 %v4380
    %4861 = vmatpush.bf16.msra.mxu0 %v4376
    %4862 = vmatpush.bf16.msra.mxu0 %v4372
    %4863 = vmatpush.bf16.msra.mxu0 %v4368
    %4864 = vmatpush.bf16.msra.mxu0 %v4364
    %4865 = vmatmul.bf16.gmra.mxu0 %v3291
    %v4866 = vpop.f32.mrf.mxu0
    %v4867 = vadd.f32 %v4854, %v4866
    %v4868 = vpop.f32.mrf.mxu0
    %4869 = vdwg.mxu0
    %4870 = vmatpush.bf16.msra.mxu0 %v4424
    %4871 = vmatpush.bf16.msra.mxu0 %v4420
    %4872 = vmatpush.bf16.msra.mxu0 %v4416
    %4873 = vmatpush.bf16.msra.mxu0 %v4412
    %4874 = vmatpush.bf16.msra.mxu0 %v4408
    %4875 = vmatpush.bf16.msra.mxu0 %v4404
    %4876 = vmatpush.bf16.msra.mxu0 %v4400
    %4877 = vmatpush.bf16.msra.mxu0 %v4396
    %4878 = vmatmul.bf16.gmra.mxu0 %v3292
    %v4879 = vpop.f32.mrf.mxu0
    %v4880 = vadd.f32 %v4867, %v4879
    %v4881 = vpop.f32.mrf.mxu0
    %4882 = vdwg.mxu0
    %4883 = vmatpush.bf16.msra.mxu0 %v4456
    %4884 = vmatpush.bf16.msra.mxu0 %v4452
    %4885 = vmatpush.bf16.msra.mxu0 %v4448
    %4886 = vmatpush.bf16.msra.mxu0 %v4444
    %4887 = vmatpush.bf16.msra.mxu0 %v4440
    %4888 = vmatpush.bf16.msra.mxu0 %v4436
    %4889 = vmatpush.bf16.msra.mxu0 %v4432
    %4890 = vmatpush.bf16.msra.mxu0 %v4428
    %4891 = vmatmul.bf16.gmra.mxu0 %v3293
    %v4892 = vpop.f32.mrf.mxu0
    %v4893 = vadd.f32 %v4880, %v4892
    %v4894 = vpop.f32.mrf.mxu0
    %4895 = vdwg.mxu0
    %4896 = vmatpush.bf16.msra.mxu0 %v4488
    %4897 = vmatpush.bf16.msra.mxu0 %v4484
    %4898 = vmatpush.bf16.msra.mxu0 %v4480
    %4899 = vmatpush.bf16.msra.mxu0 %v4476
    %4900 = vmatpush.bf16.msra.mxu0 %v4472
    %4901 = vmatpush.bf16.msra.mxu0 %v4468
    %4902 = vmatpush.bf16.msra.mxu0 %v4464
    %4903 = vmatpush.bf16.msra.mxu0 %v4460
    %4904 = vmatmul.bf16.gmra.mxu0 %v3294
    %v4905 = vpop.f32.mrf.mxu0
    %v4906 = vadd.f32 %v4893, %v4905
    %v4907 = vpop.f32.mrf.mxu0
    %4908 = vdwg.mxu0
    %4909 = vmatpush.bf16.msra.mxu0 %v4520
    %4910 = vmatpush.bf16.msra.mxu0 %v4516
    %4911 = vmatpush.bf16.msra.mxu0 %v4512
    %4912 = vmatpush.bf16.msra.mxu0 %v4508
    %4913 = vmatpush.bf16.msra.mxu0 %v4504
    %4914 = vmatpush.bf16.msra.mxu0 %v4500
    %4915 = vmatpush.bf16.msra.mxu0 %v4496
    %4916 = vmatpush.bf16.msra.mxu0 %v4492
    %4917 = vmatmul.bf16.gmra.mxu0 %v3295
    %v4918 = vpop.f32.mrf.mxu0
    %v4919 = vadd.f32 %v4906, %v4918
    %v4920 = vpop.f32.mrf.mxu0
    %4921 = vdwg.mxu0
    %4922 = vmatpush.bf16.msra.mxu0 %v4552
    %4923 = vmatpush.bf16.msra.mxu0 %v4548
    %4924 = vmatpush.bf16.msra.mxu0 %v4544
    %4925 = vmatpush.bf16.msra.mxu0 %v4540
    %4926 = vmatpush.bf16.msra.mxu0 %v4536
    %4927 = vmatpush.bf16.msra.mxu0 %v4532
    %4928 = vmatpush.bf16.msra.mxu0 %v4528
    %4929 = vmatpush.bf16.msra.mxu0 %v4524
    %4930 = vmatmul.bf16.gmra.mxu0 %v3296
    %v4931 = vpop.f32.mrf.mxu0
    %v4932 = vadd.f32 %v4919, %v4931
    %v4933 = vpop.f32.mrf.mxu0
    %4934 = vdwg.mxu0
    %4935 = vmatpush.bf16.msra.mxu0 %v4584
    %4936 = vmatpush.bf16.msra.mxu0 %v4580
    %4937 = vmatpush.bf16.msra.mxu0 %v4576
    %4938 = vmatpush.bf16.msra.mxu0 %v4572
    %4939 = vmatpush.bf16.msra.mxu0 %v4568
    %4940 = vmatpush.bf16.msra.mxu0 %v4564
    %4941 = vmatpush.bf16.msra.mxu0 %v4560
    %4942 = vmatpush.bf16.msra.mxu0 %v4556
    %4943 = vmatmul.bf16.gmra.mxu0 %v3297
    %v4944 = vpop.f32.mrf.mxu0
    %v4945 = vadd.f32 %v4932, %v4944
    %v4946 = vpop.f32.mrf.mxu0
    %4947 = vdwg.mxu0
    %4948 = vmatpush.bf16.msra.mxu0 %v4361
    %4949 = vmatpush.bf16.msra.mxu0 %v4357
    %4950 = vmatpush.bf16.msra.mxu0 %v4353
    %4951 = vmatpush.bf16.msra.mxu0 %v4349
    %4952 = vmatpush.bf16.msra.mxu0 %v4345
    %4953 = vmatpush.bf16.msra.mxu0 %v4341
    %4954 = vmatpush.bf16.msra.mxu0 %v4337
    %4955 = vmatpush.bf16.msra.mxu0 %v4333
    %4956 = vmatmul.bf16.gmra.mxu0 %v3290
    %v4957 = vpop.f32.mrf.mxu0
    %v4958 = vadd.f32 %v3557, %v4957
    %v4959 = vpop.f32.mrf.mxu0
    %4960 = vdwg.mxu0
    %4961 = vmatpush.bf16.msra.mxu0 %v4393
    %4962 = vmatpush.bf16.msra.mxu0 %v4389
    %4963 = vmatpush.bf16.msra.mxu0 %v4385
    %4964 = vmatpush.bf16.msra.mxu0 %v4381
    %4965 = vmatpush.bf16.msra.mxu0 %v4377
    %4966 = vmatpush.bf16.msra.mxu0 %v4373
    %4967 = vmatpush.bf16.msra.mxu0 %v4369
    %4968 = vmatpush.bf16.msra.mxu0 %v4365
    %4969 = vmatmul.bf16.gmra.mxu0 %v3291
    %v4970 = vpop.f32.mrf.mxu0
    %v4971 = vadd.f32 %v4958, %v4970
    %v4972 = vpop.f32.mrf.mxu0
    %4973 = vdwg.mxu0
    %4974 = vmatpush.bf16.msra.mxu0 %v4425
    %4975 = vmatpush.bf16.msra.mxu0 %v4421
    %4976 = vmatpush.bf16.msra.mxu0 %v4417
    %4977 = vmatpush.bf16.msra.mxu0 %v4413
    %4978 = vmatpush.bf16.msra.mxu0 %v4409
    %4979 = vmatpush.bf16.msra.mxu0 %v4405
    %4980 = vmatpush.bf16.msra.mxu0 %v4401
    %4981 = vmatpush.bf16.msra.mxu0 %v4397
    %4982 = vmatmul.bf16.gmra.mxu0 %v3292
    %v4983 = vpop.f32.mrf.mxu0
    %v4984 = vadd.f32 %v4971, %v4983
    %v4985 = vpop.f32.mrf.mxu0
    %4986 = vdwg.mxu0
    %4987 = vmatpush.bf16.msra.mxu0 %v4457
    %4988 = vmatpush.bf16.msra.mxu0 %v4453
    %4989 = vmatpush.bf16.msra.mxu0 %v4449
    %4990 = vmatpush.bf16.msra.mxu0 %v4445
    %4991 = vmatpush.bf16.msra.mxu0 %v4441
    %4992 = vmatpush.bf16.msra.mxu0 %v4437
    %4993 = vmatpush.bf16.msra.mxu0 %v4433
    %4994 = vmatpush.bf16.msra.mxu0 %v4429
    %4995 = vmatmul.bf16.gmra.mxu0 %v3293
    %v4996 = vpop.f32.mrf.mxu0
    %v4997 = vadd.f32 %v4984, %v4996
    %v4998 = vpop.f32.mrf.mxu0
    %4999 = vdwg.mxu0
    %5000 = vmatpush.bf16.msra.mxu0 %v4489
    %5001 = vmatpush.bf16.msra.mxu0 %v4485
    %5002 = vmatpush.bf16.msra.mxu0 %v4481
    %5003 = vmatpush.bf16.msra.mxu0 %v4477
    %5004 = vmatpush.bf16.msra.mxu0 %v4473
    %5005 = vmatpush.bf16.msra.mxu0 %v4469
    %5006 = vmatpush.bf16.msra.mxu0 %v4465
    %5007 = vmatpush.bf16.msra.mxu0 %v4461
    %5008 = vmatmul.bf16.gmra.mxu0 %v3294
    %v5009 = vpop.f32.mrf.mxu0
    %v5010 = vadd.f32 %v4997, %v5009
    %v5011 = vpop.f32.mrf.mxu0
    %5012 = vdwg.mxu0
    %5013 = vmatpush.bf16.msra.mxu0 %v4521
    %5014 = vmatpush.bf16.msra.mxu0 %v4517
    %5015 = vmatpush.bf16.msra.mxu0 %v4513
    %5016 = vmatpush.bf16.msra.mxu0 %v4509
    %5017 = vmatpush.bf16.msra.mxu0 %v4505
    %5018 = vmatpush.bf16.msra.mxu0 %v4501
    %5019 = vmatpush.bf16.msra.mxu0 %v4497
    %5020 = vmatpush.bf16.msra.mxu0 %v4493
    %5021 = vmatmul.bf16.gmra.mxu0 %v3295
    %v5022 = vpop.f32.mrf.mxu0
    %v5023 = vadd.f32 %v5010, %v5022
    %v5024 = vpop.f32.mrf.mxu0
    %5025 = vdwg.mxu0
    %5026 = vmatpush.bf16.msra.mxu0 %v4553
    %5027 = vmatpush.bf16.msra.mxu0 %v4549
    %5028 = vmatpush.bf16.msra.mxu0 %v4545
    %5029 = vmatpush.bf16.msra.mxu0 %v4541
    %5030 = vmatpush.bf16.msra.mxu0 %v4537
    %5031 = vmatpush.bf16.msra.mxu0 %v4533
    %5032 = vmatpush.bf16.msra.mxu0 %v4529
    %5033 = vmatpush.bf16.msra.mxu0 %v4525
    %5034 = vmatmul.bf16.gmra.mxu0 %v3296
    %v5035 = vpop.f32.mrf.mxu0
    %v5036 = vadd.f32 %v5023, %v5035
    %v5037 = vpop.f32.mrf.mxu0
    %5038 = vdwg.mxu0
    %5039 = vmatpush.bf16.msra.mxu0 %v4585
    %5040 = vmatpush.bf16.msra.mxu0 %v4581
    %5041 = vmatpush.bf16.msra.mxu0 %v4577
    %5042 = vmatpush.bf16.msra.mxu0 %v4573
    %5043 = vmatpush.bf16.msra.mxu0 %v4569
    %5044 = vmatpush.bf16.msra.mxu0 %v4565
    %5045 = vmatpush.bf16.msra.mxu0 %v4561
    %5046 = vmatpush.bf16.msra.mxu0 %v4557
    %5047 = vmatmul.bf16.gmra.mxu0 %v3297
    %v5048 = vpop.f32.mrf.mxu0
    %v5049 = vadd.f32 %v5036, %v5048
    %v5050 = vpop.f32.mrf.mxu0
    %5051 = vdwg.mxu0
    %5052 = vmatpush.bf16.msra.mxu0 %v4362
    %5053 = vmatpush.bf16.msra.mxu0 %v4358
    %5054 = vmatpush.bf16.msra.mxu0 %v4354
    %5055 = vmatpush.bf16.msra.mxu0 %v4350
    %5056 = vmatpush.bf16.msra.mxu0 %v4346
    %5057 = vmatpush.bf16.msra.mxu0 %v4342
    %5058 = vmatpush.bf16.msra.mxu0 %v4338
    %5059 = vmatpush.bf16.msra.mxu0 %v4334
    %5060 = vmatmul.bf16.gmra.mxu0 %v3290
    %v5061 = vpop.f32.mrf.mxu0
    %v5062 = vadd.f32 %v3558, %v5061
    %v5063 = vpop.f32.mrf.mxu0
    %5064 = vdwg.mxu0
    %5065 = vmatpush.bf16.msra.mxu0 %v4394
    %5066 = vmatpush.bf16.msra.mxu0 %v4390
    %5067 = vmatpush.bf16.msra.mxu0 %v4386
    %5068 = vmatpush.bf16.msra.mxu0 %v4382
    %5069 = vmatpush.bf16.msra.mxu0 %v4378
    %5070 = vmatpush.bf16.msra.mxu0 %v4374
    %5071 = vmatpush.bf16.msra.mxu0 %v4370
    %5072 = vmatpush.bf16.msra.mxu0 %v4366
    %5073 = vmatmul.bf16.gmra.mxu0 %v3291
    %v5074 = vpop.f32.mrf.mxu0
    %v5075 = vadd.f32 %v5062, %v5074
    %v5076 = vpop.f32.mrf.mxu0
    %5077 = vdwg.mxu0
    %5078 = vmatpush.bf16.msra.mxu0 %v4426
    %5079 = vmatpush.bf16.msra.mxu0 %v4422
    %5080 = vmatpush.bf16.msra.mxu0 %v4418
    %5081 = vmatpush.bf16.msra.mxu0 %v4414
    %5082 = vmatpush.bf16.msra.mxu0 %v4410
    %5083 = vmatpush.bf16.msra.mxu0 %v4406
    %5084 = vmatpush.bf16.msra.mxu0 %v4402
    %5085 = vmatpush.bf16.msra.mxu0 %v4398
    %5086 = vmatmul.bf16.gmra.mxu0 %v3292
    %v5087 = vpop.f32.mrf.mxu0
    %v5088 = vadd.f32 %v5075, %v5087
    %v5089 = vpop.f32.mrf.mxu0
    %5090 = vdwg.mxu0
    %5091 = vmatpush.bf16.msra.mxu0 %v4458
    %5092 = vmatpush.bf16.msra.mxu0 %v4454
    %5093 = vmatpush.bf16.msra.mxu0 %v4450
    %5094 = vmatpush.bf16.msra.mxu0 %v4446
    %5095 = vmatpush.bf16.msra.mxu0 %v4442
    %5096 = vmatpush.bf16.msra.mxu0 %v4438
    %5097 = vmatpush.bf16.msra.mxu0 %v4434
    %5098 = vmatpush.bf16.msra.mxu0 %v4430
    %5099 = vmatmul.bf16.gmra.mxu0 %v3293
    %v5100 = vpop.f32.mrf.mxu0
    %v5101 = vadd.f32 %v5088, %v5100
    %v5102 = vpop.f32.mrf.mxu0
    %5103 = vdwg.mxu0
    %5104 = vmatpush.bf16.msra.mxu0 %v4490
    %5105 = vmatpush.bf16.msra.mxu0 %v4486
    %5106 = vmatpush.bf16.msra.mxu0 %v4482
    %5107 = vmatpush.bf16.msra.mxu0 %v4478
    %5108 = vmatpush.bf16.msra.mxu0 %v4474
    %5109 = vmatpush.bf16.msra.mxu0 %v4470
    %5110 = vmatpush.bf16.msra.mxu0 %v4466
    %5111 = vmatpush.bf16.msra.mxu0 %v4462
    %5112 = vmatmul.bf16.gmra.mxu0 %v3294
    %v5113 = vpop.f32.mrf.mxu0
    %v5114 = vadd.f32 %v5101, %v5113
    %v5115 = vpop.f32.mrf.mxu0
    %5116 = vdwg.mxu0
    %5117 = vmatpush.bf16.msra.mxu0 %v4522
    %5118 = vmatpush.bf16.msra.mxu0 %v4518
    %5119 = vmatpush.bf16.msra.mxu0 %v4514
    %5120 = vmatpush.bf16.msra.mxu0 %v4510
    %5121 = vmatpush.bf16.msra.mxu0 %v4506
    %5122 = vmatpush.bf16.msra.mxu0 %v4502
    %5123 = vmatpush.bf16.msra.mxu0 %v4498
    %5124 = vmatpush.bf16.msra.mxu0 %v4494
    %5125 = vmatmul.bf16.gmra.mxu0 %v3295
    %v5126 = vpop.f32.mrf.mxu0
    %v5127 = vadd.f32 %v5114, %v5126
    %v5128 = vpop.f32.mrf.mxu0
    %5129 = vdwg.mxu0
    %5130 = vmatpush.bf16.msra.mxu0 %v4554
    %5131 = vmatpush.bf16.msra.mxu0 %v4550
    %5132 = vmatpush.bf16.msra.mxu0 %v4546
    %5133 = vmatpush.bf16.msra.mxu0 %v4542
    %5134 = vmatpush.bf16.msra.mxu0 %v4538
    %5135 = vmatpush.bf16.msra.mxu0 %v4534
    %5136 = vmatpush.bf16.msra.mxu0 %v4530
    %5137 = vmatpush.bf16.msra.mxu0 %v4526
    %5138 = vmatmul.bf16.gmra.mxu0 %v3296
    %v5139 = vpop.f32.mrf.mxu0
    %v5140 = vadd.f32 %v5127, %v5139
    %v5141 = vpop.f32.mrf.mxu0
    %5142 = vdwg.mxu0
    %5143 = vmatpush.bf16.msra.mxu0 %v4586
    %5144 = vmatpush.bf16.msra.mxu0 %v4582
    %5145 = vmatpush.bf16.msra.mxu0 %v4578
    %5146 = vmatpush.bf16.msra.mxu0 %v4574
    %5147 = vmatpush.bf16.msra.mxu0 %v4570
    %5148 = vmatpush.bf16.msra.mxu0 %v4566
    %5149 = vmatpush.bf16.msra.mxu0 %v4562
    %5150 = vmatpush.bf16.msra.mxu0 %v4558
    %5151 = vmatmul.bf16.gmra.mxu0 %v3297
    %v5152 = vpop.f32.mrf.mxu0
    %v5153 = vadd.f32 %v5140, %v5152
    %v5154 = vpop.f32.mrf.mxu0
    %5155 = vdwg.mxu0
    %5156 = vmatpush.bf16.msra.mxu0 %v4363
    %5157 = vmatpush.bf16.msra.mxu0 %v4359
    %5158 = vmatpush.bf16.msra.mxu0 %v4355
    %5159 = vmatpush.bf16.msra.mxu0 %v4351
    %5160 = vmatpush.bf16.msra.mxu0 %v4347
    %5161 = vmatpush.bf16.msra.mxu0 %v4343
    %5162 = vmatpush.bf16.msra.mxu0 %v4339
    %5163 = vmatpush.bf16.msra.mxu0 %v4335
    %5164 = vmatmul.bf16.gmra.mxu0 %v3290
    %v5165 = vpop.f32.mrf.mxu0
    %v5166 = vadd.f32 %v3559, %v5165
    %v5167 = vpop.f32.mrf.mxu0
    %5168 = vdwg.mxu0
    %5169 = vmatpush.bf16.msra.mxu0 %v4395
    %5170 = vmatpush.bf16.msra.mxu0 %v4391
    %5171 = vmatpush.bf16.msra.mxu0 %v4387
    %5172 = vmatpush.bf16.msra.mxu0 %v4383
    %5173 = vmatpush.bf16.msra.mxu0 %v4379
    %5174 = vmatpush.bf16.msra.mxu0 %v4375
    %5175 = vmatpush.bf16.msra.mxu0 %v4371
    %5176 = vmatpush.bf16.msra.mxu0 %v4367
    %5177 = vmatmul.bf16.gmra.mxu0 %v3291
    %v5178 = vpop.f32.mrf.mxu0
    %v5179 = vadd.f32 %v5166, %v5178
    %v5180 = vpop.f32.mrf.mxu0
    %5181 = vdwg.mxu0
    %5182 = vmatpush.bf16.msra.mxu0 %v4427
    %5183 = vmatpush.bf16.msra.mxu0 %v4423
    %5184 = vmatpush.bf16.msra.mxu0 %v4419
    %5185 = vmatpush.bf16.msra.mxu0 %v4415
    %5186 = vmatpush.bf16.msra.mxu0 %v4411
    %5187 = vmatpush.bf16.msra.mxu0 %v4407
    %5188 = vmatpush.bf16.msra.mxu0 %v4403
    %5189 = vmatpush.bf16.msra.mxu0 %v4399
    %5190 = vmatmul.bf16.gmra.mxu0 %v3292
    %v5191 = vpop.f32.mrf.mxu0
    %v5192 = vadd.f32 %v5179, %v5191
    %v5193 = vpop.f32.mrf.mxu0
    %5194 = vdwg.mxu0
    %5195 = vmatpush.bf16.msra.mxu0 %v4459
    %5196 = vmatpush.bf16.msra.mxu0 %v4455
    %5197 = vmatpush.bf16.msra.mxu0 %v4451
    %5198 = vmatpush.bf16.msra.mxu0 %v4447
    %5199 = vmatpush.bf16.msra.mxu0 %v4443
    %5200 = vmatpush.bf16.msra.mxu0 %v4439
    %5201 = vmatpush.bf16.msra.mxu0 %v4435
    %5202 = vmatpush.bf16.msra.mxu0 %v4431
    %5203 = vmatmul.bf16.gmra.mxu0 %v3293
    %v5204 = vpop.f32.mrf.mxu0
    %v5205 = vadd.f32 %v5192, %v5204
    %v5206 = vpop.f32.mrf.mxu0
    %5207 = vdwg.mxu0
    %5208 = vmatpush.bf16.msra.mxu0 %v4491
    %5209 = vmatpush.bf16.msra.mxu0 %v4487
    %5210 = vmatpush.bf16.msra.mxu0 %v4483
    %5211 = vmatpush.bf16.msra.mxu0 %v4479
    %5212 = vmatpush.bf16.msra.mxu0 %v4475
    %5213 = vmatpush.bf16.msra.mxu0 %v4471
    %5214 = vmatpush.bf16.msra.mxu0 %v4467
    %5215 = vmatpush.bf16.msra.mxu0 %v4463
    %5216 = vmatmul.bf16.gmra.mxu0 %v3294
    %v5217 = vpop.f32.mrf.mxu0
    %v5218 = vadd.f32 %v5205, %v5217
    %v5219 = vpop.f32.mrf.mxu0
    %5220 = vdwg.mxu0
    %5221 = vmatpush.bf16.msra.mxu0 %v4523
    %5222 = vmatpush.bf16.msra.mxu0 %v4519
    %5223 = vmatpush.bf16.msra.mxu0 %v4515
    %5224 = vmatpush.bf16.msra.mxu0 %v4511
    %5225 = vmatpush.bf16.msra.mxu0 %v4507
    %5226 = vmatpush.bf16.msra.mxu0 %v4503
    %5227 = vmatpush.bf16.msra.mxu0 %v4499
    %5228 = vmatpush.bf16.msra.mxu0 %v4495
    %5229 = vmatmul.bf16.gmra.mxu0 %v3295
    %v5230 = vpop.f32.mrf.mxu0
    %v5231 = vadd.f32 %v5218, %v5230
    %v5232 = vpop.f32.mrf.mxu0
    %5233 = vdwg.mxu0
    %5234 = vmatpush.bf16.msra.mxu0 %v4555
    %5235 = vmatpush.bf16.msra.mxu0 %v4551
    %5236 = vmatpush.bf16.msra.mxu0 %v4547
    %5237 = vmatpush.bf16.msra.mxu0 %v4543
    %5238 = vmatpush.bf16.msra.mxu0 %v4539
    %5239 = vmatpush.bf16.msra.mxu0 %v4535
    %5240 = vmatpush.bf16.msra.mxu0 %v4531
    %5241 = vmatpush.bf16.msra.mxu0 %v4527
    %5242 = vmatmul.bf16.gmra.mxu0 %v3296
    %v5243 = vpop.f32.mrf.mxu0
    %v5244 = vadd.f32 %v5231, %v5243
    %v5245 = vpop.f32.mrf.mxu0
    %5246 = vdwg.mxu0
    %5247 = vmatpush.bf16.msra.mxu0 %v4587
    %5248 = vmatpush.bf16.msra.mxu0 %v4583
    %5249 = vmatpush.bf16.msra.mxu0 %v4579
    %5250 = vmatpush.bf16.msra.mxu0 %v4575
    %5251 = vmatpush.bf16.msra.mxu0 %v4571
    %5252 = vmatpush.bf16.msra.mxu0 %v4567
    %5253 = vmatpush.bf16.msra.mxu0 %v4563
    %5254 = vmatpush.bf16.msra.mxu0 %v4559
    %5255 = vmatmul.bf16.gmra.mxu0 %v3297
    %v5256 = vpop.f32.mrf.mxu0
    %v5257 = vadd.f32 %v5244, %v5256
    %v5258 = vpop.f32.mrf.mxu0
    %5259 = vdwg.mxu0
    %vm5260 = vcmp.gt.f32.partialorder %v4945, 0.0
    %vm5261 = vcmp.gt.f32.partialorder %v5049, 0.0
    %vm5262 = vcmp.gt.f32.partialorder %v5153, 0.0
    %vm5263 = vcmp.gt.f32.partialorder %v5257, 0.0
    %v5264 = vmul.f32 %v4945, 0.2
    %v5265 = vmul.f32 %v5049, 0.2
    %v5266 = vmul.f32 %v5153, 0.2
    %v5267 = vmul.f32 %v5257, 0.2
    %v5268 = vsel %vm5260, %v4945, %v5264
    %v5269 = vsel %vm5261, %v5049, %v5265
    %v5270 = vsel %vm5262, %v5153, %v5266
    %v5271 = vsel %vm5263, %v5257, %v5267
    %v5272 = vpack.c.bf16 %v5268, %v5268
    %v5273 = vpack.c.bf16 %v5269, %v5269
    %v5274 = vpack.c.bf16 %v5270, %v5270
    %v5275 = vpack.c.bf16 %v5271, %v5271
    %v5276 = vld [vmem:[#allocation11] sm:$0xff]
    %v5277 = vld [vmem:[#allocation11 + $0x8] sm:$0xff]
    %v5278 = vld [vmem:[#allocation11 + $0x10] sm:$0xff]
    %v5279 = vld [vmem:[#allocation11 + $0x18] sm:$0xff]
    %v5280 = vld [vmem:[#allocation11 + $0x20] sm:$0xff]
    %v5281 = vld [vmem:[#allocation11 + $0x28] sm:$0xff]
    %v5282 = vld [vmem:[#allocation11 + $0x30] sm:$0xff]
    %v5283 = vld [vmem:[#allocation11 + $0x38] sm:$0xff]
    %v5284 = vld [vmem:[#allocation11 + $0x40] sm:$0xff]
    %v5285 = vld [vmem:[#allocation11 + $0x48] sm:$0xff]
    %v5286 = vld [vmem:[#allocation11 + $0x50] sm:$0xff]
    %v5287 = vld [vmem:[#allocation11 + $0x58] sm:$0xff]
    %v5288 = vld [vmem:[#allocation11 + $0x60] sm:$0xff]
    %v5289 = vld [vmem:[#allocation11 + $0x68] sm:$0xff]
    %v5290 = vld [vmem:[#allocation11 + $0x70] sm:$0xff]
    %v5291 = vld [vmem:[#allocation11 + $0x78] sm:$0xff]
    %v5292 = vld [vmem:[#allocation11 + $0x80] sm:$0xff]
    %v5293 = vld [vmem:[#allocation11 + $0x88] sm:$0xff]
    %v5294 = vld [vmem:[#allocation11 + $0x90] sm:$0xff]
    %v5295 = vld [vmem:[#allocation11 + $0x98] sm:$0xff]
    %v5296 = vld [vmem:[#allocation11 + $0xa0] sm:$0xff]
    %v5297 = vld [vmem:[#allocation11 + $0xa8] sm:$0xff]
    %v5298 = vld [vmem:[#allocation11 + $0xb0] sm:$0xff]
    %v5299 = vld [vmem:[#allocation11 + $0xb8] sm:$0xff]
    %v5300 = vld [vmem:[#allocation11 + $0xc0] sm:$0xff]
    %v5301 = vld [vmem:[#allocation11 + $0xc8] sm:$0xff]
    %v5302 = vld [vmem:[#allocation11 + $0xd0] sm:$0xff]
    %v5303 = vld [vmem:[#allocation11 + $0xd8] sm:$0xff]
    %v5304 = vld [vmem:[#allocation11 + $0xe0] sm:$0xff]
    %v5305 = vld [vmem:[#allocation11 + $0xe8] sm:$0xff]
    %v5306 = vld [vmem:[#allocation11 + $0xf0] sm:$0xff]
    %v5307 = vld [vmem:[#allocation11 + $0xf8] sm:$0xff]
    %v5308 = vld [vmem:[#allocation11 + $0x100] sm:$0xff]
    %v5309 = vld [vmem:[#allocation11 + $0x108] sm:$0xff]
    %v5310 = vld [vmem:[#allocation11 + $0x110] sm:$0xff]
    %v5311 = vld [vmem:[#allocation11 + $0x118] sm:$0xff]
    %v5312 = vld [vmem:[#allocation11 + $0x120] sm:$0xff]
    %v5313 = vld [vmem:[#allocation11 + $0x128] sm:$0xff]
    %v5314 = vld [vmem:[#allocation11 + $0x130] sm:$0xff]
    %v5315 = vld [vmem:[#allocation11 + $0x138] sm:$0xff]
    %v5316 = vld [vmem:[#allocation11 + $0x140] sm:$0xff]
    %v5317 = vld [vmem:[#allocation11 + $0x148] sm:$0xff]
    %v5318 = vld [vmem:[#allocation11 + $0x150] sm:$0xff]
    %v5319 = vld [vmem:[#allocation11 + $0x158] sm:$0xff]
    %v5320 = vld [vmem:[#allocation11 + $0x160] sm:$0xff]
    %v5321 = vld [vmem:[#allocation11 + $0x168] sm:$0xff]
    %v5322 = vld [vmem:[#allocation11 + $0x170] sm:$0xff]
    %v5323 = vld [vmem:[#allocation11 + $0x178] sm:$0xff]
    %v5324 = vld [vmem:[#allocation11 + $0x180] sm:$0xff]
    %v5325 = vld [vmem:[#allocation11 + $0x188] sm:$0xff]
    %v5326 = vld [vmem:[#allocation11 + $0x190] sm:$0xff]
    %v5327 = vld [vmem:[#allocation11 + $0x198] sm:$0xff]
    %v5328 = vld [vmem:[#allocation11 + $0x1a0] sm:$0xff]
    %v5329 = vld [vmem:[#allocation11 + $0x1a8] sm:$0xff]
    %v5330 = vld [vmem:[#allocation11 + $0x1b0] sm:$0xff]
    %v5331 = vld [vmem:[#allocation11 + $0x1b8] sm:$0xff]
    %v5332 = vld [vmem:[#allocation11 + $0x1c0] sm:$0xff]
    %v5333 = vld [vmem:[#allocation11 + $0x1c8] sm:$0xff]
    %v5334 = vld [vmem:[#allocation11 + $0x1d0] sm:$0xff]
    %v5335 = vld [vmem:[#allocation11 + $0x1d8] sm:$0xff]
    %v5336 = vld [vmem:[#allocation11 + $0x1e0] sm:$0xff]
    %v5337 = vld [vmem:[#allocation11 + $0x1e8] sm:$0xff]
    %v5338 = vld [vmem:[#allocation11 + $0x1f0] sm:$0xff]
    %v5339 = vld [vmem:[#allocation11 + $0x1f8] sm:$0xff]
    %v5340 = vld [vmem:[#allocation13] sm:$0x3]
    %v5342 = vperm.slane %v5340, 0
    %v5343 = vperm.slane %v5340, 1
    %v5410 = vunpack.c.l.b16 %v5276
    %v5411 = vunpack.c.h.b16 %v5276
    %v5412 = vunpack.c.l.b16 %v5277
    %v5413 = vunpack.c.h.b16 %v5277
    %v5414 = vunpack.c.l.b16 %v5278
    %v5415 = vunpack.c.h.b16 %v5278
    %v5416 = vunpack.c.l.b16 %v5279
    %v5417 = vunpack.c.h.b16 %v5279
    %v5418 = vunpack.c.l.b16 %v5280
    %v5419 = vunpack.c.h.b16 %v5280
    %v5420 = vunpack.c.l.b16 %v5281
    %v5421 = vunpack.c.h.b16 %v5281
    %v5422 = vunpack.c.l.b16 %v5282
    %v5423 = vunpack.c.h.b16 %v5282
    %v5424 = vunpack.c.l.b16 %v5283
    %v5425 = vunpack.c.h.b16 %v5283
    %v5426 = vunpack.c.l.b16 %v5284
    %v5427 = vunpack.c.h.b16 %v5284
    %v5428 = vunpack.c.l.b16 %v5285
    %v5429 = vunpack.c.h.b16 %v5285
    %v5430 = vunpack.c.l.b16 %v5286
    %v5431 = vunpack.c.h.b16 %v5286
    %v5432 = vunpack.c.l.b16 %v5287
    %v5433 = vunpack.c.h.b16 %v5287
    %v5434 = vunpack.c.l.b16 %v5288
    %v5435 = vunpack.c.h.b16 %v5288
    %v5436 = vunpack.c.l.b16 %v5289
    %v5437 = vunpack.c.h.b16 %v5289
    %v5438 = vunpack.c.l.b16 %v5290
    %v5439 = vunpack.c.h.b16 %v5290
    %v5440 = vunpack.c.l.b16 %v5291
    %v5441 = vunpack.c.h.b16 %v5291
    %v5442 = vunpack.c.l.b16 %v5292
    %v5443 = vunpack.c.h.b16 %v5292
    %v5444 = vunpack.c.l.b16 %v5293
    %v5445 = vunpack.c.h.b16 %v5293
    %v5446 = vunpack.c.l.b16 %v5294
    %v5447 = vunpack.c.h.b16 %v5294
    %v5448 = vunpack.c.l.b16 %v5295
    %v5449 = vunpack.c.h.b16 %v5295
    %v5450 = vunpack.c.l.b16 %v5296
    %v5451 = vunpack.c.h.b16 %v5296
    %v5452 = vunpack.c.l.b16 %v5297
    %v5453 = vunpack.c.h.b16 %v5297
    %v5454 = vunpack.c.l.b16 %v5298
    %v5455 = vunpack.c.h.b16 %v5298
    %v5456 = vunpack.c.l.b16 %v5299
    %v5457 = vunpack.c.h.b16 %v5299
    %v5458 = vunpack.c.l.b16 %v5300
    %v5459 = vunpack.c.h.b16 %v5300
    %v5460 = vunpack.c.l.b16 %v5301
    %v5461 = vunpack.c.h.b16 %v5301
    %v5462 = vunpack.c.l.b16 %v5302
    %v5463 = vunpack.c.h.b16 %v5302
    %v5464 = vunpack.c.l.b16 %v5303
    %v5465 = vunpack.c.h.b16 %v5303
    %v5466 = vunpack.c.l.b16 %v5304
    %v5467 = vunpack.c.h.b16 %v5304
    %v5468 = vunpack.c.l.b16 %v5305
    %v5469 = vunpack.c.h.b16 %v5305
    %v5470 = vunpack.c.l.b16 %v5306
    %v5471 = vunpack.c.h.b16 %v5306
    %v5472 = vunpack.c.l.b16 %v5307
    %v5473 = vunpack.c.h.b16 %v5307
    %v5474 = vunpack.c.l.b16 %v5308
    %v5475 = vunpack.c.h.b16 %v5308
    %v5476 = vunpack.c.l.b16 %v5309
    %v5477 = vunpack.c.h.b16 %v5309
    %v5478 = vunpack.c.l.b16 %v5310
    %v5479 = vunpack.c.h.b16 %v5310
    %v5480 = vunpack.c.l.b16 %v5311
    %v5481 = vunpack.c.h.b16 %v5311
    %v5482 = vunpack.c.l.b16 %v5312
    %v5483 = vunpack.c.h.b16 %v5312
    %v5484 = vunpack.c.l.b16 %v5313
    %v5485 = vunpack.c.h.b16 %v5313
    %v5486 = vunpack.c.l.b16 %v5314
    %v5487 = vunpack.c.h.b16 %v5314
    %v5488 = vunpack.c.l.b16 %v5315
    %v5489 = vunpack.c.h.b16 %v5315
    %v5490 = vunpack.c.l.b16 %v5316
    %v5491 = vunpack.c.h.b16 %v5316
    %v5492 = vunpack.c.l.b16 %v5317
    %v5493 = vunpack.c.h.b16 %v5317
    %v5494 = vunpack.c.l.b16 %v5318
    %v5495 = vunpack.c.h.b16 %v5318
    %v5496 = vunpack.c.l.b16 %v5319
    %v5497 = vunpack.c.h.b16 %v5319
    %v5498 = vunpack.c.l.b16 %v5320
    %v5499 = vunpack.c.h.b16 %v5320
    %v5500 = vunpack.c.l.b16 %v5321
    %v5501 = vunpack.c.h.b16 %v5321
    %v5502 = vunpack.c.l.b16 %v5322
    %v5503 = vunpack.c.h.b16 %v5322
    %v5504 = vunpack.c.l.b16 %v5323
    %v5505 = vunpack.c.h.b16 %v5323
    %v5506 = vunpack.c.l.b16 %v5324
    %v5507 = vunpack.c.h.b16 %v5324
    %v5508 = vunpack.c.l.b16 %v5325
    %v5509 = vunpack.c.h.b16 %v5325
    %v5510 = vunpack.c.l.b16 %v5326
    %v5511 = vunpack.c.h.b16 %v5326
    %v5512 = vunpack.c.l.b16 %v5327
    %v5513 = vunpack.c.h.b16 %v5327
    %v5514 = vunpack.c.l.b16 %v5328
    %v5515 = vunpack.c.h.b16 %v5328
    %v5516 = vunpack.c.l.b16 %v5329
    %v5517 = vunpack.c.h.b16 %v5329
    %v5518 = vunpack.c.l.b16 %v5330
    %v5519 = vunpack.c.h.b16 %v5330
    %v5520 = vunpack.c.l.b16 %v5331
    %v5521 = vunpack.c.h.b16 %v5331
    %v5522 = vunpack.c.l.b16 %v5332
    %v5523 = vunpack.c.h.b16 %v5332
    %v5524 = vunpack.c.l.b16 %v5333
    %v5525 = vunpack.c.h.b16 %v5333
    %v5526 = vunpack.c.l.b16 %v5334
    %v5527 = vunpack.c.h.b16 %v5334
    %v5528 = vunpack.c.l.b16 %v5335
    %v5529 = vunpack.c.h.b16 %v5335
    %v5530 = vunpack.c.l.b16 %v5336
    %v5531 = vunpack.c.h.b16 %v5336
    %v5532 = vunpack.c.l.b16 %v5337
    %v5533 = vunpack.c.h.b16 %v5337
    %v5534 = vunpack.c.l.b16 %v5338
    %v5535 = vunpack.c.h.b16 %v5338
    %v5536 = vunpack.c.l.b16 %v5339
    %v5537 = vunpack.c.h.b16 %v5339
    %v5538 = vpack.c.b16 %v5412, %v5410
    %v5539 = vpack.c.b16 %v5413, %v5411
    %v5540 = vpack.c.b16 %v5416, %v5414
    %v5541 = vpack.c.b16 %v5417, %v5415
    %v5542 = vpack.c.b16 %v5420, %v5418
    %v5543 = vpack.c.b16 %v5421, %v5419
    %v5544 = vpack.c.b16 %v5424, %v5422
    %v5545 = vpack.c.b16 %v5425, %v5423
    %v5546 = vpack.c.b16 %v5428, %v5426
    %v5547 = vpack.c.b16 %v5429, %v5427
    %v5548 = vpack.c.b16 %v5432, %v5430
    %v5549 = vpack.c.b16 %v5433, %v5431
    %v5550 = vpack.c.b16 %v5436, %v5434
    %v5551 = vpack.c.b16 %v5437, %v5435
    %v5552 = vpack.c.b16 %v5440, %v5438
    %v5553 = vpack.c.b16 %v5441, %v5439
    %v5554 = vpack.c.b16 %v5444, %v5442
    %v5555 = vpack.c.b16 %v5445, %v5443
    %v5556 = vpack.c.b16 %v5448, %v5446
    %v5557 = vpack.c.b16 %v5449, %v5447
    %v5558 = vpack.c.b16 %v5452, %v5450
    %v5559 = vpack.c.b16 %v5453, %v5451
    %v5560 = vpack.c.b16 %v5456, %v5454
    %v5561 = vpack.c.b16 %v5457, %v5455
    %v5562 = vpack.c.b16 %v5460, %v5458
    %v5563 = vpack.c.b16 %v5461, %v5459
    %v5564 = vpack.c.b16 %v5464, %v5462
    %v5565 = vpack.c.b16 %v5465, %v5463
    %v5566 = vpack.c.b16 %v5468, %v5466
    %v5567 = vpack.c.b16 %v5469, %v5467
    %v5568 = vpack.c.b16 %v5472, %v5470
    %v5569 = vpack.c.b16 %v5473, %v5471
    %v5570 = vpack.c.b16 %v5476, %v5474
    %v5571 = vpack.c.b16 %v5477, %v5475
    %v5572 = vpack.c.b16 %v5480, %v5478
    %v5573 = vpack.c.b16 %v5481, %v5479
    %v5574 = vpack.c.b16 %v5484, %v5482
    %v5575 = vpack.c.b16 %v5485, %v5483
    %v5576 = vpack.c.b16 %v5488, %v5486
    %v5577 = vpack.c.b16 %v5489, %v5487
    %v5578 = vpack.c.b16 %v5492, %v5490
    %v5579 = vpack.c.b16 %v5493, %v5491
    %v5580 = vpack.c.b16 %v5496, %v5494
    %v5581 = vpack.c.b16 %v5497, %v5495
    %v5582 = vpack.c.b16 %v5500, %v5498
    %v5583 = vpack.c.b16 %v5501, %v5499
    %v5584 = vpack.c.b16 %v5504, %v5502
    %v5585 = vpack.c.b16 %v5505, %v5503
    %v5586 = vpack.c.b16 %v5508, %v5506
    %v5587 = vpack.c.b16 %v5509, %v5507
    %v5588 = vpack.c.b16 %v5512, %v5510
    %v5589 = vpack.c.b16 %v5513, %v5511
    %v5590 = vpack.c.b16 %v5516, %v5514
    %v5591 = vpack.c.b16 %v5517, %v5515
    %v5592 = vpack.c.b16 %v5520, %v5518
    %v5593 = vpack.c.b16 %v5521, %v5519
    %v5594 = vpack.c.b16 %v5524, %v5522
    %v5595 = vpack.c.b16 %v5525, %v5523
    %v5596 = vpack.c.b16 %v5528, %v5526
    %v5597 = vpack.c.b16 %v5529, %v5527
    %v5598 = vpack.c.b16 %v5532, %v5530
    %v5599 = vpack.c.b16 %v5533, %v5531
    %v5600 = vpack.c.b16 %v5536, %v5534
    %v5601 = vpack.c.b16 %v5537, %v5535
    %5666 = vmatpush.bf16.msra.mxu0 %v5552
    %5667 = vmatpush.bf16.msra.mxu0 %v5550
    %5668 = vmatpush.bf16.msra.mxu0 %v5548
    %5669 = vmatpush.bf16.msra.mxu0 %v5546
    %5670 = vmatpush.bf16.msra.mxu0 %v5544
    %5671 = vmatpush.bf16.msra.mxu0 %v5542
    %5672 = vmatpush.bf16.msra.mxu0 %v5540
    %5673 = vmatpush.bf16.msra.mxu0 %v5538
    %5674 = vmatmul.bf16.gmra.mxu0 %v5272
    %v5675 = vpop.f32.mrf.mxu0
    %v5676 = vadd.f32 %v5342, %v5675
    %v5677 = vpop.f32.mrf.mxu0
    %5678 = vdwg.mxu0
    %5679 = vmatpush.bf16.msra.mxu0 %v5568
    %5680 = vmatpush.bf16.msra.mxu0 %v5566
    %5681 = vmatpush.bf16.msra.mxu0 %v5564
    %5682 = vmatpush.bf16.msra.mxu0 %v5562
    %5683 = vmatpush.bf16.msra.mxu0 %v5560
    %5684 = vmatpush.bf16.msra.mxu0 %v5558
    %5685 = vmatpush.bf16.msra.mxu0 %v5556
    %5686 = vmatpush.bf16.msra.mxu0 %v5554
    %5687 = vmatmul.bf16.gmra.mxu0 %v5273
    %v5688 = vpop.f32.mrf.mxu0
    %v5689 = vadd.f32 %v5676, %v5688
    %v5690 = vpop.f32.mrf.mxu0
    %5691 = vdwg.mxu0
    %5692 = vmatpush.bf16.msra.mxu0 %v5584
    %5693 = vmatpush.bf16.msra.mxu0 %v5582
    %5694 = vmatpush.bf16.msra.mxu0 %v5580
    %5695 = vmatpush.bf16.msra.mxu0 %v5578
    %5696 = vmatpush.bf16.msra.mxu0 %v5576
    %5697 = vmatpush.bf16.msra.mxu0 %v5574
    %5698 = vmatpush.bf16.msra.mxu0 %v5572
    %5699 = vmatpush.bf16.msra.mxu0 %v5570
    %5700 = vmatmul.bf16.gmra.mxu0 %v5274
    %v5701 = vpop.f32.mrf.mxu0
    %v5702 = vadd.f32 %v5689, %v5701
    %v5703 = vpop.f32.mrf.mxu0
    %5704 = vdwg.mxu0
    %5705 = vmatpush.bf16.msra.mxu0 %v5600
    %5706 = vmatpush.bf16.msra.mxu0 %v5598
    %5707 = vmatpush.bf16.msra.mxu0 %v5596
    %5708 = vmatpush.bf16.msra.mxu0 %v5594
    %5709 = vmatpush.bf16.msra.mxu0 %v5592
    %5710 = vmatpush.bf16.msra.mxu0 %v5590
    %5711 = vmatpush.bf16.msra.mxu0 %v5588
    %5712 = vmatpush.bf16.msra.mxu0 %v5586
    %5713 = vmatmul.bf16.gmra.mxu0 %v5275
    %v5714 = vpop.f32.mrf.mxu0
    %v5715 = vadd.f32 %v5702, %v5714
    %v5716 = vpop.f32.mrf.mxu0
    %5717 = vdwg.mxu0
    %5718 = vmatpush.bf16.msra.mxu0 %v5553
    %5719 = vmatpush.bf16.msra.mxu0 %v5551
    %5720 = vmatpush.bf16.msra.mxu0 %v5549
    %5721 = vmatpush.bf16.msra.mxu0 %v5547
    %5722 = vmatpush.bf16.msra.mxu0 %v5545
    %5723 = vmatpush.bf16.msra.mxu0 %v5543
    %5724 = vmatpush.bf16.msra.mxu0 %v5541
    %5725 = vmatpush.bf16.msra.mxu0 %v5539
    %5726 = vmatmul.bf16.gmra.mxu0 %v5272
    %v5727 = vpop.f32.mrf.mxu0
    %v5728 = vadd.f32 %v5343, %v5727
    %v5729 = vpop.f32.mrf.mxu0
    %5730 = vdwg.mxu0
    %5731 = vmatpush.bf16.msra.mxu0 %v5569
    %5732 = vmatpush.bf16.msra.mxu0 %v5567
    %5733 = vmatpush.bf16.msra.mxu0 %v5565
    %5734 = vmatpush.bf16.msra.mxu0 %v5563
    %5735 = vmatpush.bf16.msra.mxu0 %v5561
    %5736 = vmatpush.bf16.msra.mxu0 %v5559
    %5737 = vmatpush.bf16.msra.mxu0 %v5557
    %5738 = vmatpush.bf16.msra.mxu0 %v5555
    %5739 = vmatmul.bf16.gmra.mxu0 %v5273
    %v5740 = vpop.f32.mrf.mxu0
    %v5741 = vadd.f32 %v5728, %v5740
    %v5742 = vpop.f32.mrf.mxu0
    %5743 = vdwg.mxu0
    %5744 = vmatpush.bf16.msra.mxu0 %v5585
    %5745 = vmatpush.bf16.msra.mxu0 %v5583
    %5746 = vmatpush.bf16.msra.mxu0 %v5581
    %5747 = vmatpush.bf16.msra.mxu0 %v5579
    %5748 = vmatpush.bf16.msra.mxu0 %v5577
    %5749 = vmatpush.bf16.msra.mxu0 %v5575
    %5750 = vmatpush.bf16.msra.mxu0 %v5573
    %5751 = vmatpush.bf16.msra.mxu0 %v5571
    %5752 = vmatmul.bf16.gmra.mxu0 %v5274
    %v5753 = vpop.f32.mrf.mxu0
    %v5754 = vadd.f32 %v5741, %v5753
    %v5755 = vpop.f32.mrf.mxu0
    %5756 = vdwg.mxu0
    %5757 = vmatpush.bf16.msra.mxu0 %v5601
    %5758 = vmatpush.bf16.msra.mxu0 %v5599
    %5759 = vmatpush.bf16.msra.mxu0 %v5597
    %5760 = vmatpush.bf16.msra.mxu0 %v5595
    %5761 = vmatpush.bf16.msra.mxu0 %v5593
    %5762 = vmatpush.bf16.msra.mxu0 %v5591
    %5763 = vmatpush.bf16.msra.mxu0 %v5589
    %5764 = vmatpush.bf16.msra.mxu0 %v5587
    %5765 = vmatmul.bf16.gmra.mxu0 %v5275
    %v5766 = vpop.f32.mrf.mxu0
    %v5767 = vadd.f32 %v5754, %v5766
    %v5768 = vpop.f32.mrf.mxu0
    %5769 = vdwg.mxu0
    %vm5770 = vcmp.gt.f32.partialorder %v5715, 0.0
    %vm5771 = vcmp.gt.f32.partialorder %v5767, 0.0
    %v5772 = vmul.f32 %v5715, 0.2
    %v5773 = vmul.f32 %v5767, 0.2
    %v5774 = vsel %vm5770, %v5715, %v5772
    %v5775 = vsel %vm5771, %v5767, %v5773
    %v5776 = vld [vmem:[#allocation14] sm:$0x3]
    %v5777 = vunpack.c.l.bf16 %v5776
    %v5779 = vperm.slane %v5777, 0
    %v5780 = vperm.slane %v5777, 2
    %v5783 = vperm.slane %v5779, 0
    %v5784 = vperm.slane %v5780, 0
    %v5785 = vmul.f32 %v5774, %v5783
    %v5786 = vmul.f32 %v5775, %v5784
    %v5787 = vadd.f32 %v5785, %v5786
    %5788 = vadd.xlane.f32.xlu0 %v5787
    %v5789 = vpop.xlane.xlu0 %5788
    %v5790 = vld [vmem:[#allocation2] sm:$0x1]
    %v5792 = vperm.slane %v5790, 0
    %v5794 = vadd.f32 %v5789, %v5792
    %v5795 = vsub.f32 0.0, %v5794
    %v5796 = vmul.f32 %v5795, 1.442695
    %v5797 = vpow.pop %v5796
    %v5798 = vadd.f32 %v5797, 1.0
    %v5799 = vrcp.pop %v5798
    %vm5800 = vcmask 7168
    %5801 = vst.msk [vmem:[%s9] sm:$0xff] %vm5800, %v5799
    // Predicated region
    $region70: #{tpu_custom_call.1} parent=1 // pred_check
      _
    $region71: #{tpu_custom_call.1} parent=1 // pred_check_branch
      %5803 = sbr.rel (0) target = $region73
    $region72: #{tpu_custom_call.1} parent=1 // pred_region
      _
    $region73: #{tpu_custom_call.1} parent=1 // pred_fallthru
      _
    // Predicated region
    $region74: #{tpu_custom_call.1} parent=1 // pred_check
      _
    $region75: #{tpu_custom_call.1} parent=1 // pred_check_branch
      %5805 = sbr.rel (0) target = $region77
    $region76: #{tpu_custom_call.1} parent=1 // pred_region
      _
    $region77: #{tpu_custom_call.1} parent=1 // pred_fallthru
      _
    %5806 = vsyncpa [#allocation4], 1
    %5807 = vsyncpa [#allocation6], 1
    %5808 = vsyncpa [#allocation9], 1
    %5809 = vsyncpa [#allocation12], 1
    %5810 = vsyncpa [#allocation15], 1

</llo_original>
